<compile_context>
chip_gen: v5e
topology: v5e:2x2
jax: 0.10.0
libtpu: 0.0.40
codegen_flags: <defaults>
</compile_context>

<pallas_src>
import numpy as np
import jax
import jax.numpy as jnp
from jax import lax
from jax.experimental import pallas as pl
from jax.experimental.pallas import tpu as pltpu

F1, F2 = 8, 16          # EEGNet temporal / spatial filter counts
K1, K3 = 64, 16         # temporal kernel widths
PAD1, PAD3 = 32, 8      # temporal paddings
POOL2, POOL3 = 4, 8     # avg-pool widths
BN_EPS = 1e-5


def _elu(x):
    return jnp.where(x > 0, x, jnp.exp(jnp.minimum(x, 0.0)) - 1.0)


def eegnet_encoder_kernel(
    x_ref,      # (Bb*C, Tpad)        zero-padded input, rows = (b, c)
    pj_ref,     # (F2*Bb, Bb*C)       block-diag spatial projection (conv2 weights)
    t1_ref,     # (F1, Tpad, wo1u)    Toeplitz temporal conv1, BN1 scale folded
    aff2_ref,   # (F2*Bb, 2)          per-row scale/shift (conv1 bias+BN1 shift+conv2 bias+BN2)
    p4_ref,     # (wo1u, wo2p)        avg-pool(1,4) + zero pad as a matmul
    t3_ref,     # (F2, wo2p, wo3u)    Toeplitz depthwise conv3, BN3 scale folded
    c3_ref,     # (F2, 1, 1)          conv3 bias + BN3 shift
    wf_ref,     # (F2, wo3u, 2H)      FC weight with avg-pool(1,8) + flatten folded in
    bfc_ref,    # (1, 2H)
    out_ref,    # (Bb, 2H)            [mu | log_var]
    z2_sc,      # VMEM scratch (F2*Bb, wo1u)
):
    Bb, twoH = out_ref.shape
    nf1 = t1_ref.shape[0]
    nf2 = t3_ref.shape[0]
    rpf = (nf2 // nf1) * Bb                     # rows sharing one temporal filter

    x = x_ref[...]                              # (Bb*C, Tpad)

    # ---- spatial projection (commuted block 2), one MXU matmul ----
    y = jnp.dot(pj_ref[...], x, preferred_element_type=jnp.float32)   # (F2*Bb, Tpad)

    # ---- commuted block 1: temporal conv (1,64) as per-filter Toeplitz matmuls ----
    for f in range(nf1):
        z2_sc[f * rpf:(f + 1) * rpf, :] = jnp.dot(
            y[f * rpf:(f + 1) * rpf, :], t1_ref[f],
            preferred_element_type=jnp.float32)

    # conv1 bias + BN1 shift + conv2 bias + BN2 (folded per row) + ELU
    z2 = _elu(z2_sc[...] * aff2_ref[:, 0:1] + aff2_ref[:, 1:2])        # (F2*Bb, wo1u)

    # avg-pool(1,4) + zero pad for conv3, fused in one matmul
    h2 = jnp.dot(z2, p4_ref[...], preferred_element_type=jnp.float32)  # (F2*Bb, wo2p)

    # ---- block 3 (depthwise conv + BN3 + ELU) fused with pool(1,8)+flatten+FC ----
    acc = jnp.zeros((Bb, twoH), jnp.float32)
    for o in range(nf2):
        z3 = jnp.dot(h2[o * Bb:(o + 1) * Bb, :], t3_ref[o],
                     preferred_element_type=jnp.float32)               # (Bb, wo3u)
        z3 = _elu(z3 + c3_ref[o])
        acc = acc + jnp.dot(z3, wf_ref[o], preferred_element_type=jnp.float32)
    out_ref[...] = acc + bfc_ref[...]


def init_params(key, C, T, hidden):
    wo1 = T + 2 * PAD1 - K1 + 1
    wo2 = wo1 // POOL2
    wo3 = wo2 + 2 * PAD3 - K3 + 1
    flat = F2 * (wo3 // POOL3)
    ks = jax.random.split(key, 20)
    n = lambda k, s, sc=0.1: sc * jax.random.normal(k, s, jnp.float32)
    u = lambda k, s: jax.random.uniform(k, s, jnp.float32, 0.8, 1.2)
    w1, b1 = n(ks[0], (F1, 1, 1, K1)), n(ks[1], (F1,))
    g1, be1, rm1, rv1 = u(ks[2], (F1,)), n(ks[3], (F1,)), n(ks[4], (F1,)), u(ks[5], (F1,))
    w2, b2 = n(ks[6], (F2, 1, C, 1)), n(ks[7], (F2,))
    g2, be2, rm2, rv2 = u(ks[8], (F2,)), n(ks[9], (F2,)), n(ks[10], (F2,)), u(ks[11], (F2,))
    w3, b3 = n(ks[12], (F2, 1, 1, K3)), n(ks[13], (F2,))
    g3, be3, rm3, rv3 = u(ks[14], (F2,)), n(ks[15], (F2,)), n(ks[16], (F2,)), u(ks[17], (F2,))
    wfc, bfc = n(ks[18], (2 * hidden, flat)), n(ks[19], (2 * hidden,))
    return (w1, b1, g1, be1, rm1, rv1, w2, b2, g2, be2, rm2, rv2,
            w3, b3, g3, be3, rm3, rv3, wfc, bfc)


def eegnet_encoder(x, params, hidden):
    """x: (B, 1, C, T) float32 (NCHW, like the PyTorch module)."""
    B, _, C, T = x.shape
    (w1, b1, g1, be1, rm1, rv1,
     w2, b2, g2, be2, rm2, rv2,
     w3, b3, g3, be3, rm3, rv3,
     wfc, bfc) = params

    Tpad = T + 2 * PAD1
    wo1 = Tpad - K1 + 1
    wo2 = wo1 // POOL2
    wo1u = wo2 * POOL2                 # only columns that survive floor pool(1,4)
    wo2p = wo2 + 2 * PAD3
    wo3 = wo2p - K3 + 1
    wo3p = wo3 // POOL3
    wo3u = wo3p * POOL3                # only columns that survive floor pool(1,8)
    twoH = 2 * hidden
    G = F2 // F1

    # ---- batch blocking: Bb elements per grid step ----
    if B <= 8:
        Bb, Bp = B, B
    else:
        Bb = 8
        Bp = ((B + Bb - 1) // Bb) * Bb

    # ---- folded BN / bias constants (eval mode) ----
    s1 = g1 / jnp.sqrt(rv1 + BN_EPS)
    t1v = (b1 - rm1) * s1 + be1
    s2 = g2 / jnp.sqrt(rv2 + BN_EPS)
    t2v = (b2 - rm2) * s2 + be2
    s3 = g3 / jnp.sqrt(rv3 + BN_EPS)
    t3v = (b3 - rm3) * s3 + be3

    w2s = w2[:, 0, :, 0]                                  # (F2, C) spatial weights
    sumw2 = jnp.sum(w2s, axis=1)

    # ---- input: pad time + batch, rows = (b, c) -- NO F1 replication ----
    xp = jnp.pad(x[:, 0], ((0, Bp - B), (0, 0), (PAD1, PAD1)))   # (Bp, C, Tpad)
    x2 = xp.reshape(Bp * C, Tpad)

    # ---- spatial projection matrix: rows (o, b_local), cols (b_local, c) ----
    pj = (w2s[:, None, None, :] *
          jnp.eye(Bb, dtype=jnp.float32)[None, :, :, None]).reshape(F2 * Bb, Bb * C)

    # ---- Toeplitz matrices for the temporal convs (BN scales folded) ----
    tau = np.arange(Tpad)[:, None]
    tt = np.arange(wo1u)[None, :]
    kk = tau - tt
    v1 = ((kk >= 0) & (kk < K1)).astype(np.float32)
    kk = np.clip(kk, 0, K1 - 1)
    w1s = w1[:, 0, 0, :] * s1[:, None]                    # (F1, K1)
    t1m = w1s[:, kk] * v1[None]                           # (F1, Tpad, wo1u)

    ss = np.arange(wo2p)[:, None]
    tt3 = np.arange(wo3u)[None, :]
    kk3 = ss - tt3
    v3 = ((kk3 >= 0) & (kk3 < K3)).astype(np.float32)
    kk3 = np.clip(kk3, 0, K3 - 1)
    w3s = w3[:, 0, 0, :] * s3[:, None]                    # (F2, K3)
    t3m = w3s[:, kk3] * v3[None]                          # (F2, wo2p, wo3u)

    # ---- per-row affine after block 1+2 (rows ordered (o, b_local)) ----
    t1g = jnp.repeat(t1v, G)                              # t1[g(o)]
    shift2 = t1g * sumw2 * s2 + t2v
    aff2 = jnp.stack([jnp.repeat(s2, Bb), jnp.repeat(shift2, Bb)], axis=1)

    # ---- avg-pool(1,4) + zero-pad(PAD3) as a matrix ----
    p4 = np.zeros((wo1u, wo2p), np.float32)
    for j in range(wo2):
        p4[POOL2 * j:POOL2 * (j + 1), PAD3 + j] = 1.0 / POOL2
    p4 = jnp.asarray(p4)

    c3 = t3v.reshape(F2, 1, 1)

    # ---- FC with avg-pool(1,8) + NCHW flatten folded into the weight ----
    wr = wfc.reshape(twoH, F2, wo3p).transpose(1, 2, 0)   # (F2, wo3p, 2H)
    wfold = jnp.repeat(wr, POOL3, axis=1) / POOL3         # (F2, wo3u, 2H)
    bfc_r = bfc[None, :]

    def full(a):
        nd = a.ndim
        return pl.BlockSpec(a.shape, lambda b, _nd=nd: (0,) * _nd)

    out = pl.pallas_call(
        eegnet_encoder_kernel,
        out_shape=jax.ShapeDtypeStruct((Bp, twoH), jnp.float32),
        grid=(Bp // Bb,),
        in_specs=[
            pl.BlockSpec((Bb * C, Tpad), lambda b: (b, 0)),
            full(pj), full(t1m), full(aff2), full(p4),
            full(t3m), full(c3), full(wfold), full(bfc_r),
        ],
        out_specs=pl.BlockSpec((Bb, twoH), lambda b: (b, 0)),
        scratch_shapes=[pltpu.VMEM((F2 * Bb, wo1u), jnp.float32)],
        compiler_params=pltpu.CompilerParams(dimension_semantics=("parallel",)),
    )(x2, pj, t1m, aff2, p4, t3m, c3, wfold, bfc_r)

    out = out[:B]
    return out[:, :hidden], out[:, hidden:]


def ref_forward(x, params, hidden):
    """Pure-JAX reference (mirrors the PyTorch eval-mode forward)."""
    (w1, b1, g1, be1, rm1, rv1,
     w2, b2, g2, be2, rm2, rv2,
     w3, b3, g3, be3, rm3, rv3,
     wfc, bfc) = params

    def bn(y, g, be, rm, rv):
        return ((y - rm[None, :, None, None]) / jnp.sqrt(rv[None, :, None, None] + BN_EPS)
                * g[None, :, None, None] + be[None, :, None, None])

    dn = ('NCHW', 'OIHW', 'NCHW')
    hi = lax.Precision.HIGHEST
    y = lax.conv_general_dilated(x, w1, (1, 1), ((0, 0), (PAD1, PAD1)),
                                 dimension_numbers=dn, precision=hi)
    y = bn(y + b1[None, :, None, None], g1, be1, rm1, rv1)
    y = lax.conv_general_dilated(y, w2, (1, 1), ((0, 0), (0, 0)),
                                 dimension_numbers=dn, feature_group_count=F1, precision=hi)
    y = jax.nn.elu(bn(y + b2[None, :, None, None], g2, be2, rm2, rv2))
    B, Ch, Hh, W = y.shape
    y = y[..., :(W // POOL2) * POOL2].reshape(B, Ch, Hh, W // POOL2, POOL2).mean(-1)
    y = lax.conv_general_dilated(y, w3, (1, 1), ((0, 0), (PAD3, PAD3)),
                                 dimension_numbers=dn, feature_group_count=F2, precision=hi)
    y = jax.nn.elu(bn(y + b3[None, :, None, None], g3, be3, rm3, rv3))
    B, Ch, Hh, W = y.shape
    y = y[..., :(W // POOL3) * POOL3].reshape(B, Ch, Hh, W // POOL3, POOL3).mean(-1)
    y = y.reshape(B, -1)
    out = jnp.dot(y, wfc.T, precision=hi) + bfc
    return out[:, :hidden], out[:, hidden:]


if __name__ == "__main__":
    B, C, T, hidden = 2, 4, 128, 16
    key = jax.random.PRNGKey(0)
    kx, kp = jax.random.split(key)
    x = jax.random.normal(kx, (B, 1, C, T), jnp.float32)
    params = init_params(kp, C, T, hidden)

    mu, log_var = eegnet_encoder(x, params, hidden)
    jax.block_until_ready((mu, log_var))

    mu_ref, lv_ref = ref_forward(x, params, hidden)
    np.testing.assert_allclose(np.asarray(mu), np.asarray(mu_ref), rtol=2e-2, atol=5e-3)
    np.testing.assert_allclose(np.asarray(log_var), np.asarray(lv_ref), rtol=2e-2, atol=5e-3)
    print("KERNEL_OK")
</pallas_src>

<mosaic_0001>
module attributes {stable_mosaic.version = 11 : i64} {
  func.func @eegnet_encoder_kernel(%arg0: i32, %arg1: memref<8x192xf32, #tpu.memory_space<vmem>>, %arg2: memref<32x8xf32, #tpu.memory_space<vmem>>, %arg3: memref<8x192x128xf32, #tpu.memory_space<vmem>>, %arg4: memref<32x2xf32, #tpu.memory_space<vmem>>, %arg5: memref<128x48xf32, #tpu.memory_space<vmem>>, %arg6: memref<16x48x32xf32, #tpu.memory_space<vmem>>, %arg7: memref<16x1x1xf32, #tpu.memory_space<vmem>>, %arg8: memref<16x32x32xf32, #tpu.memory_space<vmem>>, %arg9: memref<1x32xf32, #tpu.memory_space<vmem>>, %arg10: memref<2x32xf32, #tpu.memory_space<vmem>>, %arg11: memref<32x128xf32, #tpu.memory_space<vmem>>) attributes {dimension_semantics = [#tpu.dimension_semantics<parallel>], iteration_bounds = array<i64: 1>, scalar_prefetch = 0 : i64, scratch_operands = 1 : i64, tpu.core_type = #tpu.core_type<tc>, window_params = [{transform_indices = @transform_0, window_bounds = array<i64: 8, 192>}, {pipeline_mode = #tpu.pipeline_mode<synchronous>, transform_indices = @transform_1, window_bounds = array<i64: 32, 8>}, {pipeline_mode = #tpu.pipeline_mode<synchronous>, transform_indices = @transform_2, window_bounds = array<i64: 8, 192, 128>}, {pipeline_mode = #tpu.pipeline_mode<synchronous>, transform_indices = @transform_3, window_bounds = array<i64: 32, 2>}, {pipeline_mode = #tpu.pipeline_mode<synchronous>, transform_indices = @transform_4, window_bounds = array<i64: 128, 48>}, {pipeline_mode = #tpu.pipeline_mode<synchronous>, transform_indices = @transform_5, window_bounds = array<i64: 16, 48, 32>}, {pipeline_mode = #tpu.pipeline_mode<synchronous>, transform_indices = @transform_6, window_bounds = array<i64: 16, 1, 1>}, {pipeline_mode = #tpu.pipeline_mode<synchronous>, transform_indices = @transform_7, window_bounds = array<i64: 16, 32, 32>}, {pipeline_mode = #tpu.pipeline_mode<synchronous>, transform_indices = @transform_8, window_bounds = array<i64: 1, 32>}, {transform_indices = @transform_9, window_bounds = array<i64: 2, 32>}]} {
    %c0 = arith.constant 0 : index
    %c0_0 = arith.constant 0 : index
    %0 = vector.load %arg1[%c0, %c0_0] : memref<8x192xf32, #tpu.memory_space<vmem>>, vector<8x192xf32>
    %c0_1 = arith.constant 0 : index
    %c0_2 = arith.constant 0 : index
    %1 = vector.load %arg2[%c0_1, %c0_2] : memref<32x8xf32, #tpu.memory_space<vmem>>, vector<32x8xf32>
    %cst = arith.constant dense<0.000000e+00> : vector<32x192xf32>
    %2 = tpu.matmul %1, %0, %cst {dimension_numbers = #tpu.dot_dimension_numbers<[1], [0], [0], [1], [0, 0, 1, 1], [], []>} : vector<32x8xf32>, vector<8x192xf32>, vector<32x192xf32> -> vector<32x192xf32>
    %3 = vector.extract_strided_slice %2 {offsets = [0, 0], sizes = [4, 192], strides = [1, 1]} : vector<32x192xf32> to vector<4x192xf32>
    %c0_3 = arith.constant 0 : index
    %c0_4 = arith.constant 0 : index
    %c0_5 = arith.constant 0 : index
    %4 = vector.load %arg3[%c0_3, %c0_4, %c0_5] : memref<8x192x128xf32, #tpu.memory_space<vmem>>, vector<1x192x128xf32>
    %5 = vector.shape_cast %4 : vector<1x192x128xf32> to vector<192x128xf32>
    %cst_6 = arith.constant dense<0.000000e+00> : vector<4x128xf32>
    %6 = tpu.matmul %3, %5, %cst_6 {dimension_numbers = #tpu.dot_dimension_numbers<[1], [0], [0], [1], [0, 0, 1, 1], [], []>} : vector<4x192xf32>, vector<192x128xf32>, vector<4x128xf32> -> vector<4x128xf32>
    %c0_7 = arith.constant 0 : index
    %c0_8 = arith.constant 0 : index
    %7 = vector.load %arg11[%c0_7, %c0_8] : memref<32x128xf32, #tpu.memory_space<vmem>>, vector<4x128xf32>
    tpu.vector_store %arg11[%c0_7, %c0_8], %6 {strides = array<i32>} : memref<32x128xf32, #tpu.memory_space<vmem>>, vector<4x128xf32>,
    %8 = vector.extract_strided_slice %2 {offsets = [4, 0], sizes = [4, 192], strides = [1, 1]} : vector<32x192xf32> to vector<4x192xf32>
    %c1 = arith.constant 1 : index
    %c0_9 = arith.constant 0 : index
    %c0_10 = arith.constant 0 : index
    %9 = vector.load %arg3[%c1, %c0_9, %c0_10] : memref<8x192x128xf32, #tpu.memory_space<vmem>>, vector<1x192x128xf32>
    %10 = vector.shape_cast %9 : vector<1x192x128xf32> to vector<192x128xf32>
    %cst_11 = arith.constant dense<0.000000e+00> : vector<4x128xf32>
    %11 = tpu.matmul %8, %10, %cst_11 {dimension_numbers = #tpu.dot_dimension_numbers<[1], [0], [0], [1], [0, 0, 1, 1], [], []>} : vector<4x192xf32>, vector<192x128xf32>, vector<4x128xf32> -> vector<4x128xf32>
    %c4 = arith.constant 4 : index
    %c0_12 = arith.constant 0 : index
    %12 = vector.load %arg11[%c4, %c0_12] : memref<32x128xf32, #tpu.memory_space<vmem>>, vector<4x128xf32>
    tpu.vector_store %arg11[%c4, %c0_12], %11 {strides = array<i32>} : memref<32x128xf32, #tpu.memory_space<vmem>>, vector<4x128xf32>,
    %13 = vector.extract_strided_slice %2 {offsets = [8, 0], sizes = [4, 192], strides = [1, 1]} : vector<32x192xf32> to vector<4x192xf32>
    %c2 = arith.constant 2 : index
    %c0_13 = arith.constant 0 : index
    %c0_14 = arith.constant 0 : index
    %14 = vector.load %arg3[%c2, %c0_13, %c0_14] : memref<8x192x128xf32, #tpu.memory_space<vmem>>, vector<1x192x128xf32>
    %15 = vector.shape_cast %14 : vector<1x192x128xf32> to vector<192x128xf32>
    %cst_15 = arith.constant dense<0.000000e+00> : vector<4x128xf32>
    %16 = tpu.matmul %13, %15, %cst_15 {dimension_numbers = #tpu.dot_dimension_numbers<[1], [0], [0], [1], [0, 0, 1, 1], [], []>} : vector<4x192xf32>, vector<192x128xf32>, vector<4x128xf32> -> vector<4x128xf32>
    %c8 = arith.constant 8 : index
    %c0_16 = arith.constant 0 : index
    %17 = vector.load %arg11[%c8, %c0_16] : memref<32x128xf32, #tpu.memory_space<vmem>>, vector<4x128xf32>
    tpu.vector_store %arg11[%c8, %c0_16], %16 {strides = array<i32>} : memref<32x128xf32, #tpu.memory_space<vmem>>, vector<4x128xf32>,
    %18 = vector.extract_strided_slice %2 {offsets = [12, 0], sizes = [4, 192], strides = [1, 1]} : vector<32x192xf32> to vector<4x192xf32>
    %c3 = arith.constant 3 : index
    %c0_17 = arith.constant 0 : index
    %c0_18 = arith.constant 0 : index
    %19 = vector.load %arg3[%c3, %c0_17, %c0_18] : memref<8x192x128xf32, #tpu.memory_space<vmem>>, vector<1x192x128xf32>
    %20 = vector.shape_cast %19 : vector<1x192x128xf32> to vector<192x128xf32>
    %cst_19 = arith.constant dense<0.000000e+00> : vector<4x128xf32>
    %21 = tpu.matmul %18, %20, %cst_19 {dimension_numbers = #tpu.dot_dimension_numbers<[1], [0], [0], [1], [0, 0, 1, 1], [], []>} : vector<4x192xf32>, vector<192x128xf32>, vector<4x128xf32> -> vector<4x128xf32>
    %c12 = arith.constant 12 : index
    %c0_20 = arith.constant 0 : index
    %22 = vector.load %arg11[%c12, %c0_20] : memref<32x128xf32, #tpu.memory_space<vmem>>, vector<4x128xf32>
    tpu.vector_store %arg11[%c12, %c0_20], %21 {strides = array<i32>} : memref<32x128xf32, #tpu.memory_space<vmem>>, vector<4x128xf32>,
    %23 = vector.extract_strided_slice %2 {offsets = [16, 0], sizes = [4, 192], strides = [1, 1]} : vector<32x192xf32> to vector<4x192xf32>
    %c4_21 = arith.constant 4 : index
    %c0_22 = arith.constant 0 : index
    %c0_23 = arith.constant 0 : index
    %24 = vector.load %arg3[%c4_21, %c0_22, %c0_23] : memref<8x192x128xf32, #tpu.memory_space<vmem>>, vector<1x192x128xf32>
    %25 = vector.shape_cast %24 : vector<1x192x128xf32> to vector<192x128xf32>
    %cst_24 = arith.constant dense<0.000000e+00> : vector<4x128xf32>
    %26 = tpu.matmul %23, %25, %cst_24 {dimension_numbers = #tpu.dot_dimension_numbers<[1], [0], [0], [1], [0, 0, 1, 1], [], []>} : vector<4x192xf32>, vector<192x128xf32>, vector<4x128xf32> -> vector<4x128xf32>
    %c16 = arith.constant 16 : index
    %c0_25 = arith.constant 0 : index
    %27 = vector.load %arg11[%c16, %c0_25] : memref<32x128xf32, #tpu.memory_space<vmem>>, vector<4x128xf32>
    tpu.vector_store %arg11[%c16, %c0_25], %26 {strides = array<i32>} : memref<32x128xf32, #tpu.memory_space<vmem>>, vector<4x128xf32>,
    %28 = vector.extract_strided_slice %2 {offsets = [20, 0], sizes = [4, 192], strides = [1, 1]} : vector<32x192xf32> to vector<4x192xf32>
    %c5 = arith.constant 5 : index
    %c0_26 = arith.constant 0 : index
    %c0_27 = arith.constant 0 : index
    %29 = vector.load %arg3[%c5, %c0_26, %c0_27] : memref<8x192x128xf32, #tpu.memory_space<vmem>>, vector<1x192x128xf32>
    %30 = vector.shape_cast %29 : vector<1x192x128xf32> to vector<192x128xf32>
    %cst_28 = arith.constant dense<0.000000e+00> : vector<4x128xf32>
    %31 = tpu.matmul %28, %30, %cst_28 {dimension_numbers = #tpu.dot_dimension_numbers<[1], [0], [0], [1], [0, 0, 1, 1], [], []>} : vector<4x192xf32>, vector<192x128xf32>, vector<4x128xf32> -> vector<4x128xf32>
    %c20 = arith.constant 20 : index
    %c0_29 = arith.constant 0 : index
    %32 = vector.load %arg11[%c20, %c0_29] : memref<32x128xf32, #tpu.memory_space<vmem>>, vector<4x128xf32>
    tpu.vector_store %arg11[%c20, %c0_29], %31 {strides = array<i32>} : memref<32x128xf32, #tpu.memory_space<vmem>>, vector<4x128xf32>,
    %33 = vector.extract_strided_slice %2 {offsets = [24, 0], sizes = [4, 192], strides = [1, 1]} : vector<32x192xf32> to vector<4x192xf32>
    %c6 = arith.constant 6 : index
    %c0_30 = arith.constant 0 : index
    %c0_31 = arith.constant 0 : index
    %34 = vector.load %arg3[%c6, %c0_30, %c0_31] : memref<8x192x128xf32, #tpu.memory_space<vmem>>, vector<1x192x128xf32>
    %35 = vector.shape_cast %34 : vector<1x192x128xf32> to vector<192x128xf32>
    %cst_32 = arith.constant dense<0.000000e+00> : vector<4x128xf32>
    %36 = tpu.matmul %33, %35, %cst_32 {dimension_numbers = #tpu.dot_dimension_numbers<[1], [0], [0], [1], [0, 0, 1, 1], [], []>} : vector<4x192xf32>, vector<192x128xf32>, vector<4x128xf32> -> vector<4x128xf32>
    %c24 = arith.constant 24 : index
    %c0_33 = arith.constant 0 : index
    %37 = vector.load %arg11[%c24, %c0_33] : memref<32x128xf32, #tpu.memory_space<vmem>>, vector<4x128xf32>
    tpu.vector_store %arg11[%c24, %c0_33], %36 {strides = array<i32>} : memref<32x128xf32, #tpu.memory_space<vmem>>, vector<4x128xf32>,
    %38 = vector.extract_strided_slice %2 {offsets = [28, 0], sizes = [4, 192], strides = [1, 1]} : vector<32x192xf32> to vector<4x192xf32>
    %c7 = arith.constant 7 : index
    %c0_34 = arith.constant 0 : index
    %c0_35 = arith.constant 0 : index
    %39 = vector.load %arg3[%c7, %c0_34, %c0_35] : memref<8x192x128xf32, #tpu.memory_space<vmem>>, vector<1x192x128xf32>
    %40 = vector.shape_cast %39 : vector<1x192x128xf32> to vector<192x128xf32>
    %cst_36 = arith.constant dense<0.000000e+00> : vector<4x128xf32>
    %41 = tpu.matmul %38, %40, %cst_36 {dimension_numbers = #tpu.dot_dimension_numbers<[1], [0], [0], [1], [0, 0, 1, 1], [], []>} : vector<4x192xf32>, vector<192x128xf32>, vector<4x128xf32> -> vector<4x128xf32>
    %c28 = arith.constant 28 : index
    %c0_37 = arith.constant 0 : index
    %42 = vector.load %arg11[%c28, %c0_37] : memref<32x128xf32, #tpu.memory_space<vmem>>, vector<4x128xf32>
    tpu.vector_store %arg11[%c28, %c0_37], %41 {strides = array<i32>} : memref<32x128xf32, #tpu.memory_space<vmem>>, vector<4x128xf32>,
    %c0_38 = arith.constant 0 : index
    %c0_39 = arith.constant 0 : index
    %43 = vector.load %arg11[%c0_38, %c0_39] : memref<32x128xf32, #tpu.memory_space<vmem>>, vector<32x128xf32>
    %c0_40 = arith.constant 0 : index
    %c0_41 = arith.constant 0 : index
    %44 = vector.load %arg4[%c0_40, %c0_41] : memref<32x2xf32, #tpu.memory_space<vmem>>, vector<32x1xf32>
    %45 = vector.broadcast %44 : vector<32x1xf32> to vector<32x128xf32>
    %46 = arith.mulf %43, %45 : vector<32x128xf32>
    %c0_42 = arith.constant 0 : index
    %c1_43 = arith.constant 1 : index
    %47 = vector.load %arg4[%c0_42, %c1_43] : memref<32x2xf32, #tpu.memory_space<vmem>>, vector<32x1xf32>
    %48 = vector.broadcast %47 : vector<32x1xf32> to vector<32x128xf32>
    %49 = arith.addf %46, %48 : vector<32x128xf32>
    %cst_44 = arith.constant 0.000000e+00 : f32
    %50 = vector.broadcast %cst_44 : f32 to vector<32x128xf32>
    %51 = arith.cmpf ogt, %49, %50 : vector<32x128xf32>
    %cst_45 = arith.constant 0.000000e+00 : f32
    %52 = vector.broadcast %cst_45 : f32 to vector<32x128xf32>
    %53 = arith.minimumf %49, %52 : vector<32x128xf32>
    %54 = math.exp %53 : vector<32x128xf32>
    %cst_46 = arith.constant 1.000000e+00 : f32
    %55 = vector.broadcast %cst_46 : f32 to vector<32x128xf32>
    %56 = arith.subf %54, %55 : vector<32x128xf32>
    %57 = arith.select %51, %49, %56 : vector<32x128xi1>, vector<32x128xf32>
    %c0_47 = arith.constant 0 : index
    %c0_48 = arith.constant 0 : index
    %58 = vector.load %arg5[%c0_47, %c0_48] : memref<128x48xf32, #tpu.memory_space<vmem>>, vector<128x48xf32>
    %cst_49 = arith.constant dense<0.000000e+00> : vector<32x48xf32>
    %59 = tpu.matmul %57, %58, %cst_49 {dimension_numbers = #tpu.dot_dimension_numbers<[1], [0], [0], [1], [0, 0, 1, 1], [], []>} : vector<32x128xf32>, vector<128x48xf32>, vector<32x48xf32> -> vector<32x48xf32>
    %cst_50 = arith.constant 0.000000e+00 : f32
    %60 = vector.broadcast %cst_50 : f32 to vector<2x32xf32>
    %61 = vector.extract_strided_slice %59 {offsets = [0, 0], sizes = [2, 48], strides = [1, 1]} : vector<32x48xf32> to vector<2x48xf32>
    %c0_51 = arith.constant 0 : index
    %c0_52 = arith.constant 0 : index
    %c0_53 = arith.constant 0 : index
    %62 = vector.load %arg6[%c0_51, %c0_52, %c0_53] : memref<16x48x32xf32, #tpu.memory_space<vmem>>, vector<1x48x32xf32>
    %63 = vector.shape_cast %62 : vector<1x48x32xf32> to vector<48x32xf32>
    %cst_54 = arith.constant dense<0.000000e+00> : vector<2x32xf32>
    %64 = tpu.matmul %61, %63, %cst_54 {dimension_numbers = #tpu.dot_dimension_numbers<[1], [0], [0], [1], [0, 0, 1, 1], [], []>} : vector<2x48xf32>, vector<48x32xf32>, vector<2x32xf32> -> vector<2x32xf32>
    %c0_55 = arith.constant 0 : index
    %c0_56 = arith.constant 0 : index
    %c0_57 = arith.constant 0 : index
    %65 = vector.load %arg7[%c0_55, %c0_56, %c0_57] : memref<16x1x1xf32, #tpu.memory_space<vmem>>, vector<1x1x1xf32>
    %66 = vector.shape_cast %65 : vector<1x1x1xf32> to vector<1x1xf32>
    %67 = vector.broadcast %66 : vector<1x1xf32> to vector<2x32xf32>
    %68 = arith.addf %64, %67 : vector<2x32xf32>
    %cst_58 = arith.constant 0.000000e+00 : f32
    %69 = vector.broadcast %cst_58 : f32 to vector<2x32xf32>
    %70 = arith.cmpf ogt, %68, %69 : vector<2x32xf32>
    %cst_59 = arith.constant 0.000000e+00 : f32
    %71 = vector.broadcast %cst_59 : f32 to vector<2x32xf32>
    %72 = arith.minimumf %68, %71 : vector<2x32xf32>
    %73 = math.exp %72 : vector<2x32xf32>
    %cst_60 = arith.constant 1.000000e+00 : f32
    %74 = vector.broadcast %cst_60 : f32 to vector<2x32xf32>
    %75 = arith.subf %73, %74 : vector<2x32xf32>
    %76 = arith.select %70, %68, %75 : vector<2x32xi1>, vector<2x32xf32>
    %c0_61 = arith.constant 0 : index
    %c0_62 = arith.constant 0 : index
    %c0_63 = arith.constant 0 : index
    %77 = vector.load %arg8[%c0_61, %c0_62, %c0_63] : memref<16x32x32xf32, #tpu.memory_space<vmem>>, vector<1x32x32xf32>
    %78 = vector.shape_cast %77 : vector<1x32x32xf32> to vector<32x32xf32>
    %cst_64 = arith.constant dense<0.000000e+00> : vector<2x32xf32>
    %79 = tpu.matmul %76, %78, %cst_64 {dimension_numbers = #tpu.dot_dimension_numbers<[1], [0], [0], [1], [0, 0, 1, 1], [], []>} : vector<2x32xf32>, vector<32x32xf32>, vector<2x32xf32> -> vector<2x32xf32>
    %80 = arith.addf %60, %79 : vector<2x32xf32>
    %81 = vector.extract_strided_slice %59 {offsets = [2, 0], sizes = [2, 48], strides = [1, 1]} : vector<32x48xf32> to vector<2x48xf32>
    %c1_65 = arith.constant 1 : index
    %c0_66 = arith.constant 0 : index
    %c0_67 = arith.constant 0 : index
    %82 = vector.load %arg6[%c1_65, %c0_66, %c0_67] : memref<16x48x32xf32, #tpu.memory_space<vmem>>, vector<1x48x32xf32>
    %83 = vector.shape_cast %82 : vector<1x48x32xf32> to vector<48x32xf32>
    %cst_68 = arith.constant dense<0.000000e+00> : vector<2x32xf32>
    %84 = tpu.matmul %81, %83, %cst_68 {dimension_numbers = #tpu.dot_dimension_numbers<[1], [0], [0], [1], [0, 0, 1, 1], [], []>} : vector<2x48xf32>, vector<48x32xf32>, vector<2x32xf32> -> vector<2x32xf32>
    %c1_69 = arith.constant 1 : index
    %c0_70 = arith.constant 0 : index
    %c0_71 = arith.constant 0 : index
    %85 = vector.load %arg7[%c1_69, %c0_70, %c0_71] : memref<16x1x1xf32, #tpu.memory_space<vmem>>, vector<1x1x1xf32>
    %86 = vector.shape_cast %85 : vector<1x1x1xf32> to vector<1x1xf32>
    %87 = vector.broadcast %86 : vector<1x1xf32> to vector<2x32xf32>
    %88 = arith.addf %84, %87 : vector<2x32xf32>
    %cst_72 = arith.constant 0.000000e+00 : f32
    %89 = vector.broadcast %cst_72 : f32 to vector<2x32xf32>
    %90 = arith.cmpf ogt, %88, %89 : vector<2x32xf32>
    %cst_73 = arith.constant 0.000000e+00 : f32
    %91 = vector.broadcast %cst_73 : f32 to vector<2x32xf32>
    %92 = arith.minimumf %88, %91 : vector<2x32xf32>
    %93 = math.exp %92 : vector<2x32xf32>
    %cst_74 = arith.constant 1.000000e+00 : f32
    %94 = vector.broadcast %cst_74 : f32 to vector<2x32xf32>
    %95 = arith.subf %93, %94 : vector<2x32xf32>
    %96 = arith.select %90, %88, %95 : vector<2x32xi1>, vector<2x32xf32>
    %c1_75 = arith.constant 1 : index
    %c0_76 = arith.constant 0 : index
    %c0_77 = arith.constant 0 : index
    %97 = vector.load %arg8[%c1_75, %c0_76, %c0_77] : memref<16x32x32xf32, #tpu.memory_space<vmem>>, vector<1x32x32xf32>
    %98 = vector.shape_cast %97 : vector<1x32x32xf32> to vector<32x32xf32>
    %cst_78 = arith.constant dense<0.000000e+00> : vector<2x32xf32>
    %99 = tpu.matmul %96, %98, %cst_78 {dimension_numbers = #tpu.dot_dimension_numbers<[1], [0], [0], [1], [0, 0, 1, 1], [], []>} : vector<2x32xf32>, vector<32x32xf32>, vector<2x32xf32> -> vector<2x32xf32>
    %100 = arith.addf %80, %99 : vector<2x32xf32>
    %101 = vector.extract_strided_slice %59 {offsets = [4, 0], sizes = [2, 48], strides = [1, 1]} : vector<32x48xf32> to vector<2x48xf32>
    %c2_79 = arith.constant 2 : index
    %c0_80 = arith.constant 0 : index
    %c0_81 = arith.constant 0 : index
    %102 = vector.load %arg6[%c2_79, %c0_80, %c0_81] : memref<16x48x32xf32, #tpu.memory_space<vmem>>, vector<1x48x32xf32>
    %103 = vector.shape_cast %102 : vector<1x48x32xf32> to vector<48x32xf32>
    %cst_82 = arith.constant dense<0.000000e+00> : vector<2x32xf32>
    %104 = tpu.matmul %101, %103, %cst_82 {dimension_numbers = #tpu.dot_dimension_numbers<[1], [0], [0], [1], [0, 0, 1, 1], [], []>} : vector<2x48xf32>, vector<48x32xf32>, vector<2x32xf32> -> vector<2x32xf32>
    %c2_83 = arith.constant 2 : index
    %c0_84 = arith.constant 0 : index
    %c0_85 = arith.constant 0 : index
    %105 = vector.load %arg7[%c2_83, %c0_84, %c0_85] : memref<16x1x1xf32, #tpu.memory_space<vmem>>, vector<1x1x1xf32>
    %106 = vector.shape_cast %105 : vector<1x1x1xf32> to vector<1x1xf32>
    %107 = vector.broadcast %106 : vector<1x1xf32> to vector<2x32xf32>
    %108 = arith.addf %104, %107 : vector<2x32xf32>
    %cst_86 = arith.constant 0.000000e+00 : f32
    %109 = vector.broadcast %cst_86 : f32 to vector<2x32xf32>
    %110 = arith.cmpf ogt, %108, %109 : vector<2x32xf32>
    %cst_87 = arith.constant 0.000000e+00 : f32
    %111 = vector.broadcast %cst_87 : f32 to vector<2x32xf32>
    %112 = arith.minimumf %108, %111 : vector<2x32xf32>
    %113 = math.exp %112 : vector<2x32xf32>
    %cst_88 = arith.constant 1.000000e+00 : f32
    %114 = vector.broadcast %cst_88 : f32 to vector<2x32xf32>
    %115 = arith.subf %113, %114 : vector<2x32xf32>
    %116 = arith.select %110, %108, %115 : vector<2x32xi1>, vector<2x32xf32>
    %c2_89 = arith.constant 2 : index
    %c0_90 = arith.constant 0 : index
    %c0_91 = arith.constant 0 : index
    %117 = vector.load %arg8[%c2_89, %c0_90, %c0_91] : memref<16x32x32xf32, #tpu.memory_space<vmem>>, vector<1x32x32xf32>
    %118 = vector.shape_cast %117 : vector<1x32x32xf32> to vector<32x32xf32>
    %cst_92 = arith.constant dense<0.000000e+00> : vector<2x32xf32>
    %119 = tpu.matmul %116, %118, %cst_92 {dimension_numbers = #tpu.dot_dimension_numbers<[1], [0], [0], [1], [0, 0, 1, 1], [], []>} : vector<2x32xf32>, vector<32x32xf32>, vector<2x32xf32> -> vector<2x32xf32>
    %120 = arith.addf %100, %119 : vector<2x32xf32>
    %121 = vector.extract_strided_slice %59 {offsets = [6, 0], sizes = [2, 48], strides = [1, 1]} : vector<32x48xf32> to vector<2x48xf32>
    %c3_93 = arith.constant 3 : index
    %c0_94 = arith.constant 0 : index
    %c0_95 = arith.constant 0 : index
    %122 = vector.load %arg6[%c3_93, %c0_94, %c0_95] : memref<16x48x32xf32, #tpu.memory_space<vmem>>, vector<1x48x32xf32>
    %123 = vector.shape_cast %122 : vector<1x48x32xf32> to vector<48x32xf32>
    %cst_96 = arith.constant dense<0.000000e+00> : vector<2x32xf32>
    %124 = tpu.matmul %121, %123, %cst_96 {dimension_numbers = #tpu.dot_dimension_numbers<[1], [0], [0], [1], [0, 0, 1, 1], [], []>} : vector<2x48xf32>, vector<48x32xf32>, vector<2x32xf32> -> vector<2x32xf32>
    %c3_97 = arith.constant 3 : index
    %c0_98 = arith.constant 0 : index
    %c0_99 = arith.constant 0 : index
    %125 = vector.load %arg7[%c3_97, %c0_98, %c0_99] : memref<16x1x1xf32, #tpu.memory_space<vmem>>, vector<1x1x1xf32>
    %126 = vector.shape_cast %125 : vector<1x1x1xf32> to vector<1x1xf32>
    %127 = vector.broadcast %126 : vector<1x1xf32> to vector<2x32xf32>
    %128 = arith.addf %124, %127 : vector<2x32xf32>
    %cst_100 = arith.constant 0.000000e+00 : f32
    %129 = vector.broadcast %cst_100 : f32 to vector<2x32xf32>
    %130 = arith.cmpf ogt, %128, %129 : vector<2x32xf32>
    %cst_101 = arith.constant 0.000000e+00 : f32
    %131 = vector.broadcast %cst_101 : f32 to vector<2x32xf32>
    %132 = arith.minimumf %128, %131 : vector<2x32xf32>
    %133 = math.exp %132 : vector<2x32xf32>
    %cst_102 = arith.constant 1.000000e+00 : f32
    %134 = vector.broadcast %cst_102 : f32 to vector<2x32xf32>
    %135 = arith.subf %133, %134 : vector<2x32xf32>
    %136 = arith.select %130, %128, %135 : vector<2x32xi1>, vector<2x32xf32>
    %c3_103 = arith.constant 3 : index
    %c0_104 = arith.constant 0 : index
    %c0_105 = arith.constant 0 : index
    %137 = vector.load %arg8[%c3_103, %c0_104, %c0_105] : memref<16x32x32xf32, #tpu.memory_space<vmem>>, vector<1x32x32xf32>
    %138 = vector.shape_cast %137 : vector<1x32x32xf32> to vector<32x32xf32>
    %cst_106 = arith.constant dense<0.000000e+00> : vector<2x32xf32>
    %139 = tpu.matmul %136, %138, %cst_106 {dimension_numbers = #tpu.dot_dimension_numbers<[1], [0], [0], [1], [0, 0, 1, 1], [], []>} : vector<2x32xf32>, vector<32x32xf32>, vector<2x32xf32> -> vector<2x32xf32>
    %140 = arith.addf %120, %139 : vector<2x32xf32>
    %141 = vector.extract_strided_slice %59 {offsets = [8, 0], sizes = [2, 48], strides = [1, 1]} : vector<32x48xf32> to vector<2x48xf32>
    %c4_107 = arith.constant 4 : index
    %c0_108 = arith.constant 0 : index
    %c0_109 = arith.constant 0 : index
    %142 = vector.load %arg6[%c4_107, %c0_108, %c0_109] : memref<16x48x32xf32, #tpu.memory_space<vmem>>, vector<1x48x32xf32>
    %143 = vector.shape_cast %142 : vector<1x48x32xf32> to vector<48x32xf32>
    %cst_110 = arith.constant dense<0.000000e+00> : vector<2x32xf32>
    %144 = tpu.matmul %141, %143, %cst_110 {dimension_numbers = #tpu.dot_dimension_numbers<[1], [0], [0], [1], [0, 0, 1, 1], [], []>} : vector<2x48xf32>, vector<48x32xf32>, vector<2x32xf32> -> vector<2x32xf32>
    %c4_111 = arith.constant 4 : index
    %c0_112 = arith.constant 0 : index
    %c0_113 = arith.constant 0 : index
    %145 = vector.load %arg7[%c4_111, %c0_112, %c0_113] : memref<16x1x1xf32, #tpu.memory_space<vmem>>, vector<1x1x1xf32>
    %146 = vector.shape_cast %145 : vector<1x1x1xf32> to vector<1x1xf32>
    %147 = vector.broadcast %146 : vector<1x1xf32> to vector<2x32xf32>
    %148 = arith.addf %144, %147 : vector<2x32xf32>
    %cst_114 = arith.constant 0.000000e+00 : f32
    %149 = vector.broadcast %cst_114 : f32 to vector<2x32xf32>
    %150 = arith.cmpf ogt, %148, %149 : vector<2x32xf32>
    %cst_115 = arith.constant 0.000000e+00 : f32
    %151 = vector.broadcast %cst_115 : f32 to vector<2x32xf32>
    %152 = arith.minimumf %148, %151 : vector<2x32xf32>
    %153 = math.exp %152 : vector<2x32xf32>
    %cst_116 = arith.constant 1.000000e+00 : f32
    %154 = vector.broadcast %cst_116 : f32 to vector<2x32xf32>
    %155 = arith.subf %153, %154 : vector<2x32xf32>
    %156 = arith.select %150, %148, %155 : vector<2x32xi1>, vector<2x32xf32>
    %c4_117 = arith.constant 4 : index
    %c0_118 = arith.constant 0 : index
    %c0_119 = arith.constant 0 : index
    %157 = vector.load %arg8[%c4_117, %c0_118, %c0_119] : memref<16x32x32xf32, #tpu.memory_space<vmem>>, vector<1x32x32xf32>
    %158 = vector.shape_cast %157 : vector<1x32x32xf32> to vector<32x32xf32>
    %cst_120 = arith.constant dense<0.000000e+00> : vector<2x32xf32>
    %159 = tpu.matmul %156, %158, %cst_120 {dimension_numbers = #tpu.dot_dimension_numbers<[1], [0], [0], [1], [0, 0, 1, 1], [], []>} : vector<2x32xf32>, vector<32x32xf32>, vector<2x32xf32> -> vector<2x32xf32>
    %160 = arith.addf %140, %159 : vector<2x32xf32>
    %161 = vector.extract_strided_slice %59 {offsets = [10, 0], sizes = [2, 48], strides = [1, 1]} : vector<32x48xf32> to vector<2x48xf32>
    %c5_121 = arith.constant 5 : index
    %c0_122 = arith.constant 0 : index
    %c0_123 = arith.constant 0 : index
    %162 = vector.load %arg6[%c5_121, %c0_122, %c0_123] : memref<16x48x32xf32, #tpu.memory_space<vmem>>, vector<1x48x32xf32>
    %163 = vector.shape_cast %162 : vector<1x48x32xf32> to vector<48x32xf32>
    %cst_124 = arith.constant dense<0.000000e+00> : vector<2x32xf32>
    %164 = tpu.matmul %161, %163, %cst_124 {dimension_numbers = #tpu.dot_dimension_numbers<[1], [0], [0], [1], [0, 0, 1, 1], [], []>} : vector<2x48xf32>, vector<48x32xf32>, vector<2x32xf32> -> vector<2x32xf32>
    %c5_125 = arith.constant 5 : index
    %c0_126 = arith.constant 0 : index
    %c0_127 = arith.constant 0 : index
    %165 = vector.load %arg7[%c5_125, %c0_126, %c0_127] : memref<16x1x1xf32, #tpu.memory_space<vmem>>, vector<1x1x1xf32>
    %166 = vector.shape_cast %165 : vector<1x1x1xf32> to vector<1x1xf32>
    %167 = vector.broadcast %166 : vector<1x1xf32> to vector<2x32xf32>
    %168 = arith.addf %164, %167 : vector<2x32xf32>
    %cst_128 = arith.constant 0.000000e+00 : f32
    %169 = vector.broadcast %cst_128 : f32 to vector<2x32xf32>
    %170 = arith.cmpf ogt, %168, %169 : vector<2x32xf32>
    %cst_129 = arith.constant 0.000000e+00 : f32
    %171 = vector.broadcast %cst_129 : f32 to vector<2x32xf32>
    %172 = arith.minimumf %168, %171 : vector<2x32xf32>
    %173 = math.exp %172 : vector<2x32xf32>
    %cst_130 = arith.constant 1.000000e+00 : f32
    %174 = vector.broadcast %cst_130 : f32 to vector<2x32xf32>
    %175 = arith.subf %173, %174 : vector<2x32xf32>
    %176 = arith.select %170, %168, %175 : vector<2x32xi1>, vector<2x32xf32>
    %c5_131 = arith.constant 5 : index
    %c0_132 = arith.constant 0 : index
    %c0_133 = arith.constant 0 : index
    %177 = vector.load %arg8[%c5_131, %c0_132, %c0_133] : memref<16x32x32xf32, #tpu.memory_space<vmem>>, vector<1x32x32xf32>
    %178 = vector.shape_cast %177 : vector<1x32x32xf32> to vector<32x32xf32>
    %cst_134 = arith.constant dense<0.000000e+00> : vector<2x32xf32>
    %179 = tpu.matmul %176, %178, %cst_134 {dimension_numbers = #tpu.dot_dimension_numbers<[1], [0], [0], [1], [0, 0, 1, 1], [], []>} : vector<2x32xf32>, vector<32x32xf32>, vector<2x32xf32> -> vector<2x32xf32>
    %180 = arith.addf %160, %179 : vector<2x32xf32>
    %181 = vector.extract_strided_slice %59 {offsets = [12, 0], sizes = [2, 48], strides = [1, 1]} : vector<32x48xf32> to vector<2x48xf32>
    %c6_135 = arith.constant 6 : index
    %c0_136 = arith.constant 0 : index
    %c0_137 = arith.constant 0 : index
    %182 = vector.load %arg6[%c6_135, %c0_136, %c0_137] : memref<16x48x32xf32, #tpu.memory_space<vmem>>, vector<1x48x32xf32>
    %183 = vector.shape_cast %182 : vector<1x48x32xf32> to vector<48x32xf32>
    %cst_138 = arith.constant dense<0.000000e+00> : vector<2x32xf32>
    %184 = tpu.matmul %181, %183, %cst_138 {dimension_numbers = #tpu.dot_dimension_numbers<[1], [0], [0], [1], [0, 0, 1, 1], [], []>} : vector<2x48xf32>, vector<48x32xf32>, vector<2x32xf32> -> vector<2x32xf32>
    %c6_139 = arith.constant 6 : index
    %c0_140 = arith.constant 0 : index
    %c0_141 = arith.constant 0 : index
    %185 = vector.load %arg7[%c6_139, %c0_140, %c0_141] : memref<16x1x1xf32, #tpu.memory_space<vmem>>, vector<1x1x1xf32>
    %186 = vector.shape_cast %185 : vector<1x1x1xf32> to vector<1x1xf32>
    %187 = vector.broadcast %186 : vector<1x1xf32> to vector<2x32xf32>
    %188 = arith.addf %184, %187 : vector<2x32xf32>
    %cst_142 = arith.constant 0.000000e+00 : f32
    %189 = vector.broadcast %cst_142 : f32 to vector<2x32xf32>
    %190 = arith.cmpf ogt, %188, %189 : vector<2x32xf32>
    %cst_143 = arith.constant 0.000000e+00 : f32
    %191 = vector.broadcast %cst_143 : f32 to vector<2x32xf32>
    %192 = arith.minimumf %188, %191 : vector<2x32xf32>
    %193 = math.exp %192 : vector<2x32xf32>
    %cst_144 = arith.constant 1.000000e+00 : f32
    %194 = vector.broadcast %cst_144 : f32 to vector<2x32xf32>
    %195 = arith.subf %193, %194 : vector<2x32xf32>
    %196 = arith.select %190, %188, %195 : vector<2x32xi1>, vector<2x32xf32>
    %c6_145 = arith.constant 6 : index
    %c0_146 = arith.constant 0 : index
    %c0_147 = arith.constant 0 : index
    %197 = vector.load %arg8[%c6_145, %c0_146, %c0_147] : memref<16x32x32xf32, #tpu.memory_space<vmem>>, vector<1x32x32xf32>
    %198 = vector.shape_cast %197 : vector<1x32x32xf32> to vector<32x32xf32>
    %cst_148 = arith.constant dense<0.000000e+00> : vector<2x32xf32>
    %199 = tpu.matmul %196, %198, %cst_148 {dimension_numbers = #tpu.dot_dimension_numbers<[1], [0], [0], [1], [0, 0, 1, 1], [], []>} : vector<2x32xf32>, vector<32x32xf32>, vector<2x32xf32> -> vector<2x32xf32>
    %200 = arith.addf %180, %199 : vector<2x32xf32>
    %201 = vector.extract_strided_slice %59 {offsets = [14, 0], sizes = [2, 48], strides = [1, 1]} : vector<32x48xf32> to vector<2x48xf32>
    %c7_149 = arith.constant 7 : index
    %c0_150 = arith.constant 0 : index
    %c0_151 = arith.constant 0 : index
    %202 = vector.load %arg6[%c7_149, %c0_150, %c0_151] : memref<16x48x32xf32, #tpu.memory_space<vmem>>, vector<1x48x32xf32>
    %203 = vector.shape_cast %202 : vector<1x48x32xf32> to vector<48x32xf32>
    %cst_152 = arith.constant dense<0.000000e+00> : vector<2x32xf32>
    %204 = tpu.matmul %201, %203, %cst_152 {dimension_numbers = #tpu.dot_dimension_numbers<[1], [0], [0], [1], [0, 0, 1, 1], [], []>} : vector<2x48xf32>, vector<48x32xf32>, vector<2x32xf32> -> vector<2x32xf32>
    %c7_153 = arith.constant 7 : index
    %c0_154 = arith.constant 0 : index
    %c0_155 = arith.constant 0 : index
    %205 = vector.load %arg7[%c7_153, %c0_154, %c0_155] : memref<16x1x1xf32, #tpu.memory_space<vmem>>, vector<1x1x1xf32>
    %206 = vector.shape_cast %205 : vector<1x1x1xf32> to vector<1x1xf32>
    %207 = vector.broadcast %206 : vector<1x1xf32> to vector<2x32xf32>
    %208 = arith.addf %204, %207 : vector<2x32xf32>
    %cst_156 = arith.constant 0.000000e+00 : f32
    %209 = vector.broadcast %cst_156 : f32 to vector<2x32xf32>
    %210 = arith.cmpf ogt, %208, %209 : vector<2x32xf32>
    %cst_157 = arith.constant 0.000000e+00 : f32
    %211 = vector.broadcast %cst_157 : f32 to vector<2x32xf32>
    %212 = arith.minimumf %208, %211 : vector<2x32xf32>
    %213 = math.exp %212 : vector<2x32xf32>
    %cst_158 = arith.constant 1.000000e+00 : f32
    %214 = vector.broadcast %cst_158 : f32 to vector<2x32xf32>
    %215 = arith.subf %213, %214 : vector<2x32xf32>
    %216 = arith.select %210, %208, %215 : vector<2x32xi1>, vector<2x32xf32>
    %c7_159 = arith.constant 7 : index
    %c0_160 = arith.constant 0 : index
    %c0_161 = arith.constant 0 : index
    %217 = vector.load %arg8[%c7_159, %c0_160, %c0_161] : memref<16x32x32xf32, #tpu.memory_space<vmem>>, vector<1x32x32xf32>
    %218 = vector.shape_cast %217 : vector<1x32x32xf32> to vector<32x32xf32>
    %cst_162 = arith.constant dense<0.000000e+00> : vector<2x32xf32>
    %219 = tpu.matmul %216, %218, %cst_162 {dimension_numbers = #tpu.dot_dimension_numbers<[1], [0], [0], [1], [0, 0, 1, 1], [], []>} : vector<2x32xf32>, vector<32x32xf32>, vector<2x32xf32> -> vector<2x32xf32>
    %220 = arith.addf %200, %219 : vector<2x32xf32>
    %221 = vector.extract_strided_slice %59 {offsets = [16, 0], sizes = [2, 48], strides = [1, 1]} : vector<32x48xf32> to vector<2x48xf32>
    %c8_163 = arith.constant 8 : index
    %c0_164 = arith.constant 0 : index
    %c0_165 = arith.constant 0 : index
    %222 = vector.load %arg6[%c8_163, %c0_164, %c0_165] : memref<16x48x32xf32, #tpu.memory_space<vmem>>, vector<1x48x32xf32>
    %223 = vector.shape_cast %222 : vector<1x48x32xf32> to vector<48x32xf32>
    %cst_166 = arith.constant dense<0.000000e+00> : vector<2x32xf32>
    %224 = tpu.matmul %221, %223, %cst_166 {dimension_numbers = #tpu.dot_dimension_numbers<[1], [0], [0], [1], [0, 0, 1, 1], [], []>} : vector<2x48xf32>, vector<48x32xf32>, vector<2x32xf32> -> vector<2x32xf32>
    %c8_167 = arith.constant 8 : index
    %c0_168 = arith.constant 0 : index
    %c0_169 = arith.constant 0 : index
    %225 = vector.load %arg7[%c8_167, %c0_168, %c0_169] : memref<16x1x1xf32, #tpu.memory_space<vmem>>, vector<1x1x1xf32>
    %226 = vector.shape_cast %225 : vector<1x1x1xf32> to vector<1x1xf32>
    %227 = vector.broadcast %226 : vector<1x1xf32> to vector<2x32xf32>
    %228 = arith.addf %224, %227 : vector<2x32xf32>
    %cst_170 = arith.constant 0.000000e+00 : f32
    %229 = vector.broadcast %cst_170 : f32 to vector<2x32xf32>
    %230 = arith.cmpf ogt, %228, %229 : vector<2x32xf32>
    %cst_171 = arith.constant 0.000000e+00 : f32
    %231 = vector.broadcast %cst_171 : f32 to vector<2x32xf32>
    %232 = arith.minimumf %228, %231 : vector<2x32xf32>
    %233 = math.exp %232 : vector<2x32xf32>
    %cst_172 = arith.constant 1.000000e+00 : f32
    %234 = vector.broadcast %cst_172 : f32 to vector<2x32xf32>
    %235 = arith.subf %233, %234 : vector<2x32xf32>
    %236 = arith.select %230, %228, %235 : vector<2x32xi1>, vector<2x32xf32>
    %c8_173 = arith.constant 8 : index
    %c0_174 = arith.constant 0 : index
    %c0_175 = arith.constant 0 : index
    %237 = vector.load %arg8[%c8_173, %c0_174, %c0_175] : memref<16x32x32xf32, #tpu.memory_space<vmem>>, vector<1x32x32xf32>
    %238 = vector.shape_cast %237 : vector<1x32x32xf32> to vector<32x32xf32>
    %cst_176 = arith.constant dense<0.000000e+00> : vector<2x32xf32>
    %239 = tpu.matmul %236, %238, %cst_176 {dimension_numbers = #tpu.dot_dimension_numbers<[1], [0], [0], [1], [0, 0, 1, 1], [], []>} : vector<2x32xf32>, vector<32x32xf32>, vector<2x32xf32> -> vector<2x32xf32>
    %240 = arith.addf %220, %239 : vector<2x32xf32>
    %241 = vector.extract_strided_slice %59 {offsets = [18, 0], sizes = [2, 48], strides = [1, 1]} : vector<32x48xf32> to vector<2x48xf32>
    %c9 = arith.constant 9 : index
    %c0_177 = arith.constant 0 : index
    %c0_178 = arith.constant 0 : index
    %242 = vector.load %arg6[%c9, %c0_177, %c0_178] : memref<16x48x32xf32, #tpu.memory_space<vmem>>, vector<1x48x32xf32>
    %243 = vector.shape_cast %242 : vector<1x48x32xf32> to vector<48x32xf32>
    %cst_179 = arith.constant dense<0.000000e+00> : vector<2x32xf32>
    %244 = tpu.matmul %241, %243, %cst_179 {dimension_numbers = #tpu.dot_dimension_numbers<[1], [0], [0], [1], [0, 0, 1, 1], [], []>} : vector<2x48xf32>, vector<48x32xf32>, vector<2x32xf32> -> vector<2x32xf32>
    %c9_180 = arith.constant 9 : index
    %c0_181 = arith.constant 0 : index
    %c0_182 = arith.constant 0 : index
    %245 = vector.load %arg7[%c9_180, %c0_181, %c0_182] : memref<16x1x1xf32, #tpu.memory_space<vmem>>, vector<1x1x1xf32>
    %246 = vector.shape_cast %245 : vector<1x1x1xf32> to vector<1x1xf32>
    %247 = vector.broadcast %246 : vector<1x1xf32> to vector<2x32xf32>
    %248 = arith.addf %244, %247 : vector<2x32xf32>
    %cst_183 = arith.constant 0.000000e+00 : f32
    %249 = vector.broadcast %cst_183 : f32 to vector<2x32xf32>
    %250 = arith.cmpf ogt, %248, %249 : vector<2x32xf32>
    %cst_184 = arith.constant 0.000000e+00 : f32
    %251 = vector.broadcast %cst_184 : f32 to vector<2x32xf32>
    %252 = arith.minimumf %248, %251 : vector<2x32xf32>
    %253 = math.exp %252 : vector<2x32xf32>
    %cst_185 = arith.constant 1.000000e+00 : f32
    %254 = vector.broadcast %cst_185 : f32 to vector<2x32xf32>
    %255 = arith.subf %253, %254 : vector<2x32xf32>
    %256 = arith.select %250, %248, %255 : vector<2x32xi1>, vector<2x32xf32>
    %c9_186 = arith.constant 9 : index
    %c0_187 = arith.constant 0 : index
    %c0_188 = arith.constant 0 : index
    %257 = vector.load %arg8[%c9_186, %c0_187, %c0_188] : memref<16x32x32xf32, #tpu.memory_space<vmem>>, vector<1x32x32xf32>
    %258 = vector.shape_cast %257 : vector<1x32x32xf32> to vector<32x32xf32>
    %cst_189 = arith.constant dense<0.000000e+00> : vector<2x32xf32>
    %259 = tpu.matmul %256, %258, %cst_189 {dimension_numbers = #tpu.dot_dimension_numbers<[1], [0], [0], [1], [0, 0, 1, 1], [], []>} : vector<2x32xf32>, vector<32x32xf32>, vector<2x32xf32> -> vector<2x32xf32>
    %260 = arith.addf %240, %259 : vector<2x32xf32>
    %261 = vector.extract_strided_slice %59 {offsets = [20, 0], sizes = [2, 48], strides = [1, 1]} : vector<32x48xf32> to vector<2x48xf32>
    %c10 = arith.constant 10 : index
    %c0_190 = arith.constant 0 : index
    %c0_191 = arith.constant 0 : index
    %262 = vector.load %arg6[%c10, %c0_190, %c0_191] : memref<16x48x32xf32, #tpu.memory_space<vmem>>, vector<1x48x32xf32>
    %263 = vector.shape_cast %262 : vector<1x48x32xf32> to vector<48x32xf32>
    %cst_192 = arith.constant dense<0.000000e+00> : vector<2x32xf32>
    %264 = tpu.matmul %261, %263, %cst_192 {dimension_numbers = #tpu.dot_dimension_numbers<[1], [0], [0], [1], [0, 0, 1, 1], [], []>} : vector<2x48xf32>, vector<48x32xf32>, vector<2x32xf32> -> vector<2x32xf32>
    %c10_193 = arith.constant 10 : index
    %c0_194 = arith.constant 0 : index
    %c0_195 = arith.constant 0 : index
    %265 = vector.load %arg7[%c10_193, %c0_194, %c0_195] : memref<16x1x1xf32, #tpu.memory_space<vmem>>, vector<1x1x1xf32>
    %266 = vector.shape_cast %265 : vector<1x1x1xf32> to vector<1x1xf32>
    %267 = vector.broadcast %266 : vector<1x1xf32> to vector<2x32xf32>
    %268 = arith.addf %264, %267 : vector<2x32xf32>
    %cst_196 = arith.constant 0.000000e+00 : f32
    %269 = vector.broadcast %cst_196 : f32 to vector<2x32xf32>
    %270 = arith.cmpf ogt, %268, %269 : vector<2x32xf32>
    %cst_197 = arith.constant 0.000000e+00 : f32
    %271 = vector.broadcast %cst_197 : f32 to vector<2x32xf32>
    %272 = arith.minimumf %268, %271 : vector<2x32xf32>
    %273 = math.exp %272 : vector<2x32xf32>
    %cst_198 = arith.constant 1.000000e+00 : f32
    %274 = vector.broadcast %cst_198 : f32 to vector<2x32xf32>
    %275 = arith.subf %273, %274 : vector<2x32xf32>
    %276 = arith.select %270, %268, %275 : vector<2x32xi1>, vector<2x32xf32>
    %c10_199 = arith.constant 10 : index
    %c0_200 = arith.constant 0 : index
    %c0_201 = arith.constant 0 : index
    %277 = vector.load %arg8[%c10_199, %c0_200, %c0_201] : memref<16x32x32xf32, #tpu.memory_space<vmem>>, vector<1x32x32xf32>
    %278 = vector.shape_cast %277 : vector<1x32x32xf32> to vector<32x32xf32>
    %cst_202 = arith.constant dense<0.000000e+00> : vector<2x32xf32>
    %279 = tpu.matmul %276, %278, %cst_202 {dimension_numbers = #tpu.dot_dimension_numbers<[1], [0], [0], [1], [0, 0, 1, 1], [], []>} : vector<2x32xf32>, vector<32x32xf32>, vector<2x32xf32> -> vector<2x32xf32>
    %280 = arith.addf %260, %279 : vector<2x32xf32>
    %281 = vector.extract_strided_slice %59 {offsets = [22, 0], sizes = [2, 48], strides = [1, 1]} : vector<32x48xf32> to vector<2x48xf32>
    %c11 = arith.constant 11 : index
    %c0_203 = arith.constant 0 : index
    %c0_204 = arith.constant 0 : index
    %282 = vector.load %arg6[%c11, %c0_203, %c0_204] : memref<16x48x32xf32, #tpu.memory_space<vmem>>, vector<1x48x32xf32>
    %283 = vector.shape_cast %282 : vector<1x48x32xf32> to vector<48x32xf32>
    %cst_205 = arith.constant dense<0.000000e+00> : vector<2x32xf32>
    %284 = tpu.matmul %281, %283, %cst_205 {dimension_numbers = #tpu.dot_dimension_numbers<[1], [0], [0], [1], [0, 0, 1, 1], [], []>} : vector<2x48xf32>, vector<48x32xf32>, vector<2x32xf32> -> vector<2x32xf32>
    %c11_206 = arith.constant 11 : index
    %c0_207 = arith.constant 0 : index
    %c0_208 = arith.constant 0 : index
    %285 = vector.load %arg7[%c11_206, %c0_207, %c0_208] : memref<16x1x1xf32, #tpu.memory_space<vmem>>, vector<1x1x1xf32>
    %286 = vector.shape_cast %285 : vector<1x1x1xf32> to vector<1x1xf32>
    %287 = vector.broadcast %286 : vector<1x1xf32> to vector<2x32xf32>
    %288 = arith.addf %284, %287 : vector<2x32xf32>
    %cst_209 = arith.constant 0.000000e+00 : f32
    %289 = vector.broadcast %cst_209 : f32 to vector<2x32xf32>
    %290 = arith.cmpf ogt, %288, %289 : vector<2x32xf32>
    %cst_210 = arith.constant 0.000000e+00 : f32
    %291 = vector.broadcast %cst_210 : f32 to vector<2x32xf32>
    %292 = arith.minimumf %288, %291 : vector<2x32xf32>
    %293 = math.exp %292 : vector<2x32xf32>
    %cst_211 = arith.constant 1.000000e+00 : f32
    %294 = vector.broadcast %cst_211 : f32 to vector<2x32xf32>
    %295 = arith.subf %293, %294 : vector<2x32xf32>
    %296 = arith.select %290, %288, %295 : vector<2x32xi1>, vector<2x32xf32>
    %c11_212 = arith.constant 11 : index
    %c0_213 = arith.constant 0 : index
    %c0_214 = arith.constant 0 : index
    %297 = vector.load %arg8[%c11_212, %c0_213, %c0_214] : memref<16x32x32xf32, #tpu.memory_space<vmem>>, vector<1x32x32xf32>
    %298 = vector.shape_cast %297 : vector<1x32x32xf32> to vector<32x32xf32>
    %cst_215 = arith.constant dense<0.000000e+00> : vector<2x32xf32>
    %299 = tpu.matmul %296, %298, %cst_215 {dimension_numbers = #tpu.dot_dimension_numbers<[1], [0], [0], [1], [0, 0, 1, 1], [], []>} : vector<2x32xf32>, vector<32x32xf32>, vector<2x32xf32> -> vector<2x32xf32>
    %300 = arith.addf %280, %299 : vector<2x32xf32>
    %301 = vector.extract_strided_slice %59 {offsets = [24, 0], sizes = [2, 48], strides = [1, 1]} : vector<32x48xf32> to vector<2x48xf32>
    %c12_216 = arith.constant 12 : index
    %c0_217 = arith.constant 0 : index
    %c0_218 = arith.constant 0 : index
    %302 = vector.load %arg6[%c12_216, %c0_217, %c0_218] : memref<16x48x32xf32, #tpu.memory_space<vmem>>, vector<1x48x32xf32>
    %303 = vector.shape_cast %302 : vector<1x48x32xf32> to vector<48x32xf32>
    %cst_219 = arith.constant dense<0.000000e+00> : vector<2x32xf32>
    %304 = tpu.matmul %301, %303, %cst_219 {dimension_numbers = #tpu.dot_dimension_numbers<[1], [0], [0], [1], [0, 0, 1, 1], [], []>} : vector<2x48xf32>, vector<48x32xf32>, vector<2x32xf32> -> vector<2x32xf32>
    %c12_220 = arith.constant 12 : index
    %c0_221 = arith.constant 0 : index
    %c0_222 = arith.constant 0 : index
    %305 = vector.load %arg7[%c12_220, %c0_221, %c0_222] : memref<16x1x1xf32, #tpu.memory_space<vmem>>, vector<1x1x1xf32>
    %306 = vector.shape_cast %305 : vector<1x1x1xf32> to vector<1x1xf32>
    %307 = vector.broadcast %306 : vector<1x1xf32> to vector<2x32xf32>
    %308 = arith.addf %304, %307 : vector<2x32xf32>
    %cst_223 = arith.constant 0.000000e+00 : f32
    %309 = vector.broadcast %cst_223 : f32 to vector<2x32xf32>
    %310 = arith.cmpf ogt, %308, %309 : vector<2x32xf32>
    %cst_224 = arith.constant 0.000000e+00 : f32
    %311 = vector.broadcast %cst_224 : f32 to vector<2x32xf32>
    %312 = arith.minimumf %308, %311 : vector<2x32xf32>
    %313 = math.exp %312 : vector<2x32xf32>
    %cst_225 = arith.constant 1.000000e+00 : f32
    %314 = vector.broadcast %cst_225 : f32 to vector<2x32xf32>
    %315 = arith.subf %313, %314 : vector<2x32xf32>
    %316 = arith.select %310, %308, %315 : vector<2x32xi1>, vector<2x32xf32>
    %c12_226 = arith.constant 12 : index
    %c0_227 = arith.constant 0 : index
    %c0_228 = arith.constant 0 : index
    %317 = vector.load %arg8[%c12_226, %c0_227, %c0_228] : memref<16x32x32xf32, #tpu.memory_space<vmem>>, vector<1x32x32xf32>
    %318 = vector.shape_cast %317 : vector<1x32x32xf32> to vector<32x32xf32>
    %cst_229 = arith.constant dense<0.000000e+00> : vector<2x32xf32>
    %319 = tpu.matmul %316, %318, %cst_229 {dimension_numbers = #tpu.dot_dimension_numbers<[1], [0], [0], [1], [0, 0, 1, 1], [], []>} : vector<2x32xf32>, vector<32x32xf32>, vector<2x32xf32> -> vector<2x32xf32>
    %320 = arith.addf %300, %319 : vector<2x32xf32>
    %321 = vector.extract_strided_slice %59 {offsets = [26, 0], sizes = [2, 48], strides = [1, 1]} : vector<32x48xf32> to vector<2x48xf32>
    %c13 = arith.constant 13 : index
    %c0_230 = arith.constant 0 : index
    %c0_231 = arith.constant 0 : index
    %322 = vector.load %arg6[%c13, %c0_230, %c0_231] : memref<16x48x32xf32, #tpu.memory_space<vmem>>, vector<1x48x32xf32>
    %323 = vector.shape_cast %322 : vector<1x48x32xf32> to vector<48x32xf32>
    %cst_232 = arith.constant dense<0.000000e+00> : vector<2x32xf32>
    %324 = tpu.matmul %321, %323, %cst_232 {dimension_numbers = #tpu.dot_dimension_numbers<[1], [0], [0], [1], [0, 0, 1, 1], [], []>} : vector<2x48xf32>, vector<48x32xf32>, vector<2x32xf32> -> vector<2x32xf32>
    %c13_233 = arith.constant 13 : index
    %c0_234 = arith.constant 0 : index
    %c0_235 = arith.constant 0 : index
    %325 = vector.load %arg7[%c13_233, %c0_234, %c0_235] : memref<16x1x1xf32, #tpu.memory_space<vmem>>, vector<1x1x1xf32>
    %326 = vector.shape_cast %325 : vector<1x1x1xf32> to vector<1x1xf32>
    %327 = vector.broadcast %326 : vector<1x1xf32> to vector<2x32xf32>
    %328 = arith.addf %324, %327 : vector<2x32xf32>
    %cst_236 = arith.constant 0.000000e+00 : f32
    %329 = vector.broadcast %cst_236 : f32 to vector<2x32xf32>
    %330 = arith.cmpf ogt, %328, %329 : vector<2x32xf32>
    %cst_237 = arith.constant 0.000000e+00 : f32
    %331 = vector.broadcast %cst_237 : f32 to vector<2x32xf32>
    %332 = arith.minimumf %328, %331 : vector<2x32xf32>
    %333 = math.exp %332 : vector<2x32xf32>
    %cst_238 = arith.constant 1.000000e+00 : f32
    %334 = vector.broadcast %cst_238 : f32 to vector<2x32xf32>
    %335 = arith.subf %333, %334 : vector<2x32xf32>
    %336 = arith.select %330, %328, %335 : vector<2x32xi1>, vector<2x32xf32>
    %c13_239 = arith.constant 13 : index
    %c0_240 = arith.constant 0 : index
    %c0_241 = arith.constant 0 : index
    %337 = vector.load %arg8[%c13_239, %c0_240, %c0_241] : memref<16x32x32xf32, #tpu.memory_space<vmem>>, vector<1x32x32xf32>
    %338 = vector.shape_cast %337 : vector<1x32x32xf32> to vector<32x32xf32>
    %cst_242 = arith.constant dense<0.000000e+00> : vector<2x32xf32>
    %339 = tpu.matmul %336, %338, %cst_242 {dimension_numbers = #tpu.dot_dimension_numbers<[1], [0], [0], [1], [0, 0, 1, 1], [], []>} : vector<2x32xf32>, vector<32x32xf32>, vector<2x32xf32> -> vector<2x32xf32>
    %340 = arith.addf %320, %339 : vector<2x32xf32>
    %341 = vector.extract_strided_slice %59 {offsets = [28, 0], sizes = [2, 48], strides = [1, 1]} : vector<32x48xf32> to vector<2x48xf32>
    %c14 = arith.constant 14 : index
    %c0_243 = arith.constant 0 : index
    %c0_244 = arith.constant 0 : index
    %342 = vector.load %arg6[%c14, %c0_243, %c0_244] : memref<16x48x32xf32, #tpu.memory_space<vmem>>, vector<1x48x32xf32>
    %343 = vector.shape_cast %342 : vector<1x48x32xf32> to vector<48x32xf32>
    %cst_245 = arith.constant dense<0.000000e+00> : vector<2x32xf32>
    %344 = tpu.matmul %341, %343, %cst_245 {dimension_numbers = #tpu.dot_dimension_numbers<[1], [0], [0], [1], [0, 0, 1, 1], [], []>} : vector<2x48xf32>, vector<48x32xf32>, vector<2x32xf32> -> vector<2x32xf32>
    %c14_246 = arith.constant 14 : index
    %c0_247 = arith.constant 0 : index
    %c0_248 = arith.constant 0 : index
    %345 = vector.load %arg7[%c14_246, %c0_247, %c0_248] : memref<16x1x1xf32, #tpu.memory_space<vmem>>, vector<1x1x1xf32>
    %346 = vector.shape_cast %345 : vector<1x1x1xf32> to vector<1x1xf32>
    %347 = vector.broadcast %346 : vector<1x1xf32> to vector<2x32xf32>
    %348 = arith.addf %344, %347 : vector<2x32xf32>
    %cst_249 = arith.constant 0.000000e+00 : f32
    %349 = vector.broadcast %cst_249 : f32 to vector<2x32xf32>
    %350 = arith.cmpf ogt, %348, %349 : vector<2x32xf32>
    %cst_250 = arith.constant 0.000000e+00 : f32
    %351 = vector.broadcast %cst_250 : f32 to vector<2x32xf32>
    %352 = arith.minimumf %348, %351 : vector<2x32xf32>
    %353 = math.exp %352 : vector<2x32xf32>
    %cst_251 = arith.constant 1.000000e+00 : f32
    %354 = vector.broadcast %cst_251 : f32 to vector<2x32xf32>
    %355 = arith.subf %353, %354 : vector<2x32xf32>
    %356 = arith.select %350, %348, %355 : vector<2x32xi1>, vector<2x32xf32>
    %c14_252 = arith.constant 14 : index
    %c0_253 = arith.constant 0 : index
    %c0_254 = arith.constant 0 : index
    %357 = vector.load %arg8[%c14_252, %c0_253, %c0_254] : memref<16x32x32xf32, #tpu.memory_space<vmem>>, vector<1x32x32xf32>
    %358 = vector.shape_cast %357 : vector<1x32x32xf32> to vector<32x32xf32>
    %cst_255 = arith.constant dense<0.000000e+00> : vector<2x32xf32>
    %359 = tpu.matmul %356, %358, %cst_255 {dimension_numbers = #tpu.dot_dimension_numbers<[1], [0], [0], [1], [0, 0, 1, 1], [], []>} : vector<2x32xf32>, vector<32x32xf32>, vector<2x32xf32> -> vector<2x32xf32>
    %360 = arith.addf %340, %359 : vector<2x32xf32>
    %361 = vector.extract_strided_slice %59 {offsets = [30, 0], sizes = [2, 48], strides = [1, 1]} : vector<32x48xf32> to vector<2x48xf32>
    %c15 = arith.constant 15 : index
    %c0_256 = arith.constant 0 : index
    %c0_257 = arith.constant 0 : index
    %362 = vector.load %arg6[%c15, %c0_256, %c0_257] : memref<16x48x32xf32, #tpu.memory_space<vmem>>, vector<1x48x32xf32>
    %363 = vector.shape_cast %362 : vector<1x48x32xf32> to vector<48x32xf32>
    %cst_258 = arith.constant dense<0.000000e+00> : vector<2x32xf32>
    %364 = tpu.matmul %361, %363, %cst_258 {dimension_numbers = #tpu.dot_dimension_numbers<[1], [0], [0], [1], [0, 0, 1, 1], [], []>} : vector<2x48xf32>, vector<48x32xf32>, vector<2x32xf32> -> vector<2x32xf32>
    %c15_259 = arith.constant 15 : index
    %c0_260 = arith.constant 0 : index
    %c0_261 = arith.constant 0 : index
    %365 = vector.load %arg7[%c15_259, %c0_260, %c0_261] : memref<16x1x1xf32, #tpu.memory_space<vmem>>, vector<1x1x1xf32>
    %366 = vector.shape_cast %365 : vector<1x1x1xf32> to vector<1x1xf32>
    %367 = vector.broadcast %366 : vector<1x1xf32> to vector<2x32xf32>
    %368 = arith.addf %364, %367 : vector<2x32xf32>
    %cst_262 = arith.constant 0.000000e+00 : f32
    %369 = vector.broadcast %cst_262 : f32 to vector<2x32xf32>
    %370 = arith.cmpf ogt, %368, %369 : vector<2x32xf32>
    %cst_263 = arith.constant 0.000000e+00 : f32
    %371 = vector.broadcast %cst_263 : f32 to vector<2x32xf32>
    %372 = arith.minimumf %368, %371 : vector<2x32xf32>
    %373 = math.exp %372 : vector<2x32xf32>
    %cst_264 = arith.constant 1.000000e+00 : f32
    %374 = vector.broadcast %cst_264 : f32 to vector<2x32xf32>
    %375 = arith.subf %373, %374 : vector<2x32xf32>
    %376 = arith.select %370, %368, %375 : vector<2x32xi1>, vector<2x32xf32>
    %c15_265 = arith.constant 15 : index
    %c0_266 = arith.constant 0 : index
    %c0_267 = arith.constant 0 : index
    %377 = vector.load %arg8[%c15_265, %c0_266, %c0_267] : memref<16x32x32xf32, #tpu.memory_space<vmem>>, vector<1x32x32xf32>
    %378 = vector.shape_cast %377 : vector<1x32x32xf32> to vector<32x32xf32>
    %cst_268 = arith.constant dense<0.000000e+00> : vector<2x32xf32>
    %379 = tpu.matmul %376, %378, %cst_268 {dimension_numbers = #tpu.dot_dimension_numbers<[1], [0], [0], [1], [0, 0, 1, 1], [], []>} : vector<2x32xf32>, vector<32x32xf32>, vector<2x32xf32> -> vector<2x32xf32>
    %380 = arith.addf %360, %379 : vector<2x32xf32>
    %c0_269 = arith.constant 0 : index
    %c0_270 = arith.constant 0 : index
    %381 = vector.load %arg9[%c0_269, %c0_270] : memref<1x32xf32, #tpu.memory_space<vmem>>, vector<1x32xf32>
    %382 = vector.broadcast %381 : vector<1x32xf32> to vector<2x32xf32>
    %383 = arith.addf %380, %382 : vector<2x32xf32>
    %c0_271 = arith.constant 0 : index
    %c0_272 = arith.constant 0 : index
    %384 = vector.load %arg10[%c0_271, %c0_272] : memref<2x32xf32, #tpu.memory_space<vmem>>, vector<2x32xf32>
    tpu.vector_store %arg10[%c0_271, %c0_272], %383 {strides = array<i32>} : memref<2x32xf32, #tpu.memory_space<vmem>>, vector<2x32xf32>,
    return
  }
  func.func @transform_0(%arg0: i32) -> (i32, i32) {
    %c0_i32 = arith.constant 0 : i32
    %c0_i32_0 = arith.constant 0 : i32
    return %arg0, %c0_i32 : i32, i32
  }
  func.func @transform_1(%arg0: i32) -> (i32, i32) {
    %c0_i32 = arith.constant 0 : i32
    %c0_i32_0 = arith.constant 0 : i32
    %c0_i32_1 = arith.constant 0 : i32
    return %c0_i32, %c0_i32_0 : i32, i32
  }
  func.func @transform_2(%arg0: i32) -> (i32, i32, i32) {
    %c0_i32 = arith.constant 0 : i32
    %c0_i32_0 = arith.constant 0 : i32
    %c0_i32_1 = arith.constant 0 : i32
    %c0_i32_2 = arith.constant 0 : i32
    return %c0_i32, %c0_i32_0, %c0_i32_1 : i32, i32, i32
  }
  func.func @transform_3(%arg0: i32) -> (i32, i32) {
    %c0_i32 = arith.constant 0 : i32
    %c0_i32_0 = arith.constant 0 : i32
    %c0_i32_1 = arith.constant 0 : i32
    return %c0_i32, %c0_i32_0 : i32, i32
  }
  func.func @transform_4(%arg0: i32) -> (i32, i32) {
    %c0_i32 = arith.constant 0 : i32
    %c0_i32_0 = arith.constant 0 : i32
    %c0_i32_1 = arith.constant 0 : i32
    return %c0_i32, %c0_i32_0 : i32, i32
  }
  func.func @transform_5(%arg0: i32) -> (i32, i32, i32) {
    %c0_i32 = arith.constant 0 : i32
    %c0_i32_0 = arith.constant 0 : i32
    %c0_i32_1 = arith.constant 0 : i32
    %c0_i32_2 = arith.constant 0 : i32
    return %c0_i32, %c0_i32_0, %c0_i32_1 : i32, i32, i32
  }
  func.func @transform_6(%arg0: i32) -> (i32, i32, i32) {
    %c0_i32 = arith.constant 0 : i32
    %c0_i32_0 = arith.constant 0 : i32
    %c0_i32_1 = arith.constant 0 : i32
    %c0_i32_2 = arith.constant 0 : i32
    return %c0_i32, %c0_i32_0, %c0_i32_1 : i32, i32, i32
  }
  func.func @transform_7(%arg0: i32) -> (i32, i32, i32) {
    %c0_i32 = arith.constant 0 : i32
    %c0_i32_0 = arith.constant 0 : i32
    %c0_i32_1 = arith.constant 0 : i32
    %c0_i32_2 = arith.constant 0 : i32
    return %c0_i32, %c0_i32_0, %c0_i32_1 : i32, i32, i32
  }
  func.func @transform_8(%arg0: i32) -> (i32, i32) {
    %c0_i32 = arith.constant 0 : i32
    %c0_i32_0 = arith.constant 0 : i32
    %c0_i32_1 = arith.constant 0 : i32
    return %c0_i32, %c0_i32_0 : i32, i32
  }
  func.func @transform_9(%arg0: i32) -> (i32, i32) {
    %c0_i32 = arith.constant 0 : i32
    %c0_i32_0 = arith.constant 0 : i32
    return %arg0, %c0_i32 : i32, i32
  }
}

</mosaic_0001>

<llo_original>
// kernel: tpu_custom_call.1
$region0: #{tpu_custom_call.1}
  #allocation0 [shape = 'u32[]', space=smem, size = 0x4, offset = 0x4, fixed_abs, tag = 'smem constant byte address 0x4 - core index']
  #allocation1 [shape = 'u32[72,128]{1,0:T(1,128)}', space=vmem, size = 0x9000, scoped, tag = 'internal scratch']
  #allocation2 [shape = 'f32[32,128]{1,0:T(8,128)}', space=vmem, size = 0x4000, scoped, tag = 'scratch operand']
  %s0 = inlined_call_operand.vmem [shape: f32[8,192], index: 0, kind: input, shape index: {}]
  %s1 = inlined_call_operand.vmem [shape: f32[32,8], index: 1, kind: input, shape index: {}]
  %s2 = inlined_call_operand.hbm [shape: f32[8,192,128], index: 2, kind: input, shape index: {}]
  %s3 = inlined_call_operand.vmem [shape: f32[32,2], index: 3, kind: input, shape index: {}]
  %s4 = inlined_call_operand.vmem [shape: f32[128,48], index: 4, kind: input, shape index: {}]
  %s5 = inlined_call_operand.vmem [shape: f32[16,48,32], index: 5, kind: input, shape index: {}]
  %s6 = inlined_call_operand.vmem [shape: f32[16,1,1], index: 6, kind: input, shape index: {}]
  %s7 = inlined_call_operand.vmem [shape: f32[16,32,32], index: 7, kind: input, shape index: {}]
  %s8 = inlined_call_operand.vmem [shape: f32[1,32], index: 8, kind: input, shape index: {}]
  %s9 = inlined_call_operand.hbm [shape: f32[2,32], index: 9, kind: output, shape index: {}]
  %s10 = sld [smem:[#allocation0]]
  $region50: #{tpu_custom_call.1} parent=0
    _
  %s12 = ssub.s32 1, %s10
  %s13 = scalar_select 0, %s12, %s10
  $region1: #{tpu_custom_call.1} parent=0
    #allocation3 [shape = 'u8[786432]{0}', space=vmem, size = 0xc0000, scoped, tag = 'input window, operand 2, single buffered']
    #allocation4 [shape = 's32[1]{0}', space=sflag, size = 0x4, scoped, tag = 'scoped memory for tpu_custom_call.1']
    #allocation5 [shape = 's32[1]{0}', space=sflag, size = 0x4, scoped, tag = 'scoped memory for tpu_custom_call.1']
    #allocation6 [shape = 'u8[1024]{0}', space=vmem, size = 0x400, scoped, tag = 'output window, operand 0, single buffered']
    %14 = vsyncpa [#allocation4], 0
    %15 = vsyncpa [#allocation5], 0
    // Predicated region
    $region2: #{tpu_custom_call.1} parent=1 // pred_check
      _
    $region3: #{tpu_custom_call.1} parent=1 // pred_check_branch
      %17 = sbr.rel (0) target = $region5
    $region4: #{tpu_custom_call.1} parent=1 // pred_region
      _
    $region5: #{tpu_custom_call.1} parent=1 // pred_fallthru
      _
    // Predicated region
    $region6: #{tpu_custom_call.1} parent=1 // pred_check
      _
    $region7: #{tpu_custom_call.1} parent=1 // pred_check_branch
      %19 = sbr.rel (0) target = $region9
    $region8: #{tpu_custom_call.1} parent=1 // pred_region
      _
    $region9: #{tpu_custom_call.1} parent=1 // pred_fallthru
      _
    // Predicated region
    $region10: #{tpu_custom_call.1} parent=1 // pred_check
      _
    $region11: #{tpu_custom_call.1} parent=1 // pred_check_branch
      %21 = sbr.rel (0) target = $region13
    $region12: #{tpu_custom_call.1} parent=1 // pred_region
      %23 = vsyncadd [#allocation4], 0
      %s24 = sshll.u32 %s2, 4
      %s25 = int_to_ptr.hbm [resolvable:$true] %s24
      %s26 = sshll.u32 [#allocation3], 4
      %s27 = int_to_ptr.vmem [resolvable:$true] %s26
      %32 = dma.hbm_to_vmem [thread:$0]  %s25, 24576, %s27, [#allocation4], 128, 128, 8
    $region13: #{tpu_custom_call.1} parent=1 // pred_fallthru
      _
    // Predicated region
    $region14: #{tpu_custom_call.1} parent=1 // pred_check
      _
    $region15: #{tpu_custom_call.1} parent=1 // pred_check_branch
      %34 = sbr.rel (0) target = $region17
    $region16: #{tpu_custom_call.1} parent=1 // pred_region
      _
    $region17: #{tpu_custom_call.1} parent=1 // pred_fallthru
      _
    // Predicated region
    $region18: #{tpu_custom_call.1} parent=1 // pred_check
      _
    $region19: #{tpu_custom_call.1} parent=1 // pred_check_branch
      %36 = sbr.rel (0) target = $region21
    $region20: #{tpu_custom_call.1} parent=1 // pred_region
      _
    $region21: #{tpu_custom_call.1} parent=1 // pred_fallthru
      _
    // Predicated region
    $region22: #{tpu_custom_call.1} parent=1 // pred_check
      _
    $region23: #{tpu_custom_call.1} parent=1 // pred_check_branch
      %38 = sbr.rel (0) target = $region25
    $region24: #{tpu_custom_call.1} parent=1 // pred_region
      _
    $region25: #{tpu_custom_call.1} parent=1 // pred_fallthru
      _
    // Predicated region
    $region26: #{tpu_custom_call.1} parent=1 // pred_check
      _
    $region27: #{tpu_custom_call.1} parent=1 // pred_check_branch
      %40 = sbr.rel (0) target = $region29
    $region28: #{tpu_custom_call.1} parent=1 // pred_region
      _
    $region29: #{tpu_custom_call.1} parent=1 // pred_fallthru
      _
    // Predicated region
    $region30: #{tpu_custom_call.1} parent=1 // pred_check
      _
    $region31: #{tpu_custom_call.1} parent=1 // pred_check_branch
      %42 = sbr.rel (0) target = $region33
    $region32: #{tpu_custom_call.1} parent=1 // pred_region
      _
    $region33: #{tpu_custom_call.1} parent=1 // pred_fallthru
      _
    // Predicated region
    $region34: #{tpu_custom_call.1} parent=1 // pred_check
      _
    $region35: #{tpu_custom_call.1} parent=1 // pred_check_branch
      %44 = sbr.rel (0) target = $region37
    $region36: #{tpu_custom_call.1} parent=1 // pred_region
      _
    $region37: #{tpu_custom_call.1} parent=1 // pred_fallthru
      _
    // Predicated region
    $region38: #{tpu_custom_call.1} parent=1 // pred_check
      _
    $region39: #{tpu_custom_call.1} parent=1 // pred_check_branch
      %46 = sbr.rel (0) target = $region41
    $region40: #{tpu_custom_call.1} parent=1 // pred_region
      %48 = dma.done [#allocation4], 24576
    $region41: #{tpu_custom_call.1} parent=1 // pred_fallthru
      _
    %v49 = vld [vmem:[%s0] sm:$0xff]
    %v50 = vld [vmem:[%s0 + $0x8] sm:$0xff]
    %v51 = vld [vmem:[%s1] sm:$0xff]
    %v52 = vld [vmem:[%s1 + $0x8] sm:$0xff]
    %v53 = vld [vmem:[%s1 + $0x10] sm:$0xff]
    %v54 = vld [vmem:[%s1 + $0x18] sm:$0xff]
    %vm55 = vcmask 64512
    %v57 = vsel %vm55, %v51, 0
    %v60 = vsel %vm55, %v52, 0
    %v63 = vsel %vm55, %v53, 0
    %v66 = vsel %vm55, %v54, 0
    %68 = vmatpush.msra.mxu0 0.0
    %69 = vmatpush.msra.mxu0 0.0
    %70 = vmatpush.msra.mxu0 0.0
    %71 = vmatpush.msra.mxu0 0.0
    %72 = vmatpush.msra.mxu0 0.0
    %73 = vmatpush.msra.mxu0 0.0
    %74 = vmatpush.msra.mxu0 0.0
    %75 = vmatpush.msra.mxu0 0.0
    %76 = vmatpush.msra.mxu0 0.0
    %77 = vmatpush.msra.mxu0 0.0
    %78 = vmatpush.msra.mxu0 0.0
    %79 = vmatpush.msra.mxu0 0.0
    %80 = vmatpush.msra.mxu0 0.0
    %81 = vmatpush.msra.mxu0 0.0
    %82 = vmatpush.msra.mxu0 0.0
    %83 = vmatpush.msra.mxu0 %v49
    %84 = vmatmul.f32.gmra.mxu0 %v57
    %v85 = vpop.f32.mrf.mxu0
    %v86 = vadd.f32 0.0, %v85
    %87 = vmatmul.f32.gmra.mxu0 %v60
    %v88 = vpop.f32.mrf.mxu0
    %v89 = vadd.f32 0.0, %v88
    %90 = vmatmul.f32.gmra.mxu0 %v63
    %v91 = vpop.f32.mrf.mxu0
    %v92 = vadd.f32 0.0, %v91
    %93 = vmatmul.f32.gmra.mxu0 %v66
    %v94 = vpop.f32.mrf.mxu0
    %v95 = vadd.f32 0.0, %v94
    %96 = vdwg.mxu0
    %97 = vmatpush.msra.mxu0 0.0
    %98 = vmatpush.msra.mxu0 0.0
    %99 = vmatpush.msra.mxu0 0.0
    %100 = vmatpush.msra.mxu0 0.0
    %101 = vmatpush.msra.mxu0 0.0
    %102 = vmatpush.msra.mxu0 0.0
    %103 = vmatpush.msra.mxu0 0.0
    %104 = vmatpush.msra.mxu0 0.0
    %105 = vmatpush.msra.mxu0 0.0
    %106 = vmatpush.msra.mxu0 0.0
    %107 = vmatpush.msra.mxu0 0.0
    %108 = vmatpush.msra.mxu0 0.0
    %109 = vmatpush.msra.mxu0 0.0
    %110 = vmatpush.msra.mxu0 0.0
    %111 = vmatpush.msra.mxu0 0.0
    %112 = vmatpush.msra.mxu0 %v50
    %113 = vmatmul.f32.gmra.mxu0 %v57
    %v114 = vpop.f32.mrf.mxu0
    %v115 = vadd.f32 0.0, %v114
    %116 = vmatmul.f32.gmra.mxu0 %v60
    %v117 = vpop.f32.mrf.mxu0
    %v118 = vadd.f32 0.0, %v117
    %119 = vmatmul.f32.gmra.mxu0 %v63
    %v120 = vpop.f32.mrf.mxu0
    %v121 = vadd.f32 0.0, %v120
    %122 = vmatmul.f32.gmra.mxu0 %v66
    %v123 = vpop.f32.mrf.mxu0
    %v124 = vadd.f32 0.0, %v123
    %125 = vdwg.mxu0
    %v126 = vld [vmem:[#allocation3] sm:$0xff]
    %v127 = vld [vmem:[#allocation3 + $0x8] sm:$0xff]
    %v128 = vld [vmem:[#allocation3 + $0x10] sm:$0xff]
    %v129 = vld [vmem:[#allocation3 + $0x18] sm:$0xff]
    %v130 = vld [vmem:[#allocation3 + $0x20] sm:$0xff]
    %v131 = vld [vmem:[#allocation3 + $0x28] sm:$0xff]
    %v132 = vld [vmem:[#allocation3 + $0x30] sm:$0xff]
    %v133 = vld [vmem:[#allocation3 + $0x38] sm:$0xff]
    %v134 = vld [vmem:[#allocation3 + $0x40] sm:$0xff]
    %v135 = vld [vmem:[#allocation3 + $0x48] sm:$0xff]
    %v136 = vld [vmem:[#allocation3 + $0x50] sm:$0xff]
    %v137 = vld [vmem:[#allocation3 + $0x58] sm:$0xff]
    %v138 = vld [vmem:[#allocation3 + $0x60] sm:$0xff]
    %v139 = vld [vmem:[#allocation3 + $0x68] sm:$0xff]
    %v140 = vld [vmem:[#allocation3 + $0x70] sm:$0xff]
    %v141 = vld [vmem:[#allocation3 + $0x78] sm:$0xff]
    %v142 = vld [vmem:[#allocation3 + $0x80] sm:$0xff]
    %v143 = vld [vmem:[#allocation3 + $0x88] sm:$0xff]
    %v144 = vld [vmem:[#allocation3 + $0x90] sm:$0xff]
    %v145 = vld [vmem:[#allocation3 + $0x98] sm:$0xff]
    %v146 = vld [vmem:[#allocation3 + $0xa0] sm:$0xff]
    %v147 = vld [vmem:[#allocation3 + $0xa8] sm:$0xff]
    %v148 = vld [vmem:[#allocation3 + $0xb0] sm:$0xff]
    %v149 = vld [vmem:[#allocation3 + $0xb8] sm:$0xff]
    %vm150 = vcmask 523264
    %v152 = vsel %vm150, %v115, 0
    %154 = vmatpush.msra.mxu0 %v141
    %155 = vmatpush.msra.mxu0 %v140
    %156 = vmatpush.msra.mxu0 %v139
    %157 = vmatpush.msra.mxu0 %v138
    %158 = vmatpush.msra.mxu0 %v137
    %159 = vmatpush.msra.mxu0 %v136
    %160 = vmatpush.msra.mxu0 %v135
    %161 = vmatpush.msra.mxu0 %v134
    %162 = vmatpush.msra.mxu0 %v133
    %163 = vmatpush.msra.mxu0 %v132
    %164 = vmatpush.msra.mxu0 %v131
    %165 = vmatpush.msra.mxu0 %v130
    %166 = vmatpush.msra.mxu0 %v129
    %167 = vmatpush.msra.mxu0 %v128
    %168 = vmatpush.msra.mxu0 %v127
    %169 = vmatpush.msra.mxu0 %v126
    %170 = vmatmul.f32.gmra.mxu0 %v86
    %v171 = vpop.f32.mrf.mxu0
    %v172 = vadd.f32 0.0, %v171
    %173 = vdwg.mxu0
    %174 = vmatpush.msra.mxu0 0.0
    %175 = vmatpush.msra.mxu0 0.0
    %176 = vmatpush.msra.mxu0 0.0
    %177 = vmatpush.msra.mxu0 0.0
    %178 = vmatpush.msra.mxu0 0.0
    %179 = vmatpush.msra.mxu0 0.0
    %180 = vmatpush.msra.mxu0 0.0
    %181 = vmatpush.msra.mxu0 0.0
    %182 = vmatpush.msra.mxu0 %v149
    %183 = vmatpush.msra.mxu0 %v148
    %184 = vmatpush.msra.mxu0 %v147
    %185 = vmatpush.msra.mxu0 %v146
    %186 = vmatpush.msra.mxu0 %v145
    %187 = vmatpush.msra.mxu0 %v144
    %188 = vmatpush.msra.mxu0 %v143
    %189 = vmatpush.msra.mxu0 %v142
    %190 = vmatmul.f32.gmra.mxu0 %v152
    %v191 = vpop.f32.mrf.mxu0
    %v192 = vadd.f32 %v172, %v191
    %193 = vdwg.mxu0
    %194 = vst [vmem:[#allocation2] sm:$0xf] %v192
    %s195 = scalar_lea.vmem [#allocation3], 192
    %v196 = vld [vmem:[%s195] sm:$0xff]
    %v197 = vld [vmem:[%s195 + $0x8] sm:$0xff]
    %v198 = vld [vmem:[%s195 + $0x10] sm:$0xff]
    %v199 = vld [vmem:[%s195 + $0x18] sm:$0xff]
    %v200 = vld [vmem:[%s195 + $0x20] sm:$0xff]
    %v201 = vld [vmem:[%s195 + $0x28] sm:$0xff]
    %v202 = vld [vmem:[%s195 + $0x30] sm:$0xff]
    %v203 = vld [vmem:[%s195 + $0x38] sm:$0xff]
    %v204 = vld [vmem:[%s195 + $0x40] sm:$0xff]
    %v205 = vld [vmem:[%s195 + $0x48] sm:$0xff]
    %v206 = vld [vmem:[%s195 + $0x50] sm:$0xff]
    %v207 = vld [vmem:[%s195 + $0x58] sm:$0xff]
    %v208 = vld [vmem:[%s195 + $0x60] sm:$0xff]
    %v209 = vld [vmem:[%s195 + $0x68] sm:$0xff]
    %v210 = vld [vmem:[%s195 + $0x70] sm:$0xff]
    %v211 = vld [vmem:[%s195 + $0x78] sm:$0xff]
    %v212 = vld [vmem:[%s195 + $0x80] sm:$0xff]
    %v213 = vld [vmem:[%s195 + $0x88] sm:$0xff]
    %v214 = vld [vmem:[%s195 + $0x90] sm:$0xff]
    %v215 = vld [vmem:[%s195 + $0x98] sm:$0xff]
    %v216 = vld [vmem:[%s195 + $0xa0] sm:$0xff]
    %v217 = vld [vmem:[%s195 + $0xa8] sm:$0xff]
    %v218 = vld [vmem:[%s195 + $0xb0] sm:$0xff]
    %v219 = vld [vmem:[%s195 + $0xb8] sm:$0xff]
    %v221 = vrot.slane %v86, 4
    %v222 = vrot.slane %v115, 4
    %v224 = vsel %vm150, %v222, 0
    %226 = vmatpush.msra.mxu0 %v211
    %227 = vmatpush.msra.mxu0 %v210
    %228 = vmatpush.msra.mxu0 %v209
    %229 = vmatpush.msra.mxu0 %v208
    %230 = vmatpush.msra.mxu0 %v207
    %231 = vmatpush.msra.mxu0 %v206
    %232 = vmatpush.msra.mxu0 %v205
    %233 = vmatpush.msra.mxu0 %v204
    %234 = vmatpush.msra.mxu0 %v203
    %235 = vmatpush.msra.mxu0 %v202
    %236 = vmatpush.msra.mxu0 %v201
    %237 = vmatpush.msra.mxu0 %v200
    %238 = vmatpush.msra.mxu0 %v199
    %239 = vmatpush.msra.mxu0 %v198
    %240 = vmatpush.msra.mxu0 %v197
    %241 = vmatpush.msra.mxu0 %v196
    %242 = vmatmul.f32.gmra.mxu0 %v221
    %v243 = vpop.f32.mrf.mxu0
    %v244 = vadd.f32 0.0, %v243
    %245 = vdwg.mxu0
    %246 = vmatpush.msra.mxu0 0.0
    %247 = vmatpush.msra.mxu0 0.0
    %248 = vmatpush.msra.mxu0 0.0
    %249 = vmatpush.msra.mxu0 0.0
    %250 = vmatpush.msra.mxu0 0.0
    %251 = vmatpush.msra.mxu0 0.0
    %252 = vmatpush.msra.mxu0 0.0
    %253 = vmatpush.msra.mxu0 0.0
    %254 = vmatpush.msra.mxu0 %v219
    %255 = vmatpush.msra.mxu0 %v218
    %256 = vmatpush.msra.mxu0 %v217
    %257 = vmatpush.msra.mxu0 %v216
    %258 = vmatpush.msra.mxu0 %v215
    %259 = vmatpush.msra.mxu0 %v214
    %260 = vmatpush.msra.mxu0 %v213
    %261 = vmatpush.msra.mxu0 %v212
    %262 = vmatmul.f32.gmra.mxu0 %v224
    %v263 = vpop.f32.mrf.mxu0
    %v264 = vadd.f32 %v244, %v263
    %265 = vdwg.mxu0
    %266 = vst [vmem:[#allocation2 + $0x4] sm:$0xf] %v264
    %s267 = scalar_lea.vmem [#allocation3], 384
    %v268 = vld [vmem:[%s267] sm:$0xff]
    %v269 = vld [vmem:[%s267 + $0x8] sm:$0xff]
    %v270 = vld [vmem:[%s267 + $0x10] sm:$0xff]
    %v271 = vld [vmem:[%s267 + $0x18] sm:$0xff]
    %v272 = vld [vmem:[%s267 + $0x20] sm:$0xff]
    %v273 = vld [vmem:[%s267 + $0x28] sm:$0xff]
    %v274 = vld [vmem:[%s267 + $0x30] sm:$0xff]
    %v275 = vld [vmem:[%s267 + $0x38] sm:$0xff]
    %v276 = vld [vmem:[%s267 + $0x40] sm:$0xff]
    %v277 = vld [vmem:[%s267 + $0x48] sm:$0xff]
    %v278 = vld [vmem:[%s267 + $0x50] sm:$0xff]
    %v279 = vld [vmem:[%s267 + $0x58] sm:$0xff]
    %v280 = vld [vmem:[%s267 + $0x60] sm:$0xff]
    %v281 = vld [vmem:[%s267 + $0x68] sm:$0xff]
    %v282 = vld [vmem:[%s267 + $0x70] sm:$0xff]
    %v283 = vld [vmem:[%s267 + $0x78] sm:$0xff]
    %v284 = vld [vmem:[%s267 + $0x80] sm:$0xff]
    %v285 = vld [vmem:[%s267 + $0x88] sm:$0xff]
    %v286 = vld [vmem:[%s267 + $0x90] sm:$0xff]
    %v287 = vld [vmem:[%s267 + $0x98] sm:$0xff]
    %v288 = vld [vmem:[%s267 + $0xa0] sm:$0xff]
    %v289 = vld [vmem:[%s267 + $0xa8] sm:$0xff]
    %v290 = vld [vmem:[%s267 + $0xb0] sm:$0xff]
    %v291 = vld [vmem:[%s267 + $0xb8] sm:$0xff]
    %v293 = vsel %vm150, %v118, 0
    %295 = vmatpush.msra.mxu0 %v283
    %296 = vmatpush.msra.mxu0 %v282
    %297 = vmatpush.msra.mxu0 %v281
    %298 = vmatpush.msra.mxu0 %v280
    %299 = vmatpush.msra.mxu0 %v279
    %300 = vmatpush.msra.mxu0 %v278
    %301 = vmatpush.msra.mxu0 %v277
    %302 = vmatpush.msra.mxu0 %v276
    %303 = vmatpush.msra.mxu0 %v275
    %304 = vmatpush.msra.mxu0 %v274
    %305 = vmatpush.msra.mxu0 %v273
    %306 = vmatpush.msra.mxu0 %v272
    %307 = vmatpush.msra.mxu0 %v271
    %308 = vmatpush.msra.mxu0 %v270
    %309 = vmatpush.msra.mxu0 %v269
    %310 = vmatpush.msra.mxu0 %v268
    %311 = vmatmul.f32.gmra.mxu0 %v89
    %v312 = vpop.f32.mrf.mxu0
    %v313 = vadd.f32 0.0, %v312
    %314 = vdwg.mxu0
    %315 = vmatpush.msra.mxu0 0.0
    %316 = vmatpush.msra.mxu0 0.0
    %317 = vmatpush.msra.mxu0 0.0
    %318 = vmatpush.msra.mxu0 0.0
    %319 = vmatpush.msra.mxu0 0.0
    %320 = vmatpush.msra.mxu0 0.0
    %321 = vmatpush.msra.mxu0 0.0
    %322 = vmatpush.msra.mxu0 0.0
    %323 = vmatpush.msra.mxu0 %v291
    %324 = vmatpush.msra.mxu0 %v290
    %325 = vmatpush.msra.mxu0 %v289
    %326 = vmatpush.msra.mxu0 %v288
    %327 = vmatpush.msra.mxu0 %v287
    %328 = vmatpush.msra.mxu0 %v286
    %329 = vmatpush.msra.mxu0 %v285
    %330 = vmatpush.msra.mxu0 %v284
    %331 = vmatmul.f32.gmra.mxu0 %v293
    %v332 = vpop.f32.mrf.mxu0
    %v333 = vadd.f32 %v313, %v332
    %334 = vdwg.mxu0
    %335 = vst [vmem:[#allocation2 + $0x8] sm:$0xf] %v333
    %s336 = scalar_lea.vmem [#allocation3], 576
    %v337 = vld [vmem:[%s336] sm:$0xff]
    %v338 = vld [vmem:[%s336 + $0x8] sm:$0xff]
    %v339 = vld [vmem:[%s336 + $0x10] sm:$0xff]
    %v340 = vld [vmem:[%s336 + $0x18] sm:$0xff]
    %v341 = vld [vmem:[%s336 + $0x20] sm:$0xff]
    %v342 = vld [vmem:[%s336 + $0x28] sm:$0xff]
    %v343 = vld [vmem:[%s336 + $0x30] sm:$0xff]
    %v344 = vld [vmem:[%s336 + $0x38] sm:$0xff]
    %v345 = vld [vmem:[%s336 + $0x40] sm:$0xff]
    %v346 = vld [vmem:[%s336 + $0x48] sm:$0xff]
    %v347 = vld [vmem:[%s336 + $0x50] sm:$0xff]
    %v348 = vld [vmem:[%s336 + $0x58] sm:$0xff]
    %v349 = vld [vmem:[%s336 + $0x60] sm:$0xff]
    %v350 = vld [vmem:[%s336 + $0x68] sm:$0xff]
    %v351 = vld [vmem:[%s336 + $0x70] sm:$0xff]
    %v352 = vld [vmem:[%s336 + $0x78] sm:$0xff]
    %v353 = vld [vmem:[%s336 + $0x80] sm:$0xff]
    %v354 = vld [vmem:[%s336 + $0x88] sm:$0xff]
    %v355 = vld [vmem:[%s336 + $0x90] sm:$0xff]
    %v356 = vld [vmem:[%s336 + $0x98] sm:$0xff]
    %v357 = vld [vmem:[%s336 + $0xa0] sm:$0xff]
    %v358 = vld [vmem:[%s336 + $0xa8] sm:$0xff]
    %v359 = vld [vmem:[%s336 + $0xb0] sm:$0xff]
    %v360 = vld [vmem:[%s336 + $0xb8] sm:$0xff]
    %v362 = vrot.slane %v89, 4
    %v363 = vrot.slane %v118, 4
    %v365 = vsel %vm150, %v363, 0
    %367 = vmatpush.msra.mxu0 %v352
    %368 = vmatpush.msra.mxu0 %v351
    %369 = vmatpush.msra.mxu0 %v350
    %370 = vmatpush.msra.mxu0 %v349
    %371 = vmatpush.msra.mxu0 %v348
    %372 = vmatpush.msra.mxu0 %v347
    %373 = vmatpush.msra.mxu0 %v346
    %374 = vmatpush.msra.mxu0 %v345
    %375 = vmatpush.msra.mxu0 %v344
    %376 = vmatpush.msra.mxu0 %v343
    %377 = vmatpush.msra.mxu0 %v342
    %378 = vmatpush.msra.mxu0 %v341
    %379 = vmatpush.msra.mxu0 %v340
    %380 = vmatpush.msra.mxu0 %v339
    %381 = vmatpush.msra.mxu0 %v338
    %382 = vmatpush.msra.mxu0 %v337
    %383 = vmatmul.f32.gmra.mxu0 %v362
    %v384 = vpop.f32.mrf.mxu0
    %v385 = vadd.f32 0.0, %v384
    %386 = vdwg.mxu0
    %387 = vmatpush.msra.mxu0 0.0
    %388 = vmatpush.msra.mxu0 0.0
    %389 = vmatpush.msra.mxu0 0.0
    %390 = vmatpush.msra.mxu0 0.0
    %391 = vmatpush.msra.mxu0 0.0
    %392 = vmatpush.msra.mxu0 0.0
    %393 = vmatpush.msra.mxu0 0.0
    %394 = vmatpush.msra.mxu0 0.0
    %395 = vmatpush.msra.mxu0 %v360
    %396 = vmatpush.msra.mxu0 %v359
    %397 = vmatpush.msra.mxu0 %v358
    %398 = vmatpush.msra.mxu0 %v357
    %399 = vmatpush.msra.mxu0 %v356
    %400 = vmatpush.msra.mxu0 %v355
    %401 = vmatpush.msra.mxu0 %v354
    %402 = vmatpush.msra.mxu0 %v353
    %403 = vmatmul.f32.gmra.mxu0 %v365
    %v404 = vpop.f32.mrf.mxu0
    %v405 = vadd.f32 %v385, %v404
    %406 = vdwg.mxu0
    %407 = vst [vmem:[#allocation2 + $0xc] sm:$0xf] %v405
    %s408 = scalar_lea.vmem [#allocation3], 768
    %v409 = vld [vmem:[%s408] sm:$0xff]
    %v410 = vld [vmem:[%s408 + $0x8] sm:$0xff]
    %v411 = vld [vmem:[%s408 + $0x10] sm:$0xff]
    %v412 = vld [vmem:[%s408 + $0x18] sm:$0xff]
    %v413 = vld [vmem:[%s408 + $0x20] sm:$0xff]
    %v414 = vld [vmem:[%s408 + $0x28] sm:$0xff]
    %v415 = vld [vmem:[%s408 + $0x30] sm:$0xff]
    %v416 = vld [vmem:[%s408 + $0x38] sm:$0xff]
    %v417 = vld [vmem:[%s408 + $0x40] sm:$0xff]
    %v418 = vld [vmem:[%s408 + $0x48] sm:$0xff]
    %v419 = vld [vmem:[%s408 + $0x50] sm:$0xff]
    %v420 = vld [vmem:[%s408 + $0x58] sm:$0xff]
    %v421 = vld [vmem:[%s408 + $0x60] sm:$0xff]
    %v422 = vld [vmem:[%s408 + $0x68] sm:$0xff]
    %v423 = vld [vmem:[%s408 + $0x70] sm:$0xff]
    %v424 = vld [vmem:[%s408 + $0x78] sm:$0xff]
    %v425 = vld [vmem:[%s408 + $0x80] sm:$0xff]
    %v426 = vld [vmem:[%s408 + $0x88] sm:$0xff]
    %v427 = vld [vmem:[%s408 + $0x90] sm:$0xff]
    %v428 = vld [vmem:[%s408 + $0x98] sm:$0xff]
    %v429 = vld [vmem:[%s408 + $0xa0] sm:$0xff]
    %v430 = vld [vmem:[%s408 + $0xa8] sm:$0xff]
    %v431 = vld [vmem:[%s408 + $0xb0] sm:$0xff]
    %v432 = vld [vmem:[%s408 + $0xb8] sm:$0xff]
    %v434 = vsel %vm150, %v121, 0
    %436 = vmatpush.msra.mxu0 %v424
    %437 = vmatpush.msra.mxu0 %v423
    %438 = vmatpush.msra.mxu0 %v422
    %439 = vmatpush.msra.mxu0 %v421
    %440 = vmatpush.msra.mxu0 %v420
    %441 = vmatpush.msra.mxu0 %v419
    %442 = vmatpush.msra.mxu0 %v418
    %443 = vmatpush.msra.mxu0 %v417
    %444 = vmatpush.msra.mxu0 %v416
    %445 = vmatpush.msra.mxu0 %v415
    %446 = vmatpush.msra.mxu0 %v414
    %447 = vmatpush.msra.mxu0 %v413
    %448 = vmatpush.msra.mxu0 %v412
    %449 = vmatpush.msra.mxu0 %v411
    %450 = vmatpush.msra.mxu0 %v410
    %451 = vmatpush.msra.mxu0 %v409
    %452 = vmatmul.f32.gmra.mxu0 %v92
    %v453 = vpop.f32.mrf.mxu0
    %v454 = vadd.f32 0.0, %v453
    %455 = vdwg.mxu0
    %456 = vmatpush.msra.mxu0 0.0
    %457 = vmatpush.msra.mxu0 0.0
    %458 = vmatpush.msra.mxu0 0.0
    %459 = vmatpush.msra.mxu0 0.0
    %460 = vmatpush.msra.mxu0 0.0
    %461 = vmatpush.msra.mxu0 0.0
    %462 = vmatpush.msra.mxu0 0.0
    %463 = vmatpush.msra.mxu0 0.0
    %464 = vmatpush.msra.mxu0 %v432
    %465 = vmatpush.msra.mxu0 %v431
    %466 = vmatpush.msra.mxu0 %v430
    %467 = vmatpush.msra.mxu0 %v429
    %468 = vmatpush.msra.mxu0 %v428
    %469 = vmatpush.msra.mxu0 %v427
    %470 = vmatpush.msra.mxu0 %v426
    %471 = vmatpush.msra.mxu0 %v425
    %472 = vmatmul.f32.gmra.mxu0 %v434
    %v473 = vpop.f32.mrf.mxu0
    %v474 = vadd.f32 %v454, %v473
    %475 = vdwg.mxu0
    %476 = vst [vmem:[#allocation2 + $0x10] sm:$0xf] %v474
    %s477 = scalar_lea.vmem [#allocation3], 960
    %v478 = vld [vmem:[%s477] sm:$0xff]
    %v479 = vld [vmem:[%s477 + $0x8] sm:$0xff]
    %v480 = vld [vmem:[%s477 + $0x10] sm:$0xff]
    %v481 = vld [vmem:[%s477 + $0x18] sm:$0xff]
    %v482 = vld [vmem:[%s477 + $0x20] sm:$0xff]
    %v483 = vld [vmem:[%s477 + $0x28] sm:$0xff]
    %v484 = vld [vmem:[%s477 + $0x30] sm:$0xff]
    %v485 = vld [vmem:[%s477 + $0x38] sm:$0xff]
    %v486 = vld [vmem:[%s477 + $0x40] sm:$0xff]
    %v487 = vld [vmem:[%s477 + $0x48] sm:$0xff]
    %v488 = vld [vmem:[%s477 + $0x50] sm:$0xff]
    %v489 = vld [vmem:[%s477 + $0x58] sm:$0xff]
    %v490 = vld [vmem:[%s477 + $0x60] sm:$0xff]
    %v491 = vld [vmem:[%s477 + $0x68] sm:$0xff]
    %v492 = vld [vmem:[%s477 + $0x70] sm:$0xff]
    %v493 = vld [vmem:[%s477 + $0x78] sm:$0xff]
    %v494 = vld [vmem:[%s477 + $0x80] sm:$0xff]
    %v495 = vld [vmem:[%s477 + $0x88] sm:$0xff]
    %v496 = vld [vmem:[%s477 + $0x90] sm:$0xff]
    %v497 = vld [vmem:[%s477 + $0x98] sm:$0xff]
    %v498 = vld [vmem:[%s477 + $0xa0] sm:$0xff]
    %v499 = vld [vmem:[%s477 + $0xa8] sm:$0xff]
    %v500 = vld [vmem:[%s477 + $0xb0] sm:$0xff]
    %v501 = vld [vmem:[%s477 + $0xb8] sm:$0xff]
    %v503 = vrot.slane %v92, 4
    %v504 = vrot.slane %v121, 4
    %v506 = vsel %vm150, %v504, 0
    %508 = vmatpush.msra.mxu0 %v493
    %509 = vmatpush.msra.mxu0 %v492
    %510 = vmatpush.msra.mxu0 %v491
    %511 = vmatpush.msra.mxu0 %v490
    %512 = vmatpush.msra.mxu0 %v489
    %513 = vmatpush.msra.mxu0 %v488
    %514 = vmatpush.msra.mxu0 %v487
    %515 = vmatpush.msra.mxu0 %v486
    %516 = vmatpush.msra.mxu0 %v485
    %517 = vmatpush.msra.mxu0 %v484
    %518 = vmatpush.msra.mxu0 %v483
    %519 = vmatpush.msra.mxu0 %v482
    %520 = vmatpush.msra.mxu0 %v481
    %521 = vmatpush.msra.mxu0 %v480
    %522 = vmatpush.msra.mxu0 %v479
    %523 = vmatpush.msra.mxu0 %v478
    %524 = vmatmul.f32.gmra.mxu0 %v503
    %v525 = vpop.f32.mrf.mxu0
    %v526 = vadd.f32 0.0, %v525
    %527 = vdwg.mxu0
    %528 = vmatpush.msra.mxu0 0.0
    %529 = vmatpush.msra.mxu0 0.0
    %530 = vmatpush.msra.mxu0 0.0
    %531 = vmatpush.msra.mxu0 0.0
    %532 = vmatpush.msra.mxu0 0.0
    %533 = vmatpush.msra.mxu0 0.0
    %534 = vmatpush.msra.mxu0 0.0
    %535 = vmatpush.msra.mxu0 0.0
    %536 = vmatpush.msra.mxu0 %v501
    %537 = vmatpush.msra.mxu0 %v500
    %538 = vmatpush.msra.mxu0 %v499
    %539 = vmatpush.msra.mxu0 %v498
    %540 = vmatpush.msra.mxu0 %v497
    %541 = vmatpush.msra.mxu0 %v496
    %542 = vmatpush.msra.mxu0 %v495
    %543 = vmatpush.msra.mxu0 %v494
    %544 = vmatmul.f32.gmra.mxu0 %v506
    %v545 = vpop.f32.mrf.mxu0
    %v546 = vadd.f32 %v526, %v545
    %547 = vdwg.mxu0
    %548 = vst [vmem:[#allocation2 + $0x14] sm:$0xf] %v546
    %s549 = scalar_lea.vmem [#allocation3], 1152
    %v550 = vld [vmem:[%s549] sm:$0xff]
    %v551 = vld [vmem:[%s549 + $0x8] sm:$0xff]
    %v552 = vld [vmem:[%s549 + $0x10] sm:$0xff]
    %v553 = vld [vmem:[%s549 + $0x18] sm:$0xff]
    %v554 = vld [vmem:[%s549 + $0x20] sm:$0xff]
    %v555 = vld [vmem:[%s549 + $0x28] sm:$0xff]
    %v556 = vld [vmem:[%s549 + $0x30] sm:$0xff]
    %v557 = vld [vmem:[%s549 + $0x38] sm:$0xff]
    %v558 = vld [vmem:[%s549 + $0x40] sm:$0xff]
    %v559 = vld [vmem:[%s549 + $0x48] sm:$0xff]
    %v560 = vld [vmem:[%s549 + $0x50] sm:$0xff]
    %v561 = vld [vmem:[%s549 + $0x58] sm:$0xff]
    %v562 = vld [vmem:[%s549 + $0x60] sm:$0xff]
    %v563 = vld [vmem:[%s549 + $0x68] sm:$0xff]
    %v564 = vld [vmem:[%s549 + $0x70] sm:$0xff]
    %v565 = vld [vmem:[%s549 + $0x78] sm:$0xff]
    %v566 = vld [vmem:[%s549 + $0x80] sm:$0xff]
    %v567 = vld [vmem:[%s549 + $0x88] sm:$0xff]
    %v568 = vld [vmem:[%s549 + $0x90] sm:$0xff]
    %v569 = vld [vmem:[%s549 + $0x98] sm:$0xff]
    %v570 = vld [vmem:[%s549 + $0xa0] sm:$0xff]
    %v571 = vld [vmem:[%s549 + $0xa8] sm:$0xff]
    %v572 = vld [vmem:[%s549 + $0xb0] sm:$0xff]
    %v573 = vld [vmem:[%s549 + $0xb8] sm:$0xff]
    %v575 = vsel %vm150, %v124, 0
    %577 = vmatpush.msra.mxu0 %v565
    %578 = vmatpush.msra.mxu0 %v564
    %579 = vmatpush.msra.mxu0 %v563
    %580 = vmatpush.msra.mxu0 %v562
    %581 = vmatpush.msra.mxu0 %v561
    %582 = vmatpush.msra.mxu0 %v560
    %583 = vmatpush.msra.mxu0 %v559
    %584 = vmatpush.msra.mxu0 %v558
    %585 = vmatpush.msra.mxu0 %v557
    %586 = vmatpush.msra.mxu0 %v556
    %587 = vmatpush.msra.mxu0 %v555
    %588 = vmatpush.msra.mxu0 %v554
    %589 = vmatpush.msra.mxu0 %v553
    %590 = vmatpush.msra.mxu0 %v552
    %591 = vmatpush.msra.mxu0 %v551
    %592 = vmatpush.msra.mxu0 %v550
    %593 = vmatmul.f32.gmra.mxu0 %v95
    %v594 = vpop.f32.mrf.mxu0
    %v595 = vadd.f32 0.0, %v594
    %596 = vdwg.mxu0
    %597 = vmatpush.msra.mxu0 0.0
    %598 = vmatpush.msra.mxu0 0.0
    %599 = vmatpush.msra.mxu0 0.0
    %600 = vmatpush.msra.mxu0 0.0
    %601 = vmatpush.msra.mxu0 0.0
    %602 = vmatpush.msra.mxu0 0.0
    %603 = vmatpush.msra.mxu0 0.0
    %604 = vmatpush.msra.mxu0 0.0
    %605 = vmatpush.msra.mxu0 %v573
    %606 = vmatpush.msra.mxu0 %v572
    %607 = vmatpush.msra.mxu0 %v571
    %608 = vmatpush.msra.mxu0 %v570
    %609 = vmatpush.msra.mxu0 %v569
    %610 = vmatpush.msra.mxu0 %v568
    %611 = vmatpush.msra.mxu0 %v567
    %612 = vmatpush.msra.mxu0 %v566
    %613 = vmatmul.f32.gmra.mxu0 %v575
    %v614 = vpop.f32.mrf.mxu0
    %v615 = vadd.f32 %v595, %v614
    %616 = vdwg.mxu0
    %617 = vst [vmem:[#allocation2 + $0x18] sm:$0xf] %v615
    %s618 = scalar_lea.vmem [#allocation3], 1344
    %v619 = vld [vmem:[%s618] sm:$0xff]
    %v620 = vld [vmem:[%s618 + $0x8] sm:$0xff]
    %v621 = vld [vmem:[%s618 + $0x10] sm:$0xff]
    %v622 = vld [vmem:[%s618 + $0x18] sm:$0xff]
    %v623 = vld [vmem:[%s618 + $0x20] sm:$0xff]
    %v624 = vld [vmem:[%s618 + $0x28] sm:$0xff]
    %v625 = vld [vmem:[%s618 + $0x30] sm:$0xff]
    %v626 = vld [vmem:[%s618 + $0x38] sm:$0xff]
    %v627 = vld [vmem:[%s618 + $0x40] sm:$0xff]
    %v628 = vld [vmem:[%s618 + $0x48] sm:$0xff]
    %v629 = vld [vmem:[%s618 + $0x50] sm:$0xff]
    %v630 = vld [vmem:[%s618 + $0x58] sm:$0xff]
    %v631 = vld [vmem:[%s618 + $0x60] sm:$0xff]
    %v632 = vld [vmem:[%s618 + $0x68] sm:$0xff]
    %v633 = vld [vmem:[%s618 + $0x70] sm:$0xff]
    %v634 = vld [vmem:[%s618 + $0x78] sm:$0xff]
    %v635 = vld [vmem:[%s618 + $0x80] sm:$0xff]
    %v636 = vld [vmem:[%s618 + $0x88] sm:$0xff]
    %v637 = vld [vmem:[%s618 + $0x90] sm:$0xff]
    %v638 = vld [vmem:[%s618 + $0x98] sm:$0xff]
    %v639 = vld [vmem:[%s618 + $0xa0] sm:$0xff]
    %v640 = vld [vmem:[%s618 + $0xa8] sm:$0xff]
    %v641 = vld [vmem:[%s618 + $0xb0] sm:$0xff]
    %v642 = vld [vmem:[%s618 + $0xb8] sm:$0xff]
    %v644 = vrot.slane %v95, 4
    %v645 = vrot.slane %v124, 4
    %v647 = vsel %vm150, %v645, 0
    %649 = vmatpush.msra.mxu0 %v634
    %650 = vmatpush.msra.mxu0 %v633
    %651 = vmatpush.msra.mxu0 %v632
    %652 = vmatpush.msra.mxu0 %v631
    %653 = vmatpush.msra.mxu0 %v630
    %654 = vmatpush.msra.mxu0 %v629
    %655 = vmatpush.msra.mxu0 %v628
    %656 = vmatpush.msra.mxu0 %v627
    %657 = vmatpush.msra.mxu0 %v626
    %658 = vmatpush.msra.mxu0 %v625
    %659 = vmatpush.msra.mxu0 %v624
    %660 = vmatpush.msra.mxu0 %v623
    %661 = vmatpush.msra.mxu0 %v622
    %662 = vmatpush.msra.mxu0 %v621
    %663 = vmatpush.msra.mxu0 %v620
    %664 = vmatpush.msra.mxu0 %v619
    %665 = vmatmul.f32.gmra.mxu0 %v644
    %v666 = vpop.f32.mrf.mxu0
    %v667 = vadd.f32 0.0, %v666
    %668 = vdwg.mxu0
    %669 = vmatpush.msra.mxu0 0.0
    %670 = vmatpush.msra.mxu0 0.0
    %671 = vmatpush.msra.mxu0 0.0
    %672 = vmatpush.msra.mxu0 0.0
    %673 = vmatpush.msra.mxu0 0.0
    %674 = vmatpush.msra.mxu0 0.0
    %675 = vmatpush.msra.mxu0 0.0
    %676 = vmatpush.msra.mxu0 0.0
    %677 = vmatpush.msra.mxu0 %v642
    %678 = vmatpush.msra.mxu0 %v641
    %679 = vmatpush.msra.mxu0 %v640
    %680 = vmatpush.msra.mxu0 %v639
    %681 = vmatpush.msra.mxu0 %v638
    %682 = vmatpush.msra.mxu0 %v637
    %683 = vmatpush.msra.mxu0 %v636
    %684 = vmatpush.msra.mxu0 %v635
    %685 = vmatmul.f32.gmra.mxu0 %v647
    %v686 = vpop.f32.mrf.mxu0
    %v687 = vadd.f32 %v667, %v686
    %688 = vdwg.mxu0
    %689 = vst [vmem:[#allocation2 + $0x1c] sm:$0xf] %v687
    %v690 = vld [vmem:[#allocation2] sm:$0xff]
    %v691 = vld [vmem:[#allocation2 + $0x8] sm:$0xff]
    %v692 = vld [vmem:[#allocation2 + $0x10] sm:$0xff]
    %v693 = vld [vmem:[#allocation2 + $0x18] sm:$0xff]
    %v694 = vld [vmem:[%s3] sm:$0xff]
    %v695 = vld [vmem:[%s3 + $0x8] sm:$0xff]
    %v696 = vld [vmem:[%s3 + $0x10] sm:$0xff]
    %v697 = vld [vmem:[%s3 + $0x18] sm:$0xff]
    %699 = vset.pattern.permute.xlu0 0
    %700 = vperm.xlu0 %699, %v694
    %v701 = vpop.permute.xlu0 %700
    %704 = vset.pattern.permute.xlu0 0
    %705 = vperm.xlu0 %704, %v695
    %v706 = vpop.permute.xlu0 %705
    %709 = vset.pattern.permute.xlu0 0
    %710 = vperm.xlu0 %709, %v696
    %v711 = vpop.permute.xlu0 %710
    %714 = vset.pattern.permute.xlu0 0
    %715 = vperm.xlu0 %714, %v697
    %v716 = vpop.permute.xlu0 %715
    %v718 = vmul.f32 %v690, %v701
    %v719 = vmul.f32 %v691, %v706
    %v720 = vmul.f32 %v692, %v711
    %v721 = vmul.f32 %v693, %v716
    %722 = vset.pattern.permute.xlu0 1
    %723 = vperm.xlu0 %722, %v694
    %v724 = vpop.permute.xlu0 %723
    %726 = vset.pattern.permute.xlu0 1
    %727 = vperm.xlu0 %726, %v695
    %v728 = vpop.permute.xlu0 %727
    %730 = vset.pattern.permute.xlu0 1
    %731 = vperm.xlu0 %730, %v696
    %v732 = vpop.permute.xlu0 %731
    %734 = vset.pattern.permute.xlu0 1
    %735 = vperm.xlu0 %734, %v697
    %v736 = vpop.permute.xlu0 %735
    %v738 = vadd.f32 %v718, %v724
    %v739 = vadd.f32 %v719, %v728
    %v740 = vadd.f32 %v720, %v732
    %v741 = vadd.f32 %v721, %v736
    %vm742 = vcmp.gt.f32.partialorder %v738, 0.0
    %vm743 = vcmp.gt.f32.partialorder %v739, 0.0
    %vm744 = vcmp.gt.f32.partialorder %v740, 0.0
    %vm745 = vcmp.gt.f32.partialorder %v741, 0.0
    %v746 = vmin.f32 %v738, 0.0
    %v747 = vmin.f32 %v739, 0.0
    %v748 = vmin.f32 %v740, 0.0
    %v749 = vmin.f32 %v741, 0.0
    %v750 = vmul.f32 %v746, 1.442695
    %v751 = vpow.pop %v750
    %v752 = vmul.f32 %v747, 1.442695
    %v753 = vpow.pop %v752
    %v754 = vmul.f32 %v748, 1.442695
    %v755 = vpow.pop %v754
    %v756 = vmul.f32 %v749, 1.442695
    %v757 = vpow.pop %v756
    %v758 = vsub.f32 %v751, 1.0
    %v759 = vsub.f32 %v753, 1.0
    %v760 = vsub.f32 %v755, 1.0
    %v761 = vsub.f32 %v757, 1.0
    %v762 = vsel %vm742, %v738, %v758
    %v763 = vsel %vm743, %v739, %v759
    %v764 = vsel %vm744, %v740, %v760
    %v765 = vsel %vm745, %v741, %v761
    %v766 = vld [vmem:[%s4] sm:$0xff]
    %v767 = vld [vmem:[%s4 + $0x8] sm:$0xff]
    %v768 = vld [vmem:[%s4 + $0x10] sm:$0xff]
    %v769 = vld [vmem:[%s4 + $0x18] sm:$0xff]
    %v770 = vld [vmem:[%s4 + $0x20] sm:$0xff]
    %v771 = vld [vmem:[%s4 + $0x28] sm:$0xff]
    %v772 = vld [vmem:[%s4 + $0x30] sm:$0xff]
    %v773 = vld [vmem:[%s4 + $0x38] sm:$0xff]
    %v774 = vld [vmem:[%s4 + $0x40] sm:$0xff]
    %v775 = vld [vmem:[%s4 + $0x48] sm:$0xff]
    %v776 = vld [vmem:[%s4 + $0x50] sm:$0xff]
    %v777 = vld [vmem:[%s4 + $0x58] sm:$0xff]
    %v778 = vld [vmem:[%s4 + $0x60] sm:$0xff]
    %v779 = vld [vmem:[%s4 + $0x68] sm:$0xff]
    %v780 = vld [vmem:[%s4 + $0x70] sm:$0xff]
    %v781 = vld [vmem:[%s4 + $0x78] sm:$0xff]
    %782 = vmatpush.msra.mxu0 %v781
    %783 = vmatpush.msra.mxu0 %v780
    %784 = vmatpush.msra.mxu0 %v779
    %785 = vmatpush.msra.mxu0 %v778
    %786 = vmatpush.msra.mxu0 %v777
    %787 = vmatpush.msra.mxu0 %v776
    %788 = vmatpush.msra.mxu0 %v775
    %789 = vmatpush.msra.mxu0 %v774
    %790 = vmatpush.msra.mxu0 %v773
    %791 = vmatpush.msra.mxu0 %v772
    %792 = vmatpush.msra.mxu0 %v771
    %793 = vmatpush.msra.mxu0 %v770
    %794 = vmatpush.msra.mxu0 %v769
    %795 = vmatpush.msra.mxu0 %v768
    %796 = vmatpush.msra.mxu0 %v767
    %797 = vmatpush.msra.mxu0 %v766
    %798 = vmatmul.f32.gmra.mxu0 %v762
    %v799 = vpop.f32.mrf.mxu0
    %v800 = vadd.f32 0.0, %v799
    %801 = vmatmul.f32.gmra.mxu0 %v763
    %v802 = vpop.f32.mrf.mxu0
    %v803 = vadd.f32 0.0, %v802
    %804 = vmatmul.f32.gmra.mxu0 %v764
    %v805 = vpop.f32.mrf.mxu0
    %v806 = vadd.f32 0.0, %v805
    %807 = vmatmul.f32.gmra.mxu0 %v765
    %v808 = vpop.f32.mrf.mxu0
    %v809 = vadd.f32 0.0, %v808
    %810 = vdwg.mxu0
    %v811 = vld [vmem:[%s5] sm:$0xff]
    %v812 = vld [vmem:[%s5 + $0x8] sm:$0xff]
    %v813 = vld [vmem:[%s5 + $0x10] sm:$0xff]
    %v814 = vld [vmem:[%s5 + $0x18] sm:$0xff]
    %v815 = vld [vmem:[%s5 + $0x20] sm:$0xff]
    %v816 = vld [vmem:[%s5 + $0x28] sm:$0xff]
    %v817 = vld [vmem:[%s6] sm:$0x1]
    %v819 = vperm.slane %v817, 0
    %820 = vset.pattern.permute.xlu0 0
    %821 = vperm.xlu0 %820, %v819
    %v822 = vpop.permute.xlu0 %821
    %vm824 = vcmask 392192
    %v826 = vsel %vm824, %v800, 0
    %828 = vmatpush.msra.mxu0 0.0
    %829 = vmatpush.msra.mxu0 0.0
    %830 = vmatpush.msra.mxu0 0.0
    %831 = vmatpush.msra.mxu0 0.0
    %832 = vmatpush.msra.mxu0 0.0
    %833 = vmatpush.msra.mxu0 0.0
    %834 = vmatpush.msra.mxu0 0.0
    %835 = vmatpush.msra.mxu0 0.0
    %836 = vmatpush.msra.mxu0 0.0
    %837 = vmatpush.msra.mxu0 0.0
    %838 = vmatpush.msra.mxu0 %v816
    %839 = vmatpush.msra.mxu0 %v815
    %840 = vmatpush.msra.mxu0 %v814
    %841 = vmatpush.msra.mxu0 %v813
    %842 = vmatpush.msra.mxu0 %v812
    %843 = vmatpush.msra.mxu0 %v811
    %844 = vmatmul.f32.gmra.mxu0 %v826
    %v845 = vpop.f32.mrf.mxu0
    %v846 = vadd.f32 %v822, %v845
    %847 = vdwg.mxu0
    %vm848 = vcmp.gt.f32.partialorder %v846, 0.0
    %v849 = vmin.f32 %v846, 0.0
    %v850 = vmul.f32 %v849, 1.442695
    %v851 = vpow.pop %v850
    %v852 = vsub.f32 %v851, 1.0
    %v853 = vsel %vm848, %v846, %v852
    %v854 = vld [vmem:[%s7] sm:$0xff]
    %v855 = vld [vmem:[%s7 + $0x8] sm:$0xff]
    %v856 = vld [vmem:[%s7 + $0x10] sm:$0xff]
    %v857 = vld [vmem:[%s7 + $0x18] sm:$0xff]
    %s858 = scalar_lea.vmem %s5, 48
    %v859 = vld [vmem:[%s858] sm:$0xff]
    %v860 = vld [vmem:[%s858 + $0x8] sm:$0xff]
    %v861 = vld [vmem:[%s858 + $0x10] sm:$0xff]
    %v862 = vld [vmem:[%s858 + $0x18] sm:$0xff]
    %v863 = vld [vmem:[%s858 + $0x20] sm:$0xff]
    %v864 = vld [vmem:[%s858 + $0x28] sm:$0xff]
    %s865 = scalar_lea.vmem %s6, 1
    %v866 = vld [vmem:[%s865] sm:$0x1]
    %v868 = vperm.slane %v866, 0
    %869 = vset.pattern.permute.xlu0 0
    %870 = vperm.xlu0 %869, %v868
    %v871 = vpop.permute.xlu0 %870
    %v873 = vrot.slane %v800, 2
    %v874 = vsel %vm824, %v873, 0
    %876 = vmatpush.msra.mxu0 0.0
    %877 = vmatpush.msra.mxu0 0.0
    %878 = vmatpush.msra.mxu0 0.0
    %879 = vmatpush.msra.mxu0 0.0
    %880 = vmatpush.msra.mxu0 0.0
    %881 = vmatpush.msra.mxu0 0.0
    %882 = vmatpush.msra.mxu0 0.0
    %883 = vmatpush.msra.mxu0 0.0
    %884 = vmatpush.msra.mxu0 0.0
    %885 = vmatpush.msra.mxu0 0.0
    %886 = vmatpush.msra.mxu0 %v864
    %887 = vmatpush.msra.mxu0 %v863
    %888 = vmatpush.msra.mxu0 %v862
    %889 = vmatpush.msra.mxu0 %v861
    %890 = vmatpush.msra.mxu0 %v860
    %891 = vmatpush.msra.mxu0 %v859
    %892 = vmatmul.f32.gmra.mxu0 %v874
    %v893 = vpop.f32.mrf.mxu0
    %v894 = vadd.f32 %v871, %v893
    %895 = vdwg.mxu0
    %vm896 = vcmp.gt.f32.partialorder %v894, 0.0
    %v897 = vmin.f32 %v894, 0.0
    %v898 = vmul.f32 %v897, 1.442695
    %v899 = vpow.pop %v898
    %v900 = vsub.f32 %v899, 1.0
    %v901 = vsel %vm896, %v894, %v900
    %s902 = scalar_lea.vmem %s7, 32
    %v903 = vld [vmem:[%s902] sm:$0xff]
    %v904 = vld [vmem:[%s902 + $0x8] sm:$0xff]
    %v905 = vld [vmem:[%s902 + $0x10] sm:$0xff]
    %v906 = vld [vmem:[%s902 + $0x18] sm:$0xff]
    %vm907 = vcmask 261120
    %v909 = vsel %vm907, %v901, 0
    %911 = vmatpush.msra.mxu0 0.0
    %912 = vmatpush.msra.mxu0 0.0
    %913 = vmatpush.msra.mxu0 0.0
    %914 = vmatpush.msra.mxu0 0.0
    %915 = vmatpush.msra.mxu0 0.0
    %916 = vmatpush.msra.mxu0 0.0
    %917 = vmatpush.msra.mxu0 0.0
    %918 = vmatpush.msra.mxu0 0.0
    %919 = vmatpush.msra.mxu0 0.0
    %920 = vmatpush.msra.mxu0 0.0
    %921 = vmatpush.msra.mxu0 0.0
    %922 = vmatpush.msra.mxu0 0.0
    %923 = vmatpush.msra.mxu0 %v906
    %924 = vmatpush.msra.mxu0 %v905
    %925 = vmatpush.msra.mxu0 %v904
    %926 = vmatpush.msra.mxu0 %v903
    %927 = vmatmul.f32.gmra.mxu0 %v909
    %v928 = vpop.f32.mrf.mxu0
    %v929 = vadd.f32 0.0, %v928
    %930 = vdwg.mxu0
    %v932 = vsel %vm907, %v853, 0
    %934 = vmatpush.msra.mxu0 0.0
    %935 = vmatpush.msra.mxu0 0.0
    %936 = vmatpush.msra.mxu0 0.0
    %937 = vmatpush.msra.mxu0 0.0
    %938 = vmatpush.msra.mxu0 0.0
    %939 = vmatpush.msra.mxu0 0.0
    %940 = vmatpush.msra.mxu0 0.0
    %941 = vmatpush.msra.mxu0 0.0
    %942 = vmatpush.msra.mxu0 0.0
    %943 = vmatpush.msra.mxu0 0.0
    %944 = vmatpush.msra.mxu0 0.0
    %945 = vmatpush.msra.mxu0 0.0
    %946 = vmatpush.msra.mxu0 %v857
    %947 = vmatpush.msra.mxu0 %v856
    %948 = vmatpush.msra.mxu0 %v855
    %949 = vmatpush.msra.mxu0 %v854
    %950 = vmatmul.f32.gmra.mxu0 %v932
    %v951 = vpop.f32.mrf.mxu0
    %v952 = vadd.f32 %v929, %v951
    %953 = vdwg.mxu0
    %s954 = scalar_lea.vmem %s5, 96
    %v955 = vld [vmem:[%s954] sm:$0xff]
    %v956 = vld [vmem:[%s954 + $0x8] sm:$0xff]
    %v957 = vld [vmem:[%s954 + $0x10] sm:$0xff]
    %v958 = vld [vmem:[%s954 + $0x18] sm:$0xff]
    %v959 = vld [vmem:[%s954 + $0x20] sm:$0xff]
    %v960 = vld [vmem:[%s954 + $0x28] sm:$0xff]
    %s961 = scalar_lea.vmem %s6, 2
    %v962 = vld [vmem:[%s961] sm:$0x1]
    %v964 = vperm.slane %v962, 0
    %965 = vset.pattern.permute.xlu0 0
    %966 = vperm.xlu0 %965, %v964
    %v967 = vpop.permute.xlu0 %966
    %v969 = vrot.slane %v800, 4
    %v970 = vsel %vm824, %v969, 0
    %972 = vmatpush.msra.mxu0 0.0
    %973 = vmatpush.msra.mxu0 0.0
    %974 = vmatpush.msra.mxu0 0.0
    %975 = vmatpush.msra.mxu0 0.0
    %976 = vmatpush.msra.mxu0 0.0
    %977 = vmatpush.msra.mxu0 0.0
    %978 = vmatpush.msra.mxu0 0.0
    %979 = vmatpush.msra.mxu0 0.0
    %980 = vmatpush.msra.mxu0 0.0
    %981 = vmatpush.msra.mxu0 0.0
    %982 = vmatpush.msra.mxu0 %v960
    %983 = vmatpush.msra.mxu0 %v959
    %984 = vmatpush.msra.mxu0 %v958
    %985 = vmatpush.msra.mxu0 %v957
    %986 = vmatpush.msra.mxu0 %v956
    %987 = vmatpush.msra.mxu0 %v955
    %988 = vmatmul.f32.gmra.mxu0 %v970
    %v989 = vpop.f32.mrf.mxu0
    %v990 = vadd.f32 %v967, %v989
    %991 = vdwg.mxu0
    %vm992 = vcmp.gt.f32.partialorder %v990, 0.0
    %v993 = vmin.f32 %v990, 0.0
    %v994 = vmul.f32 %v993, 1.442695
    %v995 = vpow.pop %v994
    %v996 = vsub.f32 %v995, 1.0
    %v997 = vsel %vm992, %v990, %v996
    %s998 = scalar_lea.vmem %s7, 64
    %v999 = vld [vmem:[%s998] sm:$0xff]
    %v1000 = vld [vmem:[%s998 + $0x8] sm:$0xff]
    %v1001 = vld [vmem:[%s998 + $0x10] sm:$0xff]
    %v1002 = vld [vmem:[%s998 + $0x18] sm:$0xff]
    %v1004 = vsel %vm907, %v997, 0
    %1006 = vmatpush.msra.mxu0 0.0
    %1007 = vmatpush.msra.mxu0 0.0
    %1008 = vmatpush.msra.mxu0 0.0
    %1009 = vmatpush.msra.mxu0 0.0
    %1010 = vmatpush.msra.mxu0 0.0
    %1011 = vmatpush.msra.mxu0 0.0
    %1012 = vmatpush.msra.mxu0 0.0
    %1013 = vmatpush.msra.mxu0 0.0
    %1014 = vmatpush.msra.mxu0 0.0
    %1015 = vmatpush.msra.mxu0 0.0
    %1016 = vmatpush.msra.mxu0 0.0
    %1017 = vmatpush.msra.mxu0 0.0
    %1018 = vmatpush.msra.mxu0 %v1002
    %1019 = vmatpush.msra.mxu0 %v1001
    %1020 = vmatpush.msra.mxu0 %v1000
    %1021 = vmatpush.msra.mxu0 %v999
    %1022 = vmatmul.f32.gmra.mxu0 %v1004
    %v1023 = vpop.f32.mrf.mxu0
    %v1024 = vadd.f32 0.0, %v1023
    %1025 = vdwg.mxu0
    %v1026 = vadd.f32 %v952, %v1024
    %s1027 = scalar_lea.vmem %s5, 144
    %v1028 = vld [vmem:[%s1027] sm:$0xff]
    %v1029 = vld [vmem:[%s1027 + $0x8] sm:$0xff]
    %v1030 = vld [vmem:[%s1027 + $0x10] sm:$0xff]
    %v1031 = vld [vmem:[%s1027 + $0x18] sm:$0xff]
    %v1032 = vld [vmem:[%s1027 + $0x20] sm:$0xff]
    %v1033 = vld [vmem:[%s1027 + $0x28] sm:$0xff]
    %s1034 = scalar_lea.vmem %s6, 3
    %v1035 = vld [vmem:[%s1034] sm:$0x1]
    %v1037 = vperm.slane %v1035, 0
    %1038 = vset.pattern.permute.xlu0 0
    %1039 = vperm.xlu0 %1038, %v1037
    %v1040 = vpop.permute.xlu0 %1039
    %v1042 = vrot.slane %v800, 6
    %v1043 = vsel %vm824, %v1042, 0
    %1045 = vmatpush.msra.mxu0 0.0
    %1046 = vmatpush.msra.mxu0 0.0
    %1047 = vmatpush.msra.mxu0 0.0
    %1048 = vmatpush.msra.mxu0 0.0
    %1049 = vmatpush.msra.mxu0 0.0
    %1050 = vmatpush.msra.mxu0 0.0
    %1051 = vmatpush.msra.mxu0 0.0
    %1052 = vmatpush.msra.mxu0 0.0
    %1053 = vmatpush.msra.mxu0 0.0
    %1054 = vmatpush.msra.mxu0 0.0
    %1055 = vmatpush.msra.mxu0 %v1033
    %1056 = vmatpush.msra.mxu0 %v1032
    %1057 = vmatpush.msra.mxu0 %v1031
    %1058 = vmatpush.msra.mxu0 %v1030
    %1059 = vmatpush.msra.mxu0 %v1029
    %1060 = vmatpush.msra.mxu0 %v1028
    %1061 = vmatmul.f32.gmra.mxu0 %v1043
    %v1062 = vpop.f32.mrf.mxu0
    %v1063 = vadd.f32 %v1040, %v1062
    %1064 = vdwg.mxu0
    %vm1065 = vcmp.gt.f32.partialorder %v1063, 0.0
    %v1066 = vmin.f32 %v1063, 0.0
    %v1067 = vmul.f32 %v1066, 1.442695
    %v1068 = vpow.pop %v1067
    %v1069 = vsub.f32 %v1068, 1.0
    %v1070 = vsel %vm1065, %v1063, %v1069
    %s1071 = scalar_lea.vmem %s7, 96
    %v1072 = vld [vmem:[%s1071] sm:$0xff]
    %v1073 = vld [vmem:[%s1071 + $0x8] sm:$0xff]
    %v1074 = vld [vmem:[%s1071 + $0x10] sm:$0xff]
    %v1075 = vld [vmem:[%s1071 + $0x18] sm:$0xff]
    %v1077 = vsel %vm907, %v1070, 0
    %1079 = vmatpush.msra.mxu0 0.0
    %1080 = vmatpush.msra.mxu0 0.0
    %1081 = vmatpush.msra.mxu0 0.0
    %1082 = vmatpush.msra.mxu0 0.0
    %1083 = vmatpush.msra.mxu0 0.0
    %1084 = vmatpush.msra.mxu0 0.0
    %1085 = vmatpush.msra.mxu0 0.0
    %1086 = vmatpush.msra.mxu0 0.0
    %1087 = vmatpush.msra.mxu0 0.0
    %1088 = vmatpush.msra.mxu0 0.0
    %1089 = vmatpush.msra.mxu0 0.0
    %1090 = vmatpush.msra.mxu0 0.0
    %1091 = vmatpush.msra.mxu0 %v1075
    %1092 = vmatpush.msra.mxu0 %v1074
    %1093 = vmatpush.msra.mxu0 %v1073
    %1094 = vmatpush.msra.mxu0 %v1072
    %1095 = vmatmul.f32.gmra.mxu0 %v1077
    %v1096 = vpop.f32.mrf.mxu0
    %v1097 = vadd.f32 0.0, %v1096
    %1098 = vdwg.mxu0
    %v1099 = vadd.f32 %v1026, %v1097
    %s1100 = scalar_lea.vmem %s5, 192
    %v1101 = vld [vmem:[%s1100] sm:$0xff]
    %v1102 = vld [vmem:[%s1100 + $0x8] sm:$0xff]
    %v1103 = vld [vmem:[%s1100 + $0x10] sm:$0xff]
    %v1104 = vld [vmem:[%s1100 + $0x18] sm:$0xff]
    %v1105 = vld [vmem:[%s1100 + $0x20] sm:$0xff]
    %v1106 = vld [vmem:[%s1100 + $0x28] sm:$0xff]
    %s1107 = scalar_lea.vmem %s6, 4
    %v1108 = vld [vmem:[%s1107] sm:$0x1]
    %v1110 = vperm.slane %v1108, 0
    %1111 = vset.pattern.permute.xlu0 0
    %1112 = vperm.xlu0 %1111, %v1110
    %v1113 = vpop.permute.xlu0 %1112
    %v1116 = vsel %vm824, %v803, 0
    %1118 = vmatpush.msra.mxu0 0.0
    %1119 = vmatpush.msra.mxu0 0.0
    %1120 = vmatpush.msra.mxu0 0.0
    %1121 = vmatpush.msra.mxu0 0.0
    %1122 = vmatpush.msra.mxu0 0.0
    %1123 = vmatpush.msra.mxu0 0.0
    %1124 = vmatpush.msra.mxu0 0.0
    %1125 = vmatpush.msra.mxu0 0.0
    %1126 = vmatpush.msra.mxu0 0.0
    %1127 = vmatpush.msra.mxu0 0.0
    %1128 = vmatpush.msra.mxu0 %v1106
    %1129 = vmatpush.msra.mxu0 %v1105
    %1130 = vmatpush.msra.mxu0 %v1104
    %1131 = vmatpush.msra.mxu0 %v1103
    %1132 = vmatpush.msra.mxu0 %v1102
    %1133 = vmatpush.msra.mxu0 %v1101
    %1134 = vmatmul.f32.gmra.mxu0 %v1116
    %v1135 = vpop.f32.mrf.mxu0
    %v1136 = vadd.f32 %v1113, %v1135
    %1137 = vdwg.mxu0
    %vm1138 = vcmp.gt.f32.partialorder %v1136, 0.0
    %v1139 = vmin.f32 %v1136, 0.0
    %v1140 = vmul.f32 %v1139, 1.442695
    %v1141 = vpow.pop %v1140
    %v1142 = vsub.f32 %v1141, 1.0
    %v1143 = vsel %vm1138, %v1136, %v1142
    %s1144 = scalar_lea.vmem %s7, 128
    %v1145 = vld [vmem:[%s1144] sm:$0xff]
    %v1146 = vld [vmem:[%s1144 + $0x8] sm:$0xff]
    %v1147 = vld [vmem:[%s1144 + $0x10] sm:$0xff]
    %v1148 = vld [vmem:[%s1144 + $0x18] sm:$0xff]
    %v1150 = vsel %vm907, %v1143, 0
    %1152 = vmatpush.msra.mxu0 0.0
    %1153 = vmatpush.msra.mxu0 0.0
    %1154 = vmatpush.msra.mxu0 0.0
    %1155 = vmatpush.msra.mxu0 0.0
    %1156 = vmatpush.msra.mxu0 0.0
    %1157 = vmatpush.msra.mxu0 0.0
    %1158 = vmatpush.msra.mxu0 0.0
    %1159 = vmatpush.msra.mxu0 0.0
    %1160 = vmatpush.msra.mxu0 0.0
    %1161 = vmatpush.msra.mxu0 0.0
    %1162 = vmatpush.msra.mxu0 0.0
    %1163 = vmatpush.msra.mxu0 0.0
    %1164 = vmatpush.msra.mxu0 %v1148
    %1165 = vmatpush.msra.mxu0 %v1147
    %1166 = vmatpush.msra.mxu0 %v1146
    %1167 = vmatpush.msra.mxu0 %v1145
    %1168 = vmatmul.f32.gmra.mxu0 %v1150
    %v1169 = vpop.f32.mrf.mxu0
    %v1170 = vadd.f32 0.0, %v1169
    %1171 = vdwg.mxu0
    %v1172 = vadd.f32 %v1099, %v1170
    %s1173 = scalar_lea.vmem %s5, 240
    %v1174 = vld [vmem:[%s1173] sm:$0xff]
    %v1175 = vld [vmem:[%s1173 + $0x8] sm:$0xff]
    %v1176 = vld [vmem:[%s1173 + $0x10] sm:$0xff]
    %v1177 = vld [vmem:[%s1173 + $0x18] sm:$0xff]
    %v1178 = vld [vmem:[%s1173 + $0x20] sm:$0xff]
    %v1179 = vld [vmem:[%s1173 + $0x28] sm:$0xff]
    %s1180 = scalar_lea.vmem %s6, 5
    %v1181 = vld [vmem:[%s1180] sm:$0x1]
    %v1183 = vperm.slane %v1181, 0
    %1184 = vset.pattern.permute.xlu0 0
    %1185 = vperm.xlu0 %1184, %v1183
    %v1186 = vpop.permute.xlu0 %1185
    %v1188 = vrot.slane %v803, 2
    %v1189 = vsel %vm824, %v1188, 0
    %1191 = vmatpush.msra.mxu0 0.0
    %1192 = vmatpush.msra.mxu0 0.0
    %1193 = vmatpush.msra.mxu0 0.0
    %1194 = vmatpush.msra.mxu0 0.0
    %1195 = vmatpush.msra.mxu0 0.0
    %1196 = vmatpush.msra.mxu0 0.0
    %1197 = vmatpush.msra.mxu0 0.0
    %1198 = vmatpush.msra.mxu0 0.0
    %1199 = vmatpush.msra.mxu0 0.0
    %1200 = vmatpush.msra.mxu0 0.0
    %1201 = vmatpush.msra.mxu0 %v1179
    %1202 = vmatpush.msra.mxu0 %v1178
    %1203 = vmatpush.msra.mxu0 %v1177
    %1204 = vmatpush.msra.mxu0 %v1176
    %1205 = vmatpush.msra.mxu0 %v1175
    %1206 = vmatpush.msra.mxu0 %v1174
    %1207 = vmatmul.f32.gmra.mxu0 %v1189
    %v1208 = vpop.f32.mrf.mxu0
    %v1209 = vadd.f32 %v1186, %v1208
    %1210 = vdwg.mxu0
    %vm1211 = vcmp.gt.f32.partialorder %v1209, 0.0
    %v1212 = vmin.f32 %v1209, 0.0
    %v1213 = vmul.f32 %v1212, 1.442695
    %v1214 = vpow.pop %v1213
    %v1215 = vsub.f32 %v1214, 1.0
    %v1216 = vsel %vm1211, %v1209, %v1215
    %s1217 = scalar_lea.vmem %s7, 160
    %v1218 = vld [vmem:[%s1217] sm:$0xff]
    %v1219 = vld [vmem:[%s1217 + $0x8] sm:$0xff]
    %v1220 = vld [vmem:[%s1217 + $0x10] sm:$0xff]
    %v1221 = vld [vmem:[%s1217 + $0x18] sm:$0xff]
    %v1223 = vsel %vm907, %v1216, 0
    %1225 = vmatpush.msra.mxu0 0.0
    %1226 = vmatpush.msra.mxu0 0.0
    %1227 = vmatpush.msra.mxu0 0.0
    %1228 = vmatpush.msra.mxu0 0.0
    %1229 = vmatpush.msra.mxu0 0.0
    %1230 = vmatpush.msra.mxu0 0.0
    %1231 = vmatpush.msra.mxu0 0.0
    %1232 = vmatpush.msra.mxu0 0.0
    %1233 = vmatpush.msra.mxu0 0.0
    %1234 = vmatpush.msra.mxu0 0.0
    %1235 = vmatpush.msra.mxu0 0.0
    %1236 = vmatpush.msra.mxu0 0.0
    %1237 = vmatpush.msra.mxu0 %v1221
    %1238 = vmatpush.msra.mxu0 %v1220
    %1239 = vmatpush.msra.mxu0 %v1219
    %1240 = vmatpush.msra.mxu0 %v1218
    %1241 = vmatmul.f32.gmra.mxu0 %v1223
    %v1242 = vpop.f32.mrf.mxu0
    %v1243 = vadd.f32 0.0, %v1242
    %1244 = vdwg.mxu0
    %v1245 = vadd.f32 %v1172, %v1243
    %s1246 = scalar_lea.vmem %s5, 288
    %v1247 = vld [vmem:[%s1246] sm:$0xff]
    %v1248 = vld [vmem:[%s1246 + $0x8] sm:$0xff]
    %v1249 = vld [vmem:[%s1246 + $0x10] sm:$0xff]
    %v1250 = vld [vmem:[%s1246 + $0x18] sm:$0xff]
    %v1251 = vld [vmem:[%s1246 + $0x20] sm:$0xff]
    %v1252 = vld [vmem:[%s1246 + $0x28] sm:$0xff]
    %s1253 = scalar_lea.vmem %s6, 6
    %v1254 = vld [vmem:[%s1253] sm:$0x1]
    %v1256 = vperm.slane %v1254, 0
    %1257 = vset.pattern.permute.xlu0 0
    %1258 = vperm.xlu0 %1257, %v1256
    %v1259 = vpop.permute.xlu0 %1258
    %v1261 = vrot.slane %v803, 4
    %v1262 = vsel %vm824, %v1261, 0
    %1264 = vmatpush.msra.mxu0 0.0
    %1265 = vmatpush.msra.mxu0 0.0
    %1266 = vmatpush.msra.mxu0 0.0
    %1267 = vmatpush.msra.mxu0 0.0
    %1268 = vmatpush.msra.mxu0 0.0
    %1269 = vmatpush.msra.mxu0 0.0
    %1270 = vmatpush.msra.mxu0 0.0
    %1271 = vmatpush.msra.mxu0 0.0
    %1272 = vmatpush.msra.mxu0 0.0
    %1273 = vmatpush.msra.mxu0 0.0
    %1274 = vmatpush.msra.mxu0 %v1252
    %1275 = vmatpush.msra.mxu0 %v1251
    %1276 = vmatpush.msra.mxu0 %v1250
    %1277 = vmatpush.msra.mxu0 %v1249
    %1278 = vmatpush.msra.mxu0 %v1248
    %1279 = vmatpush.msra.mxu0 %v1247
    %1280 = vmatmul.f32.gmra.mxu0 %v1262
    %v1281 = vpop.f32.mrf.mxu0
    %v1282 = vadd.f32 %v1259, %v1281
    %1283 = vdwg.mxu0
    %vm1284 = vcmp.gt.f32.partialorder %v1282, 0.0
    %v1285 = vmin.f32 %v1282, 0.0
    %v1286 = vmul.f32 %v1285, 1.442695
    %v1287 = vpow.pop %v1286
    %v1288 = vsub.f32 %v1287, 1.0
    %v1289 = vsel %vm1284, %v1282, %v1288
    %s1290 = scalar_lea.vmem %s7, 192
    %v1291 = vld [vmem:[%s1290] sm:$0xff]
    %v1292 = vld [vmem:[%s1290 + $0x8] sm:$0xff]
    %v1293 = vld [vmem:[%s1290 + $0x10] sm:$0xff]
    %v1294 = vld [vmem:[%s1290 + $0x18] sm:$0xff]
    %v1296 = vsel %vm907, %v1289, 0
    %1298 = vmatpush.msra.mxu0 0.0
    %1299 = vmatpush.msra.mxu0 0.0
    %1300 = vmatpush.msra.mxu0 0.0
    %1301 = vmatpush.msra.mxu0 0.0
    %1302 = vmatpush.msra.mxu0 0.0
    %1303 = vmatpush.msra.mxu0 0.0
    %1304 = vmatpush.msra.mxu0 0.0
    %1305 = vmatpush.msra.mxu0 0.0
    %1306 = vmatpush.msra.mxu0 0.0
    %1307 = vmatpush.msra.mxu0 0.0
    %1308 = vmatpush.msra.mxu0 0.0
    %1309 = vmatpush.msra.mxu0 0.0
    %1310 = vmatpush.msra.mxu0 %v1294
    %1311 = vmatpush.msra.mxu0 %v1293
    %1312 = vmatpush.msra.mxu0 %v1292
    %1313 = vmatpush.msra.mxu0 %v1291
    %1314 = vmatmul.f32.gmra.mxu0 %v1296
    %v1315 = vpop.f32.mrf.mxu0
    %v1316 = vadd.f32 0.0, %v1315
    %1317 = vdwg.mxu0
    %v1318 = vadd.f32 %v1245, %v1316
    %s1319 = scalar_lea.vmem %s5, 336
    %v1320 = vld [vmem:[%s1319] sm:$0xff]
    %v1321 = vld [vmem:[%s1319 + $0x8] sm:$0xff]
    %v1322 = vld [vmem:[%s1319 + $0x10] sm:$0xff]
    %v1323 = vld [vmem:[%s1319 + $0x18] sm:$0xff]
    %v1324 = vld [vmem:[%s1319 + $0x20] sm:$0xff]
    %v1325 = vld [vmem:[%s1319 + $0x28] sm:$0xff]
    %s1326 = scalar_lea.vmem %s6, 7
    %v1327 = vld [vmem:[%s1326] sm:$0x1]
    %v1329 = vperm.slane %v1327, 0
    %1330 = vset.pattern.permute.xlu0 0
    %1331 = vperm.xlu0 %1330, %v1329
    %v1332 = vpop.permute.xlu0 %1331
    %v1334 = vrot.slane %v803, 6
    %v1335 = vsel %vm824, %v1334, 0
    %1337 = vmatpush.msra.mxu0 0.0
    %1338 = vmatpush.msra.mxu0 0.0
    %1339 = vmatpush.msra.mxu0 0.0
    %1340 = vmatpush.msra.mxu0 0.0
    %1341 = vmatpush.msra.mxu0 0.0
    %1342 = vmatpush.msra.mxu0 0.0
    %1343 = vmatpush.msra.mxu0 0.0
    %1344 = vmatpush.msra.mxu0 0.0
    %1345 = vmatpush.msra.mxu0 0.0
    %1346 = vmatpush.msra.mxu0 0.0
    %1347 = vmatpush.msra.mxu0 %v1325
    %1348 = vmatpush.msra.mxu0 %v1324
    %1349 = vmatpush.msra.mxu0 %v1323
    %1350 = vmatpush.msra.mxu0 %v1322
    %1351 = vmatpush.msra.mxu0 %v1321
    %1352 = vmatpush.msra.mxu0 %v1320
    %1353 = vmatmul.f32.gmra.mxu0 %v1335
    %v1354 = vpop.f32.mrf.mxu0
    %v1355 = vadd.f32 %v1332, %v1354
    %1356 = vdwg.mxu0
    %vm1357 = vcmp.gt.f32.partialorder %v1355, 0.0
    %v1358 = vmin.f32 %v1355, 0.0
    %v1359 = vmul.f32 %v1358, 1.442695
    %v1360 = vpow.pop %v1359
    %v1361 = vsub.f32 %v1360, 1.0
    %v1362 = vsel %vm1357, %v1355, %v1361
    %s1363 = scalar_lea.vmem %s7, 224
    %v1364 = vld [vmem:[%s1363] sm:$0xff]
    %v1365 = vld [vmem:[%s1363 + $0x8] sm:$0xff]
    %v1366 = vld [vmem:[%s1363 + $0x10] sm:$0xff]
    %v1367 = vld [vmem:[%s1363 + $0x18] sm:$0xff]
    %v1369 = vsel %vm907, %v1362, 0
    %1371 = vmatpush.msra.mxu0 0.0
    %1372 = vmatpush.msra.mxu0 0.0
    %1373 = vmatpush.msra.mxu0 0.0
    %1374 = vmatpush.msra.mxu0 0.0
    %1375 = vmatpush.msra.mxu0 0.0
    %1376 = vmatpush.msra.mxu0 0.0
    %1377 = vmatpush.msra.mxu0 0.0
    %1378 = vmatpush.msra.mxu0 0.0
    %1379 = vmatpush.msra.mxu0 0.0
    %1380 = vmatpush.msra.mxu0 0.0
    %1381 = vmatpush.msra.mxu0 0.0
    %1382 = vmatpush.msra.mxu0 0.0
    %1383 = vmatpush.msra.mxu0 %v1367
    %1384 = vmatpush.msra.mxu0 %v1366
    %1385 = vmatpush.msra.mxu0 %v1365
    %1386 = vmatpush.msra.mxu0 %v1364
    %1387 = vmatmul.f32.gmra.mxu0 %v1369
    %v1388 = vpop.f32.mrf.mxu0
    %v1389 = vadd.f32 0.0, %v1388
    %1390 = vdwg.mxu0
    %v1391 = vadd.f32 %v1318, %v1389
    %s1392 = scalar_lea.vmem %s5, 384
    %v1393 = vld [vmem:[%s1392] sm:$0xff]
    %v1394 = vld [vmem:[%s1392 + $0x8] sm:$0xff]
    %v1395 = vld [vmem:[%s1392 + $0x10] sm:$0xff]
    %v1396 = vld [vmem:[%s1392 + $0x18] sm:$0xff]
    %v1397 = vld [vmem:[%s1392 + $0x20] sm:$0xff]
    %v1398 = vld [vmem:[%s1392 + $0x28] sm:$0xff]
    %s1399 = scalar_lea.vmem %s6, 8
    %v1400 = vld [vmem:[%s1399] sm:$0x1]
    %v1402 = vperm.slane %v1400, 0
    %1403 = vset.pattern.permute.xlu0 0
    %1404 = vperm.xlu0 %1403, %v1402
    %v1405 = vpop.permute.xlu0 %1404
    %v1408 = vsel %vm824, %v806, 0
    %1410 = vmatpush.msra.mxu0 0.0
    %1411 = vmatpush.msra.mxu0 0.0
    %1412 = vmatpush.msra.mxu0 0.0
    %1413 = vmatpush.msra.mxu0 0.0
    %1414 = vmatpush.msra.mxu0 0.0
    %1415 = vmatpush.msra.mxu0 0.0
    %1416 = vmatpush.msra.mxu0 0.0
    %1417 = vmatpush.msra.mxu0 0.0
    %1418 = vmatpush.msra.mxu0 0.0
    %1419 = vmatpush.msra.mxu0 0.0
    %1420 = vmatpush.msra.mxu0 %v1398
    %1421 = vmatpush.msra.mxu0 %v1397
    %1422 = vmatpush.msra.mxu0 %v1396
    %1423 = vmatpush.msra.mxu0 %v1395
    %1424 = vmatpush.msra.mxu0 %v1394
    %1425 = vmatpush.msra.mxu0 %v1393
    %1426 = vmatmul.f32.gmra.mxu0 %v1408
    %v1427 = vpop.f32.mrf.mxu0
    %v1428 = vadd.f32 %v1405, %v1427
    %1429 = vdwg.mxu0
    %vm1430 = vcmp.gt.f32.partialorder %v1428, 0.0
    %v1431 = vmin.f32 %v1428, 0.0
    %v1432 = vmul.f32 %v1431, 1.442695
    %v1433 = vpow.pop %v1432
    %v1434 = vsub.f32 %v1433, 1.0
    %v1435 = vsel %vm1430, %v1428, %v1434
    %s1436 = scalar_lea.vmem %s7, 256
    %v1437 = vld [vmem:[%s1436] sm:$0xff]
    %v1438 = vld [vmem:[%s1436 + $0x8] sm:$0xff]
    %v1439 = vld [vmem:[%s1436 + $0x10] sm:$0xff]
    %v1440 = vld [vmem:[%s1436 + $0x18] sm:$0xff]
    %v1442 = vsel %vm907, %v1435, 0
    %1444 = vmatpush.msra.mxu0 0.0
    %1445 = vmatpush.msra.mxu0 0.0
    %1446 = vmatpush.msra.mxu0 0.0
    %1447 = vmatpush.msra.mxu0 0.0
    %1448 = vmatpush.msra.mxu0 0.0
    %1449 = vmatpush.msra.mxu0 0.0
    %1450 = vmatpush.msra.mxu0 0.0
    %1451 = vmatpush.msra.mxu0 0.0
    %1452 = vmatpush.msra.mxu0 0.0
    %1453 = vmatpush.msra.mxu0 0.0
    %1454 = vmatpush.msra.mxu0 0.0
    %1455 = vmatpush.msra.mxu0 0.0
    %1456 = vmatpush.msra.mxu0 %v1440
    %1457 = vmatpush.msra.mxu0 %v1439
    %1458 = vmatpush.msra.mxu0 %v1438
    %1459 = vmatpush.msra.mxu0 %v1437
    %1460 = vmatmul.f32.gmra.mxu0 %v1442
    %v1461 = vpop.f32.mrf.mxu0
    %v1462 = vadd.f32 0.0, %v1461
    %1463 = vdwg.mxu0
    %v1464 = vadd.f32 %v1391, %v1462
    %s1465 = scalar_lea.vmem %s5, 432
    %v1466 = vld [vmem:[%s1465] sm:$0xff]
    %v1467 = vld [vmem:[%s1465 + $0x8] sm:$0xff]
    %v1468 = vld [vmem:[%s1465 + $0x10] sm:$0xff]
    %v1469 = vld [vmem:[%s1465 + $0x18] sm:$0xff]
    %v1470 = vld [vmem:[%s1465 + $0x20] sm:$0xff]
    %v1471 = vld [vmem:[%s1465 + $0x28] sm:$0xff]
    %s1472 = scalar_lea.vmem %s6, 9
    %v1473 = vld [vmem:[%s1472] sm:$0x1]
    %v1475 = vperm.slane %v1473, 0
    %1476 = vset.pattern.permute.xlu0 0
    %1477 = vperm.xlu0 %1476, %v1475
    %v1478 = vpop.permute.xlu0 %1477
    %v1480 = vrot.slane %v806, 2
    %v1481 = vsel %vm824, %v1480, 0
    %1483 = vmatpush.msra.mxu0 0.0
    %1484 = vmatpush.msra.mxu0 0.0
    %1485 = vmatpush.msra.mxu0 0.0
    %1486 = vmatpush.msra.mxu0 0.0
    %1487 = vmatpush.msra.mxu0 0.0
    %1488 = vmatpush.msra.mxu0 0.0
    %1489 = vmatpush.msra.mxu0 0.0
    %1490 = vmatpush.msra.mxu0 0.0
    %1491 = vmatpush.msra.mxu0 0.0
    %1492 = vmatpush.msra.mxu0 0.0
    %1493 = vmatpush.msra.mxu0 %v1471
    %1494 = vmatpush.msra.mxu0 %v1470
    %1495 = vmatpush.msra.mxu0 %v1469
    %1496 = vmatpush.msra.mxu0 %v1468
    %1497 = vmatpush.msra.mxu0 %v1467
    %1498 = vmatpush.msra.mxu0 %v1466
    %1499 = vmatmul.f32.gmra.mxu0 %v1481
    %v1500 = vpop.f32.mrf.mxu0
    %v1501 = vadd.f32 %v1478, %v1500
    %1502 = vdwg.mxu0
    %vm1503 = vcmp.gt.f32.partialorder %v1501, 0.0
    %v1504 = vmin.f32 %v1501, 0.0
    %v1505 = vmul.f32 %v1504, 1.442695
    %v1506 = vpow.pop %v1505
    %v1507 = vsub.f32 %v1506, 1.0
    %v1508 = vsel %vm1503, %v1501, %v1507
    %s1509 = scalar_lea.vmem %s7, 288
    %v1510 = vld [vmem:[%s1509] sm:$0xff]
    %v1511 = vld [vmem:[%s1509 + $0x8] sm:$0xff]
    %v1512 = vld [vmem:[%s1509 + $0x10] sm:$0xff]
    %v1513 = vld [vmem:[%s1509 + $0x18] sm:$0xff]
    %v1515 = vsel %vm907, %v1508, 0
    %1517 = vmatpush.msra.mxu0 0.0
    %1518 = vmatpush.msra.mxu0 0.0
    %1519 = vmatpush.msra.mxu0 0.0
    %1520 = vmatpush.msra.mxu0 0.0
    %1521 = vmatpush.msra.mxu0 0.0
    %1522 = vmatpush.msra.mxu0 0.0
    %1523 = vmatpush.msra.mxu0 0.0
    %1524 = vmatpush.msra.mxu0 0.0
    %1525 = vmatpush.msra.mxu0 0.0
    %1526 = vmatpush.msra.mxu0 0.0
    %1527 = vmatpush.msra.mxu0 0.0
    %1528 = vmatpush.msra.mxu0 0.0
    %1529 = vmatpush.msra.mxu0 %v1513
    %1530 = vmatpush.msra.mxu0 %v1512
    %1531 = vmatpush.msra.mxu0 %v1511
    %1532 = vmatpush.msra.mxu0 %v1510
    %1533 = vmatmul.f32.gmra.mxu0 %v1515
    %v1534 = vpop.f32.mrf.mxu0
    %v1535 = vadd.f32 0.0, %v1534
    %1536 = vdwg.mxu0
    %v1537 = vadd.f32 %v1464, %v1535
    %s1538 = scalar_lea.vmem %s5, 480
    %v1539 = vld [vmem:[%s1538] sm:$0xff]
    %v1540 = vld [vmem:[%s1538 + $0x8] sm:$0xff]
    %v1541 = vld [vmem:[%s1538 + $0x10] sm:$0xff]
    %v1542 = vld [vmem:[%s1538 + $0x18] sm:$0xff]
    %v1543 = vld [vmem:[%s1538 + $0x20] sm:$0xff]
    %v1544 = vld [vmem:[%s1538 + $0x28] sm:$0xff]
    %s1545 = scalar_lea.vmem %s6, 10
    %v1546 = vld [vmem:[%s1545] sm:$0x1]
    %v1548 = vperm.slane %v1546, 0
    %1549 = vset.pattern.permute.xlu0 0
    %1550 = vperm.xlu0 %1549, %v1548
    %v1551 = vpop.permute.xlu0 %1550
    %v1553 = vrot.slane %v806, 4
    %v1554 = vsel %vm824, %v1553, 0
    %1556 = vmatpush.msra.mxu0 0.0
    %1557 = vmatpush.msra.mxu0 0.0
    %1558 = vmatpush.msra.mxu0 0.0
    %1559 = vmatpush.msra.mxu0 0.0
    %1560 = vmatpush.msra.mxu0 0.0
    %1561 = vmatpush.msra.mxu0 0.0
    %1562 = vmatpush.msra.mxu0 0.0
    %1563 = vmatpush.msra.mxu0 0.0
    %1564 = vmatpush.msra.mxu0 0.0
    %1565 = vmatpush.msra.mxu0 0.0
    %1566 = vmatpush.msra.mxu0 %v1544
    %1567 = vmatpush.msra.mxu0 %v1543
    %1568 = vmatpush.msra.mxu0 %v1542
    %1569 = vmatpush.msra.mxu0 %v1541
    %1570 = vmatpush.msra.mxu0 %v1540
    %1571 = vmatpush.msra.mxu0 %v1539
    %1572 = vmatmul.f32.gmra.mxu0 %v1554
    %v1573 = vpop.f32.mrf.mxu0
    %v1574 = vadd.f32 %v1551, %v1573
    %1575 = vdwg.mxu0
    %vm1576 = vcmp.gt.f32.partialorder %v1574, 0.0
    %v1577 = vmin.f32 %v1574, 0.0
    %v1578 = vmul.f32 %v1577, 1.442695
    %v1579 = vpow.pop %v1578
    %v1580 = vsub.f32 %v1579, 1.0
    %v1581 = vsel %vm1576, %v1574, %v1580
    %s1582 = scalar_lea.vmem %s7, 320
    %v1583 = vld [vmem:[%s1582] sm:$0xff]
    %v1584 = vld [vmem:[%s1582 + $0x8] sm:$0xff]
    %v1585 = vld [vmem:[%s1582 + $0x10] sm:$0xff]
    %v1586 = vld [vmem:[%s1582 + $0x18] sm:$0xff]
    %v1588 = vsel %vm907, %v1581, 0
    %1590 = vmatpush.msra.mxu0 0.0
    %1591 = vmatpush.msra.mxu0 0.0
    %1592 = vmatpush.msra.mxu0 0.0
    %1593 = vmatpush.msra.mxu0 0.0
    %1594 = vmatpush.msra.mxu0 0.0
    %1595 = vmatpush.msra.mxu0 0.0
    %1596 = vmatpush.msra.mxu0 0.0
    %1597 = vmatpush.msra.mxu0 0.0
    %1598 = vmatpush.msra.mxu0 0.0
    %1599 = vmatpush.msra.mxu0 0.0
    %1600 = vmatpush.msra.mxu0 0.0
    %1601 = vmatpush.msra.mxu0 0.0
    %1602 = vmatpush.msra.mxu0 %v1586
    %1603 = vmatpush.msra.mxu0 %v1585
    %1604 = vmatpush.msra.mxu0 %v1584
    %1605 = vmatpush.msra.mxu0 %v1583
    %1606 = vmatmul.f32.gmra.mxu0 %v1588
    %v1607 = vpop.f32.mrf.mxu0
    %v1608 = vadd.f32 0.0, %v1607
    %1609 = vdwg.mxu0
    %v1610 = vadd.f32 %v1537, %v1608
    %s1611 = scalar_lea.vmem %s5, 528
    %v1612 = vld [vmem:[%s1611] sm:$0xff]
    %v1613 = vld [vmem:[%s1611 + $0x8] sm:$0xff]
    %v1614 = vld [vmem:[%s1611 + $0x10] sm:$0xff]
    %v1615 = vld [vmem:[%s1611 + $0x18] sm:$0xff]
    %v1616 = vld [vmem:[%s1611 + $0x20] sm:$0xff]
    %v1617 = vld [vmem:[%s1611 + $0x28] sm:$0xff]
    %s1618 = scalar_lea.vmem %s6, 11
    %v1619 = vld [vmem:[%s1618] sm:$0x1]
    %v1621 = vperm.slane %v1619, 0
    %1622 = vset.pattern.permute.xlu0 0
    %1623 = vperm.xlu0 %1622, %v1621
    %v1624 = vpop.permute.xlu0 %1623
    %v1626 = vrot.slane %v806, 6
    %v1627 = vsel %vm824, %v1626, 0
    %1629 = vmatpush.msra.mxu0 0.0
    %1630 = vmatpush.msra.mxu0 0.0
    %1631 = vmatpush.msra.mxu0 0.0
    %1632 = vmatpush.msra.mxu0 0.0
    %1633 = vmatpush.msra.mxu0 0.0
    %1634 = vmatpush.msra.mxu0 0.0
    %1635 = vmatpush.msra.mxu0 0.0
    %1636 = vmatpush.msra.mxu0 0.0
    %1637 = vmatpush.msra.mxu0 0.0
    %1638 = vmatpush.msra.mxu0 0.0
    %1639 = vmatpush.msra.mxu0 %v1617
    %1640 = vmatpush.msra.mxu0 %v1616
    %1641 = vmatpush.msra.mxu0 %v1615
    %1642 = vmatpush.msra.mxu0 %v1614
    %1643 = vmatpush.msra.mxu0 %v1613
    %1644 = vmatpush.msra.mxu0 %v1612
    %1645 = vmatmul.f32.gmra.mxu0 %v1627
    %v1646 = vpop.f32.mrf.mxu0
    %v1647 = vadd.f32 %v1624, %v1646
    %1648 = vdwg.mxu0
    %vm1649 = vcmp.gt.f32.partialorder %v1647, 0.0
    %v1650 = vmin.f32 %v1647, 0.0
    %v1651 = vmul.f32 %v1650, 1.442695
    %v1652 = vpow.pop %v1651
    %v1653 = vsub.f32 %v1652, 1.0
    %v1654 = vsel %vm1649, %v1647, %v1653
    %s1655 = scalar_lea.vmem %s7, 352
    %v1656 = vld [vmem:[%s1655] sm:$0xff]
    %v1657 = vld [vmem:[%s1655 + $0x8] sm:$0xff]
    %v1658 = vld [vmem:[%s1655 + $0x10] sm:$0xff]
    %v1659 = vld [vmem:[%s1655 + $0x18] sm:$0xff]
    %v1661 = vsel %vm907, %v1654, 0
    %1663 = vmatpush.msra.mxu0 0.0
    %1664 = vmatpush.msra.mxu0 0.0
    %1665 = vmatpush.msra.mxu0 0.0
    %1666 = vmatpush.msra.mxu0 0.0
    %1667 = vmatpush.msra.mxu0 0.0
    %1668 = vmatpush.msra.mxu0 0.0
    %1669 = vmatpush.msra.mxu0 0.0
    %1670 = vmatpush.msra.mxu0 0.0
    %1671 = vmatpush.msra.mxu0 0.0
    %1672 = vmatpush.msra.mxu0 0.0
    %1673 = vmatpush.msra.mxu0 0.0
    %1674 = vmatpush.msra.mxu0 0.0
    %1675 = vmatpush.msra.mxu0 %v1659
    %1676 = vmatpush.msra.mxu0 %v1658
    %1677 = vmatpush.msra.mxu0 %v1657
    %1678 = vmatpush.msra.mxu0 %v1656
    %1679 = vmatmul.f32.gmra.mxu0 %v1661
    %v1680 = vpop.f32.mrf.mxu0
    %v1681 = vadd.f32 0.0, %v1680
    %1682 = vdwg.mxu0
    %v1683 = vadd.f32 %v1610, %v1681
    %s1684 = scalar_lea.vmem %s5, 576
    %v1685 = vld [vmem:[%s1684] sm:$0xff]
    %v1686 = vld [vmem:[%s1684 + $0x8] sm:$0xff]
    %v1687 = vld [vmem:[%s1684 + $0x10] sm:$0xff]
    %v1688 = vld [vmem:[%s1684 + $0x18] sm:$0xff]
    %v1689 = vld [vmem:[%s1684 + $0x20] sm:$0xff]
    %v1690 = vld [vmem:[%s1684 + $0x28] sm:$0xff]
    %s1691 = scalar_lea.vmem %s6, 12
    %v1692 = vld [vmem:[%s1691] sm:$0x1]
    %v1694 = vperm.slane %v1692, 0
    %1695 = vset.pattern.permute.xlu0 0
    %1696 = vperm.xlu0 %1695, %v1694
    %v1697 = vpop.permute.xlu0 %1696
    %v1700 = vsel %vm824, %v809, 0
    %1702 = vmatpush.msra.mxu0 0.0
    %1703 = vmatpush.msra.mxu0 0.0
    %1704 = vmatpush.msra.mxu0 0.0
    %1705 = vmatpush.msra.mxu0 0.0
    %1706 = vmatpush.msra.mxu0 0.0
    %1707 = vmatpush.msra.mxu0 0.0
    %1708 = vmatpush.msra.mxu0 0.0
    %1709 = vmatpush.msra.mxu0 0.0
    %1710 = vmatpush.msra.mxu0 0.0
    %1711 = vmatpush.msra.mxu0 0.0
    %1712 = vmatpush.msra.mxu0 %v1690
    %1713 = vmatpush.msra.mxu0 %v1689
    %1714 = vmatpush.msra.mxu0 %v1688
    %1715 = vmatpush.msra.mxu0 %v1687
    %1716 = vmatpush.msra.mxu0 %v1686
    %1717 = vmatpush.msra.mxu0 %v1685
    %1718 = vmatmul.f32.gmra.mxu0 %v1700
    %v1719 = vpop.f32.mrf.mxu0
    %v1720 = vadd.f32 %v1697, %v1719
    %1721 = vdwg.mxu0
    %vm1722 = vcmp.gt.f32.partialorder %v1720, 0.0
    %v1723 = vmin.f32 %v1720, 0.0
    %v1724 = vmul.f32 %v1723, 1.442695
    %v1725 = vpow.pop %v1724
    %v1726 = vsub.f32 %v1725, 1.0
    %v1727 = vsel %vm1722, %v1720, %v1726
    %s1728 = scalar_lea.vmem %s7, 384
    %v1729 = vld [vmem:[%s1728] sm:$0xff]
    %v1730 = vld [vmem:[%s1728 + $0x8] sm:$0xff]
    %v1731 = vld [vmem:[%s1728 + $0x10] sm:$0xff]
    %v1732 = vld [vmem:[%s1728 + $0x18] sm:$0xff]
    %v1734 = vsel %vm907, %v1727, 0
    %1736 = vmatpush.msra.mxu0 0.0
    %1737 = vmatpush.msra.mxu0 0.0
    %1738 = vmatpush.msra.mxu0 0.0
    %1739 = vmatpush.msra.mxu0 0.0
    %1740 = vmatpush.msra.mxu0 0.0
    %1741 = vmatpush.msra.mxu0 0.0
    %1742 = vmatpush.msra.mxu0 0.0
    %1743 = vmatpush.msra.mxu0 0.0
    %1744 = vmatpush.msra.mxu0 0.0
    %1745 = vmatpush.msra.mxu0 0.0
    %1746 = vmatpush.msra.mxu0 0.0
    %1747 = vmatpush.msra.mxu0 0.0
    %1748 = vmatpush.msra.mxu0 %v1732
    %1749 = vmatpush.msra.mxu0 %v1731
    %1750 = vmatpush.msra.mxu0 %v1730
    %1751 = vmatpush.msra.mxu0 %v1729
    %1752 = vmatmul.f32.gmra.mxu0 %v1734
    %v1753 = vpop.f32.mrf.mxu0
    %v1754 = vadd.f32 0.0, %v1753
    %1755 = vdwg.mxu0
    %v1756 = vadd.f32 %v1683, %v1754
    %s1757 = scalar_lea.vmem %s5, 624
    %v1758 = vld [vmem:[%s1757] sm:$0xff]
    %v1759 = vld [vmem:[%s1757 + $0x8] sm:$0xff]
    %v1760 = vld [vmem:[%s1757 + $0x10] sm:$0xff]
    %v1761 = vld [vmem:[%s1757 + $0x18] sm:$0xff]
    %v1762 = vld [vmem:[%s1757 + $0x20] sm:$0xff]
    %v1763 = vld [vmem:[%s1757 + $0x28] sm:$0xff]
    %s1764 = scalar_lea.vmem %s6, 13
    %v1765 = vld [vmem:[%s1764] sm:$0x1]
    %v1767 = vperm.slane %v1765, 0
    %1768 = vset.pattern.permute.xlu0 0
    %1769 = vperm.xlu0 %1768, %v1767
    %v1770 = vpop.permute.xlu0 %1769
    %v1772 = vrot.slane %v809, 2
    %v1773 = vsel %vm824, %v1772, 0
    %1775 = vmatpush.msra.mxu0 0.0
    %1776 = vmatpush.msra.mxu0 0.0
    %1777 = vmatpush.msra.mxu0 0.0
    %1778 = vmatpush.msra.mxu0 0.0
    %1779 = vmatpush.msra.mxu0 0.0
    %1780 = vmatpush.msra.mxu0 0.0
    %1781 = vmatpush.msra.mxu0 0.0
    %1782 = vmatpush.msra.mxu0 0.0
    %1783 = vmatpush.msra.mxu0 0.0
    %1784 = vmatpush.msra.mxu0 0.0
    %1785 = vmatpush.msra.mxu0 %v1763
    %1786 = vmatpush.msra.mxu0 %v1762
    %1787 = vmatpush.msra.mxu0 %v1761
    %1788 = vmatpush.msra.mxu0 %v1760
    %1789 = vmatpush.msra.mxu0 %v1759
    %1790 = vmatpush.msra.mxu0 %v1758
    %1791 = vmatmul.f32.gmra.mxu0 %v1773
    %v1792 = vpop.f32.mrf.mxu0
    %v1793 = vadd.f32 %v1770, %v1792
    %1794 = vdwg.mxu0
    %vm1795 = vcmp.gt.f32.partialorder %v1793, 0.0
    %v1796 = vmin.f32 %v1793, 0.0
    %v1797 = vmul.f32 %v1796, 1.442695
    %v1798 = vpow.pop %v1797
    %v1799 = vsub.f32 %v1798, 1.0
    %v1800 = vsel %vm1795, %v1793, %v1799
    %s1801 = scalar_lea.vmem %s7, 416
    %v1802 = vld [vmem:[%s1801] sm:$0xff]
    %v1803 = vld [vmem:[%s1801 + $0x8] sm:$0xff]
    %v1804 = vld [vmem:[%s1801 + $0x10] sm:$0xff]
    %v1805 = vld [vmem:[%s1801 + $0x18] sm:$0xff]
    %v1807 = vsel %vm907, %v1800, 0
    %1809 = vmatpush.msra.mxu0 0.0
    %1810 = vmatpush.msra.mxu0 0.0
    %1811 = vmatpush.msra.mxu0 0.0
    %1812 = vmatpush.msra.mxu0 0.0
    %1813 = vmatpush.msra.mxu0 0.0
    %1814 = vmatpush.msra.mxu0 0.0
    %1815 = vmatpush.msra.mxu0 0.0
    %1816 = vmatpush.msra.mxu0 0.0
    %1817 = vmatpush.msra.mxu0 0.0
    %1818 = vmatpush.msra.mxu0 0.0
    %1819 = vmatpush.msra.mxu0 0.0
    %1820 = vmatpush.msra.mxu0 0.0
    %1821 = vmatpush.msra.mxu0 %v1805
    %1822 = vmatpush.msra.mxu0 %v1804
    %1823 = vmatpush.msra.mxu0 %v1803
    %1824 = vmatpush.msra.mxu0 %v1802
    %1825 = vmatmul.f32.gmra.mxu0 %v1807
    %v1826 = vpop.f32.mrf.mxu0
    %v1827 = vadd.f32 0.0, %v1826
    %1828 = vdwg.mxu0
    %v1829 = vadd.f32 %v1756, %v1827
    %s1830 = scalar_lea.vmem %s5, 672
    %v1831 = vld [vmem:[%s1830] sm:$0xff]
    %v1832 = vld [vmem:[%s1830 + $0x8] sm:$0xff]
    %v1833 = vld [vmem:[%s1830 + $0x10] sm:$0xff]
    %v1834 = vld [vmem:[%s1830 + $0x18] sm:$0xff]
    %v1835 = vld [vmem:[%s1830 + $0x20] sm:$0xff]
    %v1836 = vld [vmem:[%s1830 + $0x28] sm:$0xff]
    %s1837 = scalar_lea.vmem %s6, 14
    %v1838 = vld [vmem:[%s1837] sm:$0x1]
    %v1840 = vperm.slane %v1838, 0
    %1841 = vset.pattern.permute.xlu0 0
    %1842 = vperm.xlu0 %1841, %v1840
    %v1843 = vpop.permute.xlu0 %1842
    %v1845 = vrot.slane %v809, 4
    %v1846 = vsel %vm824, %v1845, 0
    %1848 = vmatpush.msra.mxu0 0.0
    %1849 = vmatpush.msra.mxu0 0.0
    %1850 = vmatpush.msra.mxu0 0.0
    %1851 = vmatpush.msra.mxu0 0.0
    %1852 = vmatpush.msra.mxu0 0.0
    %1853 = vmatpush.msra.mxu0 0.0
    %1854 = vmatpush.msra.mxu0 0.0
    %1855 = vmatpush.msra.mxu0 0.0
    %1856 = vmatpush.msra.mxu0 0.0
    %1857 = vmatpush.msra.mxu0 0.0
    %1858 = vmatpush.msra.mxu0 %v1836
    %1859 = vmatpush.msra.mxu0 %v1835
    %1860 = vmatpush.msra.mxu0 %v1834
    %1861 = vmatpush.msra.mxu0 %v1833
    %1862 = vmatpush.msra.mxu0 %v1832
    %1863 = vmatpush.msra.mxu0 %v1831
    %1864 = vmatmul.f32.gmra.mxu0 %v1846
    %v1865 = vpop.f32.mrf.mxu0
    %v1866 = vadd.f32 %v1843, %v1865
    %1867 = vdwg.mxu0
    %vm1868 = vcmp.gt.f32.partialorder %v1866, 0.0
    %v1869 = vmin.f32 %v1866, 0.0
    %v1870 = vmul.f32 %v1869, 1.442695
    %v1871 = vpow.pop %v1870
    %v1872 = vsub.f32 %v1871, 1.0
    %v1873 = vsel %vm1868, %v1866, %v1872
    %s1874 = scalar_lea.vmem %s7, 448
    %v1875 = vld [vmem:[%s1874] sm:$0xff]
    %v1876 = vld [vmem:[%s1874 + $0x8] sm:$0xff]
    %v1877 = vld [vmem:[%s1874 + $0x10] sm:$0xff]
    %v1878 = vld [vmem:[%s1874 + $0x18] sm:$0xff]
    %v1880 = vsel %vm907, %v1873, 0
    %1882 = vmatpush.msra.mxu0 0.0
    %1883 = vmatpush.msra.mxu0 0.0
    %1884 = vmatpush.msra.mxu0 0.0
    %1885 = vmatpush.msra.mxu0 0.0
    %1886 = vmatpush.msra.mxu0 0.0
    %1887 = vmatpush.msra.mxu0 0.0
    %1888 = vmatpush.msra.mxu0 0.0
    %1889 = vmatpush.msra.mxu0 0.0
    %1890 = vmatpush.msra.mxu0 0.0
    %1891 = vmatpush.msra.mxu0 0.0
    %1892 = vmatpush.msra.mxu0 0.0
    %1893 = vmatpush.msra.mxu0 0.0
    %1894 = vmatpush.msra.mxu0 %v1878
    %1895 = vmatpush.msra.mxu0 %v1877
    %1896 = vmatpush.msra.mxu0 %v1876
    %1897 = vmatpush.msra.mxu0 %v1875
    %1898 = vmatmul.f32.gmra.mxu0 %v1880
    %v1899 = vpop.f32.mrf.mxu0
    %v1900 = vadd.f32 0.0, %v1899
    %1901 = vdwg.mxu0
    %v1902 = vadd.f32 %v1829, %v1900
    %s1903 = scalar_lea.vmem %s5, 720
    %v1904 = vld [vmem:[%s1903] sm:$0xff]
    %v1905 = vld [vmem:[%s1903 + $0x8] sm:$0xff]
    %v1906 = vld [vmem:[%s1903 + $0x10] sm:$0xff]
    %v1907 = vld [vmem:[%s1903 + $0x18] sm:$0xff]
    %v1908 = vld [vmem:[%s1903 + $0x20] sm:$0xff]
    %v1909 = vld [vmem:[%s1903 + $0x28] sm:$0xff]
    %s1910 = scalar_lea.vmem %s6, 15
    %v1911 = vld [vmem:[%s1910] sm:$0x1]
    %v1913 = vperm.slane %v1911, 0
    %1914 = vset.pattern.permute.xlu0 0
    %1915 = vperm.xlu0 %1914, %v1913
    %v1916 = vpop.permute.xlu0 %1915
    %v1918 = vrot.slane %v809, 6
    %v1919 = vsel %vm824, %v1918, 0
    %1921 = vmatpush.msra.mxu0 0.0
    %1922 = vmatpush.msra.mxu0 0.0
    %1923 = vmatpush.msra.mxu0 0.0
    %1924 = vmatpush.msra.mxu0 0.0
    %1925 = vmatpush.msra.mxu0 0.0
    %1926 = vmatpush.msra.mxu0 0.0
    %1927 = vmatpush.msra.mxu0 0.0
    %1928 = vmatpush.msra.mxu0 0.0
    %1929 = vmatpush.msra.mxu0 0.0
    %1930 = vmatpush.msra.mxu0 0.0
    %1931 = vmatpush.msra.mxu0 %v1909
    %1932 = vmatpush.msra.mxu0 %v1908
    %1933 = vmatpush.msra.mxu0 %v1907
    %1934 = vmatpush.msra.mxu0 %v1906
    %1935 = vmatpush.msra.mxu0 %v1905
    %1936 = vmatpush.msra.mxu0 %v1904
    %1937 = vmatmul.f32.gmra.mxu0 %v1919
    %v1938 = vpop.f32.mrf.mxu0
    %v1939 = vadd.f32 %v1916, %v1938
    %1940 = vdwg.mxu0
    %vm1941 = vcmp.gt.f32.partialorder %v1939, 0.0
    %v1942 = vmin.f32 %v1939, 0.0
    %v1943 = vmul.f32 %v1942, 1.442695
    %v1944 = vpow.pop %v1943
    %v1945 = vsub.f32 %v1944, 1.0
    %v1946 = vsel %vm1941, %v1939, %v1945
    %s1947 = scalar_lea.vmem %s7, 480
    %v1948 = vld [vmem:[%s1947] sm:$0xff]
    %v1949 = vld [vmem:[%s1947 + $0x8] sm:$0xff]
    %v1950 = vld [vmem:[%s1947 + $0x10] sm:$0xff]
    %v1951 = vld [vmem:[%s1947 + $0x18] sm:$0xff]
    %v1953 = vsel %vm907, %v1946, 0
    %1955 = vmatpush.msra.mxu0 0.0
    %1956 = vmatpush.msra.mxu0 0.0
    %1957 = vmatpush.msra.mxu0 0.0
    %1958 = vmatpush.msra.mxu0 0.0
    %1959 = vmatpush.msra.mxu0 0.0
    %1960 = vmatpush.msra.mxu0 0.0
    %1961 = vmatpush.msra.mxu0 0.0
    %1962 = vmatpush.msra.mxu0 0.0
    %1963 = vmatpush.msra.mxu0 0.0
    %1964 = vmatpush.msra.mxu0 0.0
    %1965 = vmatpush.msra.mxu0 0.0
    %1966 = vmatpush.msra.mxu0 0.0
    %1967 = vmatpush.msra.mxu0 %v1951
    %1968 = vmatpush.msra.mxu0 %v1950
    %1969 = vmatpush.msra.mxu0 %v1949
    %1970 = vmatpush.msra.mxu0 %v1948
    %1971 = vmatmul.f32.gmra.mxu0 %v1953
    %v1972 = vpop.f32.mrf.mxu0
    %v1973 = vadd.f32 0.0, %v1972
    %1974 = vdwg.mxu0
    %v1975 = vadd.f32 %v1902, %v1973
    %v1976 = vld [vmem:[%s8] sm:$0x1]
    %v1978 = vperm.slane %v1976, 0
    %v1980 = vadd.f32 %v1975, %v1978
    %vm1981 = vcmask 254976
    %1982 = vst.msk [vmem:[#allocation6] sm:$0x3] %vm1981, %v1980
    // Predicated region
    $region42: #{tpu_custom_call.1} parent=1 // pred_check
      _
    $region43: #{tpu_custom_call.1} parent=1 // pred_check_branch
      %1984 = sbr.rel (0) target = $region45
    $region44: #{tpu_custom_call.1} parent=1 // pred_region
      %1986 = vsyncadd [#allocation5], 0
      %s1988 = sshll.u32 [#allocation6], 4
      %s1989 = int_to_ptr.vmem [resolvable:$true] %s1988
      %s1990 = sshll.u32 %s9, 4
      %s1991 = int_to_ptr.hbm [resolvable:$true] %s1990
      %1993 = dma.vmem_to_hbm [thread:$0]  %s1989, 32, %s1991, [#allocation5]
    $region45: #{tpu_custom_call.1} parent=1 // pred_fallthru
      _
    // Predicated region
    $region46: #{tpu_custom_call.1} parent=1 // pred_check
      _
    $region47: #{tpu_custom_call.1} parent=1 // pred_check_branch
      %1995 = sbr.rel (0) target = $region49
    $region48: #{tpu_custom_call.1} parent=1 // pred_region
      %1997 = dma.done [#allocation5], 32
    $region49: #{tpu_custom_call.1} parent=1 // pred_fallthru
      _
    %1998 = vsyncpa [#allocation4], 1
    %1999 = vsyncpa [#allocation5], 1

</llo_original>
